<compile_context>
chip_gen: v6e
topology: v6e:2x2x1
jax: 0.10.0
libtpu: 0.0.40
codegen_flags: <defaults>
</compile_context>

<pallas_src>
import math
import functools
from dataclasses import dataclass

import numpy as np
import jax
import jax.numpy as jnp
from jax.experimental import pallas as pl
from jax.experimental.pallas import tpu as pltpu

EPS = 1e-5


@dataclass(frozen=True)
class Config:
    enc_in: int = 4
    c_out: int = 4
    d_model: int = 16
    expand: int = 2
    headdim: int = 16
    d_state: int = 16
    d_conv: int = 4
    chunk_size: int = 4        # chunked SSD is exact for any chunk size; the kernel
    seq_len: int = 8           # uses one chunk == seq_len (sublane aligned)
    pred_len: int = 4
    e_layers: int = 2
    n_mark: int = 4            # DataEmbedding embed='timeF', freq='h' -> 4 mark features

    @property
    def d_inner(self):
        return self.expand * self.d_model

    @property
    def nheads(self):
        return self.d_inner // self.headdim

    @property
    def conv_dim(self):
        return self.d_inner + 2 * self.d_state

    @property
    def d_in_proj_exp(self):
        # in_proj output with dt pre-broadcast across headdim lanes:
        # z (d_inner) | xBC (d_inner + 2*d_state) | dt (d_inner)  -> 128 for default cfg
        return 3 * self.d_inner + 2 * self.d_state


# ----------------------------------------------------------------------------
# Fused whole-model kernel (Bb batch elements per grid step)
# ----------------------------------------------------------------------------
def make_model_kernel(cfg: Config, Bb: int):
    L, D, Cin, NM = cfg.seq_len, cfg.d_model, cfg.enc_in, cfg.n_mark
    di, N = cfg.d_inner, cfg.d_state
    K = cfg.d_conv
    cdim = cfg.conv_dim
    E = cfg.e_layers
    BL = Bb * L

    def _silu(v):
        return v * jax.nn.sigmoid(v)

    def kernel(x_ref, mark_ref, wtok_ref, wt_ref, pe_ref, tril_ref, shift_ref,
               normw_ref, win_ref, cw_ref, cb_ref, dtb_ref, aexp_ref, dexp_ref,
               normi_ref, wout_ref, wo_ref, o_ref):
        # ---- instance normalization over time (forecast(), unbiased=False) ----
        x3 = x_ref[...]                                    # (Bb, L, Cin)
        mean_e = jnp.mean(x3, axis=1, keepdims=True)       # (Bb, 1, Cin)
        xc = x3 - mean_e
        var_e = jnp.mean(xc * xc, axis=1, keepdims=True)
        std_e = jnp.sqrt(var_e + EPS)
        xn3 = xc / std_e

        # ---- DataEmbedding: circular token conv (k=3) + timeF linear + positional ----
        xm1 = jnp.concatenate([xn3[:, L - 1:L, :], xn3[:, :L - 1, :]], axis=1)  # x[(l-1)%L]
        xp1 = jnp.concatenate([xn3[:, 1:, :], xn3[:, :1, :]], axis=1)           # x[(l+1)%L]

        xm1f = xm1.reshape(BL, Cin)
        xc0f = xn3.reshape(BL, Cin)
        xp1f = xp1.reshape(BL, Cin)
        markf = mark_ref[...].reshape(BL, NM)

        x = (jnp.dot(xm1f, wtok_ref[0], preferred_element_type=jnp.float32)
             + jnp.dot(xc0f, wtok_ref[1], preferred_element_type=jnp.float32)
             + jnp.dot(xp1f, wtok_ref[2], preferred_element_type=jnp.float32)
             + jnp.dot(markf, wt_ref[...], preferred_element_type=jnp.float32)
             + pe_ref[...])                                 # (BL, D)
        # TODO(synk): DataEmbedding dropout is a no-op in eval mode; omitted.

        tril = tril_ref[...]                                # (BL, BL) block-diag lower-tri (f32)
        causal = tril > 0.5                                 # reused boolean mask

        for e in range(E):
            xres = x

            # ---- pre-layer RMSNorm (d_model) ----
            ms = jnp.mean(x * x, axis=-1, keepdims=True)
            xn = x * jax.lax.rsqrt(ms + EPS) * normw_ref[e]

            # ---- fused in_proj (dt pre-broadcast across headdim -> 128-lane output) ----
            zxbcdt = jnp.dot(xn, win_ref[e], preferred_element_type=jnp.float32)
            z = zxbcdt[:, :di]
            xBC_pre = zxbcdt[:, di:di + cdim]
            dt_exp = jax.nn.softplus(zxbcdt[:, di + cdim:] + dtb_ref[e])    # (BL, di)

            # ---- depthwise causal conv as K shift-matmuls (MXU) — no padded concats ----
            cw = cw_ref[e]                                  # (K, cdim)
            acc = xBC_pre * cw[K - 1:K, :] + cb_ref[e]
            for s in range(1, K):
                shifted = jnp.dot(shift_ref[s - 1], xBC_pre,
                                  preferred_element_type=jnp.float32)
                acc = acc + shifted * cw[K - 1 - s:K - s, :]
            xBC = _silu(acc)                                # (BL, cdim)

            xh = xBC[:, :di]
            Bm = xBC[:, di:di + N]
            Cm = xBC[:, di + N:di + 2 * N]

            xdt = xh * dt_exp                               # x * dt          (BL, di)
            a_exp = aexp_ref[e] * dt_exp                    # A * dt (head-expanded, <= 0)

            # ---- SSD: one chunk == full sequence (exact); per-sample causality via
            #      the block-diagonal mask, cumsum done on the MXU ----
            Acs = jnp.dot(tril, a_exp, preferred_element_type=jnp.float32)  # inclusive cumsum
            d_pos = jnp.exp(Acs)
            d_neg = jnp.exp(-Acs)
            # TODO(synk): the exp(+Acs)*exp(-Acs) factorization can overflow for very long
            # sequences / large |A*dt|; the reference pairwise segsum form is safer there.
            S = jax.lax.dot_general(Cm, Bm, (((1,), (1,)), ((), ())),
                                    preferred_element_type=jnp.float32)     # (BL, BL)
            Sm = jnp.where(causal, S, 0.0)
            y = d_pos * jnp.dot(Sm, d_neg * xdt, preferred_element_type=jnp.float32) \
                + xh * dexp_ref[e]

            # ---- gated RMSNorm (d_inner) + out_proj + fused residual ----
            xg = y * _silu(z)
            msi = jnp.mean(xg * xg, axis=-1, keepdims=True)
            yn = xg * jax.lax.rsqrt(msi + EPS) * normi_ref[e]
            x = jnp.dot(yn, wout_ref[e], preferred_element_type=jnp.float32) + xres

        # ---- out_layer + de-normalization (full L rows; pred_len sliced in wrapper) ----
        xo = jnp.dot(x, wo_ref[...], preferred_element_type=jnp.float32)    # (BL, c_out)
        xo3 = xo.reshape(Bb, L, cfg.c_out)
        o_ref[...] = xo3 * std_e + mean_e

    return kernel


# ----------------------------------------------------------------------------
# Wrapper
# ----------------------------------------------------------------------------
def _choose_block_batch(Bsz, L, max_rows=128, prefer_steps=2):
    """Largest divisor of Bsz with Bb*L <= max_rows, preferring >= prefer_steps grid
    steps so v7x's two TensorCores both stay busy."""
    divisors = [d for d in range(1, Bsz + 1) if Bsz % d == 0 and d * L <= max_rows]
    if not divisors:
        return 1
    preferred = [d for d in divisors if Bsz // d >= prefer_steps]
    return max(preferred) if preferred else max(divisors)


def _build_masks(Bb, L, K):
    """Block-diagonal lower-triangular (cumsum/causal) matrix and causal shift matrices."""
    BL = Bb * L
    tril = np.zeros((BL, BL), np.float32)
    for b in range(Bb):
        tril[b * L:(b + 1) * L, b * L:(b + 1) * L] = np.tril(np.ones((L, L), np.float32))
    shifts = np.zeros((max(K - 1, 1), BL, BL), np.float32)
    for s in range(1, K):
        for b in range(Bb):
            for p in range(s, L):
                shifts[s - 1, b * L + p, b * L + p - s] = 1.0
    return jnp.asarray(tril), jnp.asarray(shifts)


def model_forward(x_enc, x_mark_enc, params, cfg: Config, block_batch=None):
    Bsz = x_enc.shape[0]
    L, D, E = cfg.seq_len, cfg.d_model, cfg.e_layers
    assert cfg.c_out == cfg.enc_in, "de-normalization assumes c_out == enc_in"
    Bb = block_batch or _choose_block_batch(Bsz, L)
    assert Bsz % Bb == 0
    BL = Bb * L

    tril, shifts = _build_masks(Bb, L, cfg.d_conv)
    pe_tiled = jnp.tile(params["pe"], (Bb, 1))              # (BL, D)

    kernel = make_model_kernel(cfg, Bb)

    def full_spec(shape):
        nd = len(shape)
        return pl.BlockSpec(shape, lambda b, _nd=nd: (0,) * _nd)

    in_specs = [
        pl.BlockSpec((Bb, L, cfg.enc_in), lambda b: (b, 0, 0)),   # x_enc
        pl.BlockSpec((Bb, L, cfg.n_mark), lambda b: (b, 0, 0)),   # x_mark_enc
        full_spec((3, cfg.enc_in, D)),                            # token-conv weights (k=3)
        full_spec((cfg.n_mark, D)),                               # timeF linear
        full_spec((BL, D)),                                       # positional encoding (tiled)
        full_spec((BL, BL)),                                      # block-diag tril
        full_spec(tuple(shifts.shape)),                           # causal shift matrices
        full_spec((E, 1, D)),                                     # pre-layer RMSNorm weight
        full_spec((E, D, cfg.d_in_proj_exp)),                     # in_proj (dt pre-expanded)
        full_spec((E, cfg.d_conv, cfg.conv_dim)),                 # depthwise conv weights
        full_spec((E, 1, cfg.conv_dim)),                          # conv bias
        full_spec((E, 1, cfg.d_inner)),                           # dt_bias (head-expanded)
        full_spec((E, 1, cfg.d_inner)),                           # A = -exp(A_log) (head-expanded)
        full_spec((E, 1, cfg.d_inner)),                           # D skip (head-expanded)
        full_spec((E, 1, cfg.d_inner)),                           # gated RMSNorm weight
        full_spec((E, cfg.d_inner, D)),                           # out_proj
        full_spec((D, cfg.c_out)),                                # out_layer
    ]
    out_full = pl.pallas_call(
        kernel,
        out_shape=jax.ShapeDtypeStruct((Bsz, L, cfg.c_out), jnp.float32),
        grid=(Bsz // Bb,),
        in_specs=in_specs,
        out_specs=pl.BlockSpec((Bb, L, cfg.c_out), lambda b: (b, 0, 0)),
        compiler_params=pltpu.CompilerParams(dimension_semantics=("parallel",)),
    )(x_enc, x_mark_enc,
      params["Wtok"], params["Wt"], pe_tiled, tril, shifts,
      params["norm_w"], params["Win"], params["cw"], params["cb"],
      params["dtb"], params["Aexp"], params["Dexp"],
      params["norm_inner"], params["Wout"], params["out_w"])
    # pred_len slice kept outside the kernel (lane/sublane-dense writeback inside).
    return out_full[:, L - cfg.pred_len:, :]


# ----------------------------------------------------------------------------
# Deterministic parameter construction (shapes follow the PyTorch __init__)
# ----------------------------------------------------------------------------
def positional_encoding(L, d_model):
    pe = np.zeros((L, d_model), dtype=np.float32)
    position = np.arange(L, dtype=np.float32)[:, None]
    div_term = np.exp(np.arange(0, d_model, 2, dtype=np.float32)
                      * -(math.log(10000.0) / d_model))
    pe[:, 0::2] = np.sin(position * div_term)
    pe[:, 1::2] = np.cos(position * div_term)
    return jnp.asarray(pe)


def init_params(key, cfg: Config):
    keys = iter(jax.random.split(key, 128))

    def nrm(shape, scale):
        return scale * jax.random.normal(next(keys), shape, dtype=jnp.float32)

    H, P = cfg.nheads, cfg.headdim
    di, N = cfg.d_inner, cfg.d_state
    d_in_proj_raw = 2 * di + 2 * N + H

    # TokenEmbedding circular conv (d_model, enc_in, 3) -> stacked (3, Cin, D)
    conv_tok = nrm((cfg.d_model, cfg.enc_in, 3), 0.3)
    Wtok = jnp.stack([conv_tok[:, :, k].T for k in range(3)])

    norm_w, Win, cw, cb = [], [], [], []
    dtb, Aexp, Dexp, normi, Wout = [], [], [], [], []
    for _ in range(cfg.e_layers):
        w_raw = nrm((cfg.d_model, d_in_proj_raw), 0.2)          # in_proj.weight^T
        # pre-broadcast the H dt columns across headdim lanes -> 128-wide in_proj output
        w_exp = jnp.concatenate(
            [w_raw[:, :di + cfg.conv_dim],
             jnp.repeat(w_raw[:, di + cfg.conv_dim:], P, axis=1)], axis=1)
        Win.append(w_exp)
        conv_w = nrm((cfg.conv_dim, 1, cfg.d_conv), 0.3)        # depthwise conv1d weight
        cw.append(conv_w[:, 0, :].T)                            # (K, conv_dim)
        cb.append(nrm((cfg.conv_dim,), 0.1).reshape(1, cfg.conv_dim))
        dt_bias = nrm((H,), 0.2)
        A_log = nrm((H,), 0.3)
        Dpar = 1.0 + nrm((H,), 0.1)
        # per-head scalars pre-expanded to d_inner lanes (head h -> cols h*P:(h+1)*P)
        dtb.append(jnp.repeat(dt_bias, P).reshape(1, di))
        Aexp.append(jnp.repeat(-jnp.exp(A_log), P).reshape(1, di))
        Dexp.append(jnp.repeat(Dpar, P).reshape(1, di))
        norm_w.append(jnp.ones((1, cfg.d_model), jnp.float32))
        normi.append(jnp.ones((1, di), jnp.float32))
        Wout.append(nrm((di, cfg.d_model), 0.2))                # out_proj.weight^T

    return dict(
        Wtok=Wtok,
        Wt=nrm((cfg.n_mark, cfg.d_model), 0.3),
        pe=positional_encoding(cfg.seq_len, cfg.d_model),
        norm_w=jnp.stack(norm_w), Win=jnp.stack(Win),
        cw=jnp.stack(cw), cb=jnp.stack(cb),
        dtb=jnp.stack(dtb), Aexp=jnp.stack(Aexp), Dexp=jnp.stack(Dexp),
        norm_inner=jnp.stack(normi), Wout=jnp.stack(Wout),
        out_w=nrm((cfg.d_model, cfg.c_out), 0.2),               # out_layer.weight^T
    )


# ----------------------------------------------------------------------------
# Pure-JAX reference (exact SSM over the full sequence) for verification
# ----------------------------------------------------------------------------
def reference_forward(x_enc, x_mark_enc, params, cfg: Config):
    L, di, N, K = cfg.seq_len, cfg.d_inner, cfg.d_state, cfg.d_conv
    mean = jnp.mean(x_enc, axis=1, keepdims=True)
    xc = x_enc - mean
    std = jnp.sqrt(jnp.mean(xc * xc, axis=1, keepdims=True) + EPS)
    xn = xc / std
    xm1 = jnp.roll(xn, 1, axis=1)
    xp1 = jnp.roll(xn, -1, axis=1)
    x = (xm1 @ params["Wtok"][0] + xn @ params["Wtok"][1] + xp1 @ params["Wtok"][2]
         + x_mark_enc @ params["Wt"] + params["pe"][None])
    for e in range(cfg.e_layers):
        xres = x
        h = x * jax.lax.rsqrt(jnp.mean(x * x, -1, keepdims=True) + EPS) * params["norm_w"][e][0]
        zxbcdt = h @ params["Win"][e]
        z = zxbcdt[..., :di]
        xBC = zxbcdt[..., di:di + cfg.conv_dim]
        dt = jax.nn.softplus(zxbcdt[..., di + cfg.conv_dim:] + params["dtb"][e][0])
        cw = params["cw"][e]
        pad = jnp.concatenate(
            [jnp.zeros((x.shape[0], K - 1, cfg.conv_dim), jnp.float32), xBC], axis=1)
        conv = sum(pad[:, k:k + L, :] * cw[k][None, None, :] for k in range(K)) \
            + params["cb"][e][0]
        xBC = conv * jax.nn.sigmoid(conv)
        xh, Bm, Cm = xBC[..., :di], xBC[..., di:di + N], xBC[..., di + N:]
        a = params["Aexp"][e][0] * dt                                     # (B, L, di)
        Acs = jnp.cumsum(a, axis=1)
        decay = jnp.exp(Acs[:, :, None, :] - Acs[:, None, :, :])          # (B, L, L, di)
        mask = jnp.tril(jnp.ones((L, L), bool))
        S = jnp.einsum('bln,bsn->bls', Cm, Bm)
        W = jnp.where(mask[None, :, :, None], S[..., None] * decay, 0.0)
        y = jnp.einsum('blsd,bsd->bld', W, xh * dt) + xh * params["Dexp"][e][0]
        xg = y * (z * jax.nn.sigmoid(z))
        yn = xg * jax.lax.rsqrt(jnp.mean(xg * xg, -1, keepdims=True) + EPS) \
            * params["norm_inner"][e][0]
        x = yn @ params["Wout"][e] + xres
    xo = x @ params["out_w"]
    xo = xo * std + mean
    return xo[:, -cfg.pred_len:, :]


if __name__ == "__main__":
    cfg = Config()
    key = jax.random.PRNGKey(0)
    kp, kx, km = jax.random.split(key, 3)

    params = init_params(kp, cfg)
    batch = 8
    x_enc = jax.random.normal(kx, (batch, cfg.seq_len, cfg.enc_in), dtype=jnp.float32)
    x_mark_enc = jax.random.normal(km, (batch, cfg.seq_len, cfg.n_mark), dtype=jnp.float32)

    fwd = jax.jit(functools.partial(model_forward, cfg=cfg))
    out = jax.block_until_ready(fwd(x_enc, x_mark_enc, params))

    assert out.shape == (batch, cfg.pred_len, cfg.c_out), out.shape
    assert bool(jnp.all(jnp.isfinite(out)))

    with jax.default_matmul_precision("highest"):
        ref = reference_forward(x_enc, x_mark_enc, params, cfg)
    np.testing.assert_allclose(np.asarray(out), np.asarray(ref), rtol=2e-2, atol=2e-2)
    print("KERNEL_OK")
</pallas_src>

<mosaic_0001>
module attributes {stable_mosaic.version = 11 : i64} {
  func.func @kernel(%arg0: i32, %arg1: memref<4x8x4xf32, #tpu.memory_space<vmem>>, %arg2: memref<4x8x4xf32, #tpu.memory_space<vmem>>, %arg3: memref<3x4x16xf32, #tpu.memory_space<vmem>>, %arg4: memref<4x16xf32, #tpu.memory_space<vmem>>, %arg5: memref<32x16xf32, #tpu.memory_space<vmem>>, %arg6: memref<32x32xf32, #tpu.memory_space<vmem>>, %arg7: memref<3x32x32xf32, #tpu.memory_space<vmem>>, %arg8: memref<2x1x16xf32, #tpu.memory_space<vmem>>, %arg9: memref<2x16x128xf32, #tpu.memory_space<vmem>>, %arg10: memref<2x4x64xf32, #tpu.memory_space<vmem>>, %arg11: memref<2x1x64xf32, #tpu.memory_space<vmem>>, %arg12: memref<2x1x32xf32, #tpu.memory_space<vmem>>, %arg13: memref<2x1x32xf32, #tpu.memory_space<vmem>>, %arg14: memref<2x1x32xf32, #tpu.memory_space<vmem>>, %arg15: memref<2x1x32xf32, #tpu.memory_space<vmem>>, %arg16: memref<2x32x16xf32, #tpu.memory_space<vmem>>, %arg17: memref<16x4xf32, #tpu.memory_space<vmem>>, %arg18: memref<4x8x4xf32, #tpu.memory_space<vmem>>) attributes {dimension_semantics = [#tpu.dimension_semantics<parallel>], iteration_bounds = array<i64: 2>, scalar_prefetch = 0 : i64, scratch_operands = 0 : i64, tpu.core_type = #tpu.core_type<tc>, window_params = [{transform_indices = @transform_0, window_bounds = array<i64: 4, 8, 4>}, {transform_indices = @transform_1, window_bounds = array<i64: 4, 8, 4>}, {pipeline_mode = #tpu.pipeline_mode<synchronous>, transform_indices = @transform_2, window_bounds = array<i64: 3, 4, 16>}, {pipeline_mode = #tpu.pipeline_mode<synchronous>, transform_indices = @transform_3, window_bounds = array<i64: 4, 16>}, {pipeline_mode = #tpu.pipeline_mode<synchronous>, transform_indices = @transform_4, window_bounds = array<i64: 32, 16>}, {pipeline_mode = #tpu.pipeline_mode<synchronous>, transform_indices = @transform_5, window_bounds = array<i64: 32, 32>}, {pipeline_mode = #tpu.pipeline_mode<synchronous>, transform_indices = @transform_6, window_bounds = array<i64: 3, 32, 32>}, {pipeline_mode = #tpu.pipeline_mode<synchronous>, transform_indices = @transform_7, window_bounds = array<i64: 2, 1, 16>}, {pipeline_mode = #tpu.pipeline_mode<synchronous>, transform_indices = @transform_8, window_bounds = array<i64: 2, 16, 128>}, {pipeline_mode = #tpu.pipeline_mode<synchronous>, transform_indices = @transform_9, window_bounds = array<i64: 2, 4, 64>}, {pipeline_mode = #tpu.pipeline_mode<synchronous>, transform_indices = @transform_10, window_bounds = array<i64: 2, 1, 64>}, {pipeline_mode = #tpu.pipeline_mode<synchronous>, transform_indices = @transform_11, window_bounds = array<i64: 2, 1, 32>}, {pipeline_mode = #tpu.pipeline_mode<synchronous>, transform_indices = @transform_12, window_bounds = array<i64: 2, 1, 32>}, {pipeline_mode = #tpu.pipeline_mode<synchronous>, transform_indices = @transform_13, window_bounds = array<i64: 2, 1, 32>}, {pipeline_mode = #tpu.pipeline_mode<synchronous>, transform_indices = @transform_14, window_bounds = array<i64: 2, 1, 32>}, {pipeline_mode = #tpu.pipeline_mode<synchronous>, transform_indices = @transform_15, window_bounds = array<i64: 2, 32, 16>}, {pipeline_mode = #tpu.pipeline_mode<synchronous>, transform_indices = @transform_16, window_bounds = array<i64: 16, 4>}, {transform_indices = @transform_17, window_bounds = array<i64: 4, 8, 4>}]} {
    %c0 = arith.constant 0 : index
    %c0_0 = arith.constant 0 : index
    %c0_1 = arith.constant 0 : index
    %0 = vector.load %arg1[%c0, %c0_0, %c0_1] : memref<4x8x4xf32, #tpu.memory_space<vmem>>, vector<4x8x4xf32>
    %cst = arith.constant dense<0.000000e+00> : vector<4x4xf32>
    %1 = vector.multi_reduction <add>, %0, %cst [1] : vector<4x8x4xf32> to vector<4x4xf32>
    %2 = vector.shape_cast %1 : vector<4x4xf32> to vector<4x1x4xf32>
    %cst_2 = arith.constant 8.000000e+00 : f32
    %3 = vector.broadcast %cst_2 : f32 to vector<4x1x4xf32>
    %4 = arith.divf %2, %3 : vector<4x1x4xf32>
    %5 = vector.broadcast %4 : vector<4x1x4xf32> to vector<4x8x4xf32>
    %6 = arith.subf %0, %5 : vector<4x8x4xf32>
    %7 = arith.mulf %6, %6 : vector<4x8x4xf32>
    %cst_3 = arith.constant dense<0.000000e+00> : vector<4x4xf32>
    %8 = vector.multi_reduction <add>, %7, %cst_3 [1] : vector<4x8x4xf32> to vector<4x4xf32>
    %9 = vector.shape_cast %8 : vector<4x4xf32> to vector<4x1x4xf32>
    %cst_4 = arith.constant 8.000000e+00 : f32
    %10 = vector.broadcast %cst_4 : f32 to vector<4x1x4xf32>
    %11 = arith.divf %9, %10 : vector<4x1x4xf32>
    %cst_5 = arith.constant 9.99999974E-6 : f32
    %12 = vector.broadcast %cst_5 : f32 to vector<4x1x4xf32>
    %13 = arith.addf %11, %12 : vector<4x1x4xf32>
    %14 = math.sqrt %13 : vector<4x1x4xf32>
    %15 = vector.broadcast %14 : vector<4x1x4xf32> to vector<4x8x4xf32>
    %16 = arith.divf %6, %15 : vector<4x8x4xf32>
    %17 = vector.extract_strided_slice %16 {offsets = [0, 7, 0], sizes = [4, 1, 4], strides = [1, 1, 1]} : vector<4x8x4xf32> to vector<4x1x4xf32>
    %18 = vector.extract_strided_slice %16 {offsets = [0, 0, 0], sizes = [4, 7, 4], strides = [1, 1, 1]} : vector<4x8x4xf32> to vector<4x7x4xf32>
    %19 = tpu.concatenate %17, %18 in 1 : vector<4x1x4xf32>, vector<4x7x4xf32> -> vector<4x8x4xf32>
    %20 = vector.extract_strided_slice %16 {offsets = [0, 1, 0], sizes = [4, 7, 4], strides = [1, 1, 1]} : vector<4x8x4xf32> to vector<4x7x4xf32>
    %21 = vector.extract_strided_slice %16 {offsets = [0, 0, 0], sizes = [4, 1, 4], strides = [1, 1, 1]} : vector<4x8x4xf32> to vector<4x1x4xf32>
    %22 = tpu.concatenate %20, %21 in 1 : vector<4x7x4xf32>, vector<4x1x4xf32> -> vector<4x8x4xf32>
    %23 = vector.shape_cast %19 : vector<4x8x4xf32> to vector<32x4xf32>
    %24 = vector.shape_cast %16 : vector<4x8x4xf32> to vector<32x4xf32>
    %25 = vector.shape_cast %22 : vector<4x8x4xf32> to vector<32x4xf32>
    %c0_6 = arith.constant 0 : index
    %c0_7 = arith.constant 0 : index
    %c0_8 = arith.constant 0 : index
    %26 = vector.load %arg2[%c0_6, %c0_7, %c0_8] : memref<4x8x4xf32, #tpu.memory_space<vmem>>, vector<4x8x4xf32>
    %27 = vector.shape_cast %26 : vector<4x8x4xf32> to vector<32x4xf32>
    %c0_9 = arith.constant 0 : index
    %c0_10 = arith.constant 0 : index
    %c0_11 = arith.constant 0 : index
    %28 = vector.load %arg3[%c0_9, %c0_10, %c0_11] : memref<3x4x16xf32, #tpu.memory_space<vmem>>, vector<1x4x16xf32>
    %29 = vector.shape_cast %28 : vector<1x4x16xf32> to vector<4x16xf32>
    %cst_12 = arith.constant dense<0.000000e+00> : vector<32x16xf32>
    %30 = tpu.matmul %23, %29, %cst_12 {dimension_numbers = #tpu.dot_dimension_numbers<[1], [0], [0], [1], [0, 0, 1, 1], [], []>} : vector<32x4xf32>, vector<4x16xf32>, vector<32x16xf32> -> vector<32x16xf32>
    %c1 = arith.constant 1 : index
    %c0_13 = arith.constant 0 : index
    %c0_14 = arith.constant 0 : index
    %31 = vector.load %arg3[%c1, %c0_13, %c0_14] : memref<3x4x16xf32, #tpu.memory_space<vmem>>, vector<1x4x16xf32>
    %32 = vector.shape_cast %31 : vector<1x4x16xf32> to vector<4x16xf32>
    %cst_15 = arith.constant dense<0.000000e+00> : vector<32x16xf32>
    %33 = tpu.matmul %24, %32, %cst_15 {dimension_numbers = #tpu.dot_dimension_numbers<[1], [0], [0], [1], [0, 0, 1, 1], [], []>} : vector<32x4xf32>, vector<4x16xf32>, vector<32x16xf32> -> vector<32x16xf32>
    %34 = arith.addf %30, %33 : vector<32x16xf32>
    %c2 = arith.constant 2 : index
    %c0_16 = arith.constant 0 : index
    %c0_17 = arith.constant 0 : index
    %35 = vector.load %arg3[%c2, %c0_16, %c0_17] : memref<3x4x16xf32, #tpu.memory_space<vmem>>, vector<1x4x16xf32>
    %36 = vector.shape_cast %35 : vector<1x4x16xf32> to vector<4x16xf32>
    %cst_18 = arith.constant dense<0.000000e+00> : vector<32x16xf32>
    %37 = tpu.matmul %25, %36, %cst_18 {dimension_numbers = #tpu.dot_dimension_numbers<[1], [0], [0], [1], [0, 0, 1, 1], [], []>} : vector<32x4xf32>, vector<4x16xf32>, vector<32x16xf32> -> vector<32x16xf32>
    %38 = arith.addf %34, %37 : vector<32x16xf32>
    %c0_19 = arith.constant 0 : index
    %c0_20 = arith.constant 0 : index
    %39 = vector.load %arg4[%c0_19, %c0_20] : memref<4x16xf32, #tpu.memory_space<vmem>>, vector<4x16xf32>
    %cst_21 = arith.constant dense<0.000000e+00> : vector<32x16xf32>
    %40 = tpu.matmul %27, %39, %cst_21 {dimension_numbers = #tpu.dot_dimension_numbers<[1], [0], [0], [1], [0, 0, 1, 1], [], []>} : vector<32x4xf32>, vector<4x16xf32>, vector<32x16xf32> -> vector<32x16xf32>
    %41 = arith.addf %38, %40 : vector<32x16xf32>
    %c0_22 = arith.constant 0 : index
    %c0_23 = arith.constant 0 : index
    %42 = vector.load %arg5[%c0_22, %c0_23] : memref<32x16xf32, #tpu.memory_space<vmem>>, vector<32x16xf32>
    %43 = arith.addf %41, %42 : vector<32x16xf32>
    %c0_24 = arith.constant 0 : index
    %c0_25 = arith.constant 0 : index
    %44 = vector.load %arg6[%c0_24, %c0_25] : memref<32x32xf32, #tpu.memory_space<vmem>>, vector<32x32xf32>
    %cst_26 = arith.constant 5.000000e-01 : f32
    %45 = vector.broadcast %cst_26 : f32 to vector<32x32xf32>
    %46 = arith.cmpf ogt, %44, %45 : vector<32x32xf32>
    %47 = arith.mulf %43, %43 : vector<32x16xf32>
    %cst_27 = arith.constant dense<0.000000e+00> : vector<32xf32>
    %48 = vector.multi_reduction <add>, %47, %cst_27 [1] : vector<32x16xf32> to vector<32xf32>
    %49 = vector.shape_cast %48 : vector<32xf32> to vector<32x1xf32>
    %cst_28 = arith.constant 1.600000e+01 : f32
    %50 = vector.broadcast %cst_28 : f32 to vector<32x1xf32>
    %51 = arith.divf %49, %50 : vector<32x1xf32>
    %cst_29 = arith.constant 9.99999974E-6 : f32
    %52 = vector.broadcast %cst_29 : f32 to vector<32x1xf32>
    %53 = arith.addf %51, %52 : vector<32x1xf32>
    %54 = math.rsqrt %53 : vector<32x1xf32>
    %55 = vector.broadcast %54 : vector<32x1xf32> to vector<32x16xf32>
    %56 = arith.mulf %43, %55 : vector<32x16xf32>
    %c0_30 = arith.constant 0 : index
    %c0_31 = arith.constant 0 : index
    %c0_32 = arith.constant 0 : index
    %57 = vector.load %arg8[%c0_30, %c0_31, %c0_32] : memref<2x1x16xf32, #tpu.memory_space<vmem>>, vector<1x1x16xf32>
    %58 = vector.shape_cast %57 : vector<1x1x16xf32> to vector<1x16xf32>
    %59 = vector.broadcast %58 : vector<1x16xf32> to vector<32x16xf32>
    %60 = arith.mulf %56, %59 : vector<32x16xf32>
    %c0_33 = arith.constant 0 : index
    %c0_34 = arith.constant 0 : index
    %c0_35 = arith.constant 0 : index
    %61 = vector.load %arg9[%c0_33, %c0_34, %c0_35] : memref<2x16x128xf32, #tpu.memory_space<vmem>>, vector<1x16x128xf32>
    %62 = vector.shape_cast %61 : vector<1x16x128xf32> to vector<16x128xf32>
    %cst_36 = arith.constant dense<0.000000e+00> : vector<32x128xf32>
    %63 = tpu.matmul %60, %62, %cst_36 {dimension_numbers = #tpu.dot_dimension_numbers<[1], [0], [0], [1], [0, 0, 1, 1], [], []>} : vector<32x16xf32>, vector<16x128xf32>, vector<32x128xf32> -> vector<32x128xf32>
    %64 = vector.extract_strided_slice %63 {offsets = [0, 0], sizes = [32, 32], strides = [1, 1]} : vector<32x128xf32> to vector<32x32xf32>
    %65 = vector.extract_strided_slice %63 {offsets = [0, 32], sizes = [32, 64], strides = [1, 1]} : vector<32x128xf32> to vector<32x64xf32>
    %66 = vector.extract_strided_slice %63 {offsets = [0, 96], sizes = [32, 32], strides = [1, 1]} : vector<32x128xf32> to vector<32x32xf32>
    %c0_37 = arith.constant 0 : index
    %c0_38 = arith.constant 0 : index
    %c0_39 = arith.constant 0 : index
    %67 = vector.load %arg12[%c0_37, %c0_38, %c0_39] : memref<2x1x32xf32, #tpu.memory_space<vmem>>, vector<1x1x32xf32>
    %68 = vector.shape_cast %67 : vector<1x1x32xf32> to vector<1x32xf32>
    %69 = vector.broadcast %68 : vector<1x32xf32> to vector<32x32xf32>
    %70 = arith.addf %66, %69 : vector<32x32xf32>
    %cst_40 = arith.constant 0.000000e+00 : f32
    %71 = vector.broadcast %cst_40 : f32 to vector<32x32xf32>
    %72 = arith.maximumf %70, %71 : vector<32x32xf32>
    %73 = vector.broadcast %cst_40 : f32 to vector<32x32xf32>
    %74 = arith.subf %70, %73 : vector<32x32xf32>
    %75 = arith.cmpf one, %74, %74 : vector<32x32xf32>
    %76 = vector.broadcast %cst_40 : f32 to vector<32x32xf32>
    %77 = arith.addf %70, %76 : vector<32x32xf32>
    %78 = math.absf %74 : vector<32x32xf32>
    %cst_41 = arith.constant 0.000000e+00 : f32
    %79 = vector.broadcast %cst_41 : f32 to vector<32x32xf32>
    %80 = arith.subf %79, %78 : vector<32x32xf32>
    %81 = math.exp %80 : vector<32x32xf32>
    %82 = math.log1p %81 : vector<32x32xf32>
    %83 = arith.addf %72, %82 : vector<32x32xf32>
    %84 = arith.select %75, %77, %83 : vector<32x32xi1>, vector<32x32xf32>
    %c0_42 = arith.constant 0 : index
    %c0_43 = arith.constant 0 : index
    %c0_44 = arith.constant 0 : index
    %85 = vector.load %arg10[%c0_42, %c0_43, %c0_44] : memref<2x4x64xf32, #tpu.memory_space<vmem>>, vector<1x4x64xf32>
    %86 = vector.shape_cast %85 : vector<1x4x64xf32> to vector<4x64xf32>
    %87 = vector.extract_strided_slice %86 {offsets = [3, 0], sizes = [1, 64], strides = [1, 1]} : vector<4x64xf32> to vector<1x64xf32>
    %88 = vector.broadcast %87 : vector<1x64xf32> to vector<32x64xf32>
    %89 = arith.mulf %65, %88 : vector<32x64xf32>
    %c0_45 = arith.constant 0 : index
    %c0_46 = arith.constant 0 : index
    %c0_47 = arith.constant 0 : index
    %90 = vector.load %arg11[%c0_45, %c0_46, %c0_47] : memref<2x1x64xf32, #tpu.memory_space<vmem>>, vector<1x1x64xf32>
    %91 = vector.shape_cast %90 : vector<1x1x64xf32> to vector<1x64xf32>
    %92 = vector.broadcast %91 : vector<1x64xf32> to vector<32x64xf32>
    %93 = arith.addf %89, %92 : vector<32x64xf32>
    %c0_48 = arith.constant 0 : index
    %c0_49 = arith.constant 0 : index
    %c0_50 = arith.constant 0 : index
    %94 = vector.load %arg7[%c0_48, %c0_49, %c0_50] : memref<3x32x32xf32, #tpu.memory_space<vmem>>, vector<1x32x32xf32>
    %95 = vector.shape_cast %94 : vector<1x32x32xf32> to vector<32x32xf32>
    %cst_51 = arith.constant dense<0.000000e+00> : vector<32x64xf32>
    %96 = tpu.matmul %95, %65, %cst_51 {dimension_numbers = #tpu.dot_dimension_numbers<[1], [0], [0], [1], [0, 0, 1, 1], [], []>} : vector<32x32xf32>, vector<32x64xf32>, vector<32x64xf32> -> vector<32x64xf32>
    %97 = vector.extract_strided_slice %86 {offsets = [2, 0], sizes = [1, 64], strides = [1, 1]} : vector<4x64xf32> to vector<1x64xf32>
    %98 = vector.broadcast %97 : vector<1x64xf32> to vector<32x64xf32>
    %99 = arith.mulf %96, %98 : vector<32x64xf32>
    %100 = arith.addf %93, %99 : vector<32x64xf32>
    %c1_52 = arith.constant 1 : index
    %c0_53 = arith.constant 0 : index
    %c0_54 = arith.constant 0 : index
    %101 = vector.load %arg7[%c1_52, %c0_53, %c0_54] : memref<3x32x32xf32, #tpu.memory_space<vmem>>, vector<1x32x32xf32>
    %102 = vector.shape_cast %101 : vector<1x32x32xf32> to vector<32x32xf32>
    %cst_55 = arith.constant dense<0.000000e+00> : vector<32x64xf32>
    %103 = tpu.matmul %102, %65, %cst_55 {dimension_numbers = #tpu.dot_dimension_numbers<[1], [0], [0], [1], [0, 0, 1, 1], [], []>} : vector<32x32xf32>, vector<32x64xf32>, vector<32x64xf32> -> vector<32x64xf32>
    %104 = vector.extract_strided_slice %86 {offsets = [1, 0], sizes = [1, 64], strides = [1, 1]} : vector<4x64xf32> to vector<1x64xf32>
    %105 = vector.broadcast %104 : vector<1x64xf32> to vector<32x64xf32>
    %106 = arith.mulf %103, %105 : vector<32x64xf32>
    %107 = arith.addf %100, %106 : vector<32x64xf32>
    %c2_56 = arith.constant 2 : index
    %c0_57 = arith.constant 0 : index
    %c0_58 = arith.constant 0 : index
    %108 = vector.load %arg7[%c2_56, %c0_57, %c0_58] : memref<3x32x32xf32, #tpu.memory_space<vmem>>, vector<1x32x32xf32>
    %109 = vector.shape_cast %108 : vector<1x32x32xf32> to vector<32x32xf32>
    %cst_59 = arith.constant dense<0.000000e+00> : vector<32x64xf32>
    %110 = tpu.matmul %109, %65, %cst_59 {dimension_numbers = #tpu.dot_dimension_numbers<[1], [0], [0], [1], [0, 0, 1, 1], [], []>} : vector<32x32xf32>, vector<32x64xf32>, vector<32x64xf32> -> vector<32x64xf32>
    %111 = vector.extract_strided_slice %86 {offsets = [0, 0], sizes = [1, 64], strides = [1, 1]} : vector<4x64xf32> to vector<1x64xf32>
    %112 = vector.broadcast %111 : vector<1x64xf32> to vector<32x64xf32>
    %113 = arith.mulf %110, %112 : vector<32x64xf32>
    %114 = arith.addf %107, %113 : vector<32x64xf32>
    %115 = arith.negf %114 : vector<32x64xf32>
    %116 = math.exp %115 : vector<32x64xf32>
    %cst_60 = arith.constant 1.000000e+00 : f32
    %117 = vector.broadcast %cst_60 : f32 to vector<32x64xf32>
    %118 = arith.addf %117, %116 : vector<32x64xf32>
    %119 = arith.divf %117, %118 : vector<32x64xf32>
    %120 = arith.mulf %114, %119 : vector<32x64xf32>
    %121 = vector.extract_strided_slice %120 {offsets = [0, 0], sizes = [32, 32], strides = [1, 1]} : vector<32x64xf32> to vector<32x32xf32>
    %122 = vector.extract_strided_slice %120 {offsets = [0, 32], sizes = [32, 16], strides = [1, 1]} : vector<32x64xf32> to vector<32x16xf32>
    %123 = vector.extract_strided_slice %120 {offsets = [0, 48], sizes = [32, 16], strides = [1, 1]} : vector<32x64xf32> to vector<32x16xf32>
    %124 = arith.mulf %121, %84 : vector<32x32xf32>
    %c0_61 = arith.constant 0 : index
    %c0_62 = arith.constant 0 : index
    %c0_63 = arith.constant 0 : index
    %125 = vector.load %arg13[%c0_61, %c0_62, %c0_63] : memref<2x1x32xf32, #tpu.memory_space<vmem>>, vector<1x1x32xf32>
    %126 = vector.shape_cast %125 : vector<1x1x32xf32> to vector<1x32xf32>
    %127 = vector.broadcast %126 : vector<1x32xf32> to vector<32x32xf32>
    %128 = arith.mulf %127, %84 : vector<32x32xf32>
    %cst_64 = arith.constant dense<0.000000e+00> : vector<32x32xf32>
    %129 = tpu.matmul %44, %128, %cst_64 {dimension_numbers = #tpu.dot_dimension_numbers<[1], [0], [0], [1], [0, 0, 1, 1], [], []>} : vector<32x32xf32>, vector<32x32xf32>, vector<32x32xf32> -> vector<32x32xf32>
    %130 = math.exp %129 : vector<32x32xf32>
    %cst_65 = arith.constant 0.000000e+00 : f32
    %131 = vector.broadcast %cst_65 : f32 to vector<32x32xf32>
    %132 = arith.subf %131, %129 : vector<32x32xf32>
    %133 = math.exp %132 : vector<32x32xf32>
    %cst_66 = arith.constant dense<0.000000e+00> : vector<32x32xf32>
    %134 = tpu.matmul %123, %122, %cst_66 {dimension_numbers = #tpu.dot_dimension_numbers<[1], [1], [0], [0], [0, 0, 1, 0], [], []>} : vector<32x16xf32>, vector<32x16xf32>, vector<32x32xf32> -> vector<32x32xf32>
    %cst_67 = arith.constant 0.000000e+00 : f32
    %135 = vector.broadcast %cst_67 : f32 to vector<32x32xf32>
    %136 = arith.select %46, %134, %135 : vector<32x32xi1>, vector<32x32xf32>
    %137 = arith.mulf %133, %124 : vector<32x32xf32>
    %cst_68 = arith.constant dense<0.000000e+00> : vector<32x32xf32>
    %138 = tpu.matmul %136, %137, %cst_68 {dimension_numbers = #tpu.dot_dimension_numbers<[1], [0], [0], [1], [0, 0, 1, 1], [], []>} : vector<32x32xf32>, vector<32x32xf32>, vector<32x32xf32> -> vector<32x32xf32>
    %139 = arith.mulf %130, %138 : vector<32x32xf32>
    %c0_69 = arith.constant 0 : index
    %c0_70 = arith.constant 0 : index
    %c0_71 = arith.constant 0 : index
    %140 = vector.load %arg14[%c0_69, %c0_70, %c0_71] : memref<2x1x32xf32, #tpu.memory_space<vmem>>, vector<1x1x32xf32>
    %141 = vector.shape_cast %140 : vector<1x1x32xf32> to vector<1x32xf32>
    %142 = vector.broadcast %141 : vector<1x32xf32> to vector<32x32xf32>
    %143 = arith.mulf %121, %142 : vector<32x32xf32>
    %144 = arith.addf %139, %143 : vector<32x32xf32>
    %145 = arith.negf %64 : vector<32x32xf32>
    %146 = math.exp %145 : vector<32x32xf32>
    %cst_72 = arith.constant 1.000000e+00 : f32
    %147 = vector.broadcast %cst_72 : f32 to vector<32x32xf32>
    %148 = arith.addf %147, %146 : vector<32x32xf32>
    %149 = arith.divf %147, %148 : vector<32x32xf32>
    %150 = arith.mulf %64, %149 : vector<32x32xf32>
    %151 = arith.mulf %144, %150 : vector<32x32xf32>
    %152 = arith.mulf %151, %151 : vector<32x32xf32>
    %cst_73 = arith.constant dense<0.000000e+00> : vector<32xf32>
    %153 = vector.multi_reduction <add>, %152, %cst_73 [1] : vector<32x32xf32> to vector<32xf32>
    %154 = vector.shape_cast %153 : vector<32xf32> to vector<32x1xf32>
    %cst_74 = arith.constant 3.200000e+01 : f32
    %155 = vector.broadcast %cst_74 : f32 to vector<32x1xf32>
    %156 = arith.divf %154, %155 : vector<32x1xf32>
    %cst_75 = arith.constant 9.99999974E-6 : f32
    %157 = vector.broadcast %cst_75 : f32 to vector<32x1xf32>
    %158 = arith.addf %156, %157 : vector<32x1xf32>
    %159 = math.rsqrt %158 : vector<32x1xf32>
    %160 = vector.broadcast %159 : vector<32x1xf32> to vector<32x32xf32>
    %161 = arith.mulf %151, %160 : vector<32x32xf32>
    %c0_76 = arith.constant 0 : index
    %c0_77 = arith.constant 0 : index
    %c0_78 = arith.constant 0 : index
    %162 = vector.load %arg15[%c0_76, %c0_77, %c0_78] : memref<2x1x32xf32, #tpu.memory_space<vmem>>, vector<1x1x32xf32>
    %163 = vector.shape_cast %162 : vector<1x1x32xf32> to vector<1x32xf32>
    %164 = vector.broadcast %163 : vector<1x32xf32> to vector<32x32xf32>
    %165 = arith.mulf %161, %164 : vector<32x32xf32>
    %c0_79 = arith.constant 0 : index
    %c0_80 = arith.constant 0 : index
    %c0_81 = arith.constant 0 : index
    %166 = vector.load %arg16[%c0_79, %c0_80, %c0_81] : memref<2x32x16xf32, #tpu.memory_space<vmem>>, vector<1x32x16xf32>
    %167 = vector.shape_cast %166 : vector<1x32x16xf32> to vector<32x16xf32>
    %cst_82 = arith.constant dense<0.000000e+00> : vector<32x16xf32>
    %168 = tpu.matmul %165, %167, %cst_82 {dimension_numbers = #tpu.dot_dimension_numbers<[1], [0], [0], [1], [0, 0, 1, 1], [], []>} : vector<32x32xf32>, vector<32x16xf32>, vector<32x16xf32> -> vector<32x16xf32>
    %169 = arith.addf %168, %43 : vector<32x16xf32>
    %170 = arith.mulf %169, %169 : vector<32x16xf32>
    %cst_83 = arith.constant dense<0.000000e+00> : vector<32xf32>
    %171 = vector.multi_reduction <add>, %170, %cst_83 [1] : vector<32x16xf32> to vector<32xf32>
    %172 = vector.shape_cast %171 : vector<32xf32> to vector<32x1xf32>
    %cst_84 = arith.constant 1.600000e+01 : f32
    %173 = vector.broadcast %cst_84 : f32 to vector<32x1xf32>
    %174 = arith.divf %172, %173 : vector<32x1xf32>
    %cst_85 = arith.constant 9.99999974E-6 : f32
    %175 = vector.broadcast %cst_85 : f32 to vector<32x1xf32>
    %176 = arith.addf %174, %175 : vector<32x1xf32>
    %177 = math.rsqrt %176 : vector<32x1xf32>
    %178 = vector.broadcast %177 : vector<32x1xf32> to vector<32x16xf32>
    %179 = arith.mulf %169, %178 : vector<32x16xf32>
    %c1_86 = arith.constant 1 : index
    %c0_87 = arith.constant 0 : index
    %c0_88 = arith.constant 0 : index
    %180 = vector.load %arg8[%c1_86, %c0_87, %c0_88] : memref<2x1x16xf32, #tpu.memory_space<vmem>>, vector<1x1x16xf32>
    %181 = vector.shape_cast %180 : vector<1x1x16xf32> to vector<1x16xf32>
    %182 = vector.broadcast %181 : vector<1x16xf32> to vector<32x16xf32>
    %183 = arith.mulf %179, %182 : vector<32x16xf32>
    %c1_89 = arith.constant 1 : index
    %c0_90 = arith.constant 0 : index
    %c0_91 = arith.constant 0 : index
    %184 = vector.load %arg9[%c1_89, %c0_90, %c0_91] : memref<2x16x128xf32, #tpu.memory_space<vmem>>, vector<1x16x128xf32>
    %185 = vector.shape_cast %184 : vector<1x16x128xf32> to vector<16x128xf32>
    %cst_92 = arith.constant dense<0.000000e+00> : vector<32x128xf32>
    %186 = tpu.matmul %183, %185, %cst_92 {dimension_numbers = #tpu.dot_dimension_numbers<[1], [0], [0], [1], [0, 0, 1, 1], [], []>} : vector<32x16xf32>, vector<16x128xf32>, vector<32x128xf32> -> vector<32x128xf32>
    %187 = vector.extract_strided_slice %186 {offsets = [0, 0], sizes = [32, 32], strides = [1, 1]} : vector<32x128xf32> to vector<32x32xf32>
    %188 = vector.extract_strided_slice %186 {offsets = [0, 32], sizes = [32, 64], strides = [1, 1]} : vector<32x128xf32> to vector<32x64xf32>
    %189 = vector.extract_strided_slice %186 {offsets = [0, 96], sizes = [32, 32], strides = [1, 1]} : vector<32x128xf32> to vector<32x32xf32>
    %c1_93 = arith.constant 1 : index
    %c0_94 = arith.constant 0 : index
    %c0_95 = arith.constant 0 : index
    %190 = vector.load %arg12[%c1_93, %c0_94, %c0_95] : memref<2x1x32xf32, #tpu.memory_space<vmem>>, vector<1x1x32xf32>
    %191 = vector.shape_cast %190 : vector<1x1x32xf32> to vector<1x32xf32>
    %192 = vector.broadcast %191 : vector<1x32xf32> to vector<32x32xf32>
    %193 = arith.addf %189, %192 : vector<32x32xf32>
    %cst_96 = arith.constant 0.000000e+00 : f32
    %194 = vector.broadcast %cst_96 : f32 to vector<32x32xf32>
    %195 = arith.maximumf %193, %194 : vector<32x32xf32>
    %196 = vector.broadcast %cst_96 : f32 to vector<32x32xf32>
    %197 = arith.subf %193, %196 : vector<32x32xf32>
    %198 = arith.cmpf one, %197, %197 : vector<32x32xf32>
    %199 = vector.broadcast %cst_96 : f32 to vector<32x32xf32>
    %200 = arith.addf %193, %199 : vector<32x32xf32>
    %201 = math.absf %197 : vector<32x32xf32>
    %cst_97 = arith.constant 0.000000e+00 : f32
    %202 = vector.broadcast %cst_97 : f32 to vector<32x32xf32>
    %203 = arith.subf %202, %201 : vector<32x32xf32>
    %204 = math.exp %203 : vector<32x32xf32>
    %205 = math.log1p %204 : vector<32x32xf32>
    %206 = arith.addf %195, %205 : vector<32x32xf32>
    %207 = arith.select %198, %200, %206 : vector<32x32xi1>, vector<32x32xf32>
    %c1_98 = arith.constant 1 : index
    %c0_99 = arith.constant 0 : index
    %c0_100 = arith.constant 0 : index
    %208 = vector.load %arg10[%c1_98, %c0_99, %c0_100] : memref<2x4x64xf32, #tpu.memory_space<vmem>>, vector<1x4x64xf32>
    %209 = vector.shape_cast %208 : vector<1x4x64xf32> to vector<4x64xf32>
    %210 = vector.extract_strided_slice %209 {offsets = [3, 0], sizes = [1, 64], strides = [1, 1]} : vector<4x64xf32> to vector<1x64xf32>
    %211 = vector.broadcast %210 : vector<1x64xf32> to vector<32x64xf32>
    %212 = arith.mulf %188, %211 : vector<32x64xf32>
    %c1_101 = arith.constant 1 : index
    %c0_102 = arith.constant 0 : index
    %c0_103 = arith.constant 0 : index
    %213 = vector.load %arg11[%c1_101, %c0_102, %c0_103] : memref<2x1x64xf32, #tpu.memory_space<vmem>>, vector<1x1x64xf32>
    %214 = vector.shape_cast %213 : vector<1x1x64xf32> to vector<1x64xf32>
    %215 = vector.broadcast %214 : vector<1x64xf32> to vector<32x64xf32>
    %216 = arith.addf %212, %215 : vector<32x64xf32>
    %c0_104 = arith.constant 0 : index
    %c0_105 = arith.constant 0 : index
    %c0_106 = arith.constant 0 : index
    %217 = vector.load %arg7[%c0_104, %c0_105, %c0_106] : memref<3x32x32xf32, #tpu.memory_space<vmem>>, vector<1x32x32xf32>
    %218 = vector.shape_cast %217 : vector<1x32x32xf32> to vector<32x32xf32>
    %cst_107 = arith.constant dense<0.000000e+00> : vector<32x64xf32>
    %219 = tpu.matmul %218, %188, %cst_107 {dimension_numbers = #tpu.dot_dimension_numbers<[1], [0], [0], [1], [0, 0, 1, 1], [], []>} : vector<32x32xf32>, vector<32x64xf32>, vector<32x64xf32> -> vector<32x64xf32>
    %220 = vector.extract_strided_slice %209 {offsets = [2, 0], sizes = [1, 64], strides = [1, 1]} : vector<4x64xf32> to vector<1x64xf32>
    %221 = vector.broadcast %220 : vector<1x64xf32> to vector<32x64xf32>
    %222 = arith.mulf %219, %221 : vector<32x64xf32>
    %223 = arith.addf %216, %222 : vector<32x64xf32>
    %c1_108 = arith.constant 1 : index
    %c0_109 = arith.constant 0 : index
    %c0_110 = arith.constant 0 : index
    %224 = vector.load %arg7[%c1_108, %c0_109, %c0_110] : memref<3x32x32xf32, #tpu.memory_space<vmem>>, vector<1x32x32xf32>
    %225 = vector.shape_cast %224 : vector<1x32x32xf32> to vector<32x32xf32>
    %cst_111 = arith.constant dense<0.000000e+00> : vector<32x64xf32>
    %226 = tpu.matmul %225, %188, %cst_111 {dimension_numbers = #tpu.dot_dimension_numbers<[1], [0], [0], [1], [0, 0, 1, 1], [], []>} : vector<32x32xf32>, vector<32x64xf32>, vector<32x64xf32> -> vector<32x64xf32>
    %227 = vector.extract_strided_slice %209 {offsets = [1, 0], sizes = [1, 64], strides = [1, 1]} : vector<4x64xf32> to vector<1x64xf32>
    %228 = vector.broadcast %227 : vector<1x64xf32> to vector<32x64xf32>
    %229 = arith.mulf %226, %228 : vector<32x64xf32>
    %230 = arith.addf %223, %229 : vector<32x64xf32>
    %c2_112 = arith.constant 2 : index
    %c0_113 = arith.constant 0 : index
    %c0_114 = arith.constant 0 : index
    %231 = vector.load %arg7[%c2_112, %c0_113, %c0_114] : memref<3x32x32xf32, #tpu.memory_space<vmem>>, vector<1x32x32xf32>
    %232 = vector.shape_cast %231 : vector<1x32x32xf32> to vector<32x32xf32>
    %cst_115 = arith.constant dense<0.000000e+00> : vector<32x64xf32>
    %233 = tpu.matmul %232, %188, %cst_115 {dimension_numbers = #tpu.dot_dimension_numbers<[1], [0], [0], [1], [0, 0, 1, 1], [], []>} : vector<32x32xf32>, vector<32x64xf32>, vector<32x64xf32> -> vector<32x64xf32>
    %234 = vector.extract_strided_slice %209 {offsets = [0, 0], sizes = [1, 64], strides = [1, 1]} : vector<4x64xf32> to vector<1x64xf32>
    %235 = vector.broadcast %234 : vector<1x64xf32> to vector<32x64xf32>
    %236 = arith.mulf %233, %235 : vector<32x64xf32>
    %237 = arith.addf %230, %236 : vector<32x64xf32>
    %238 = arith.negf %237 : vector<32x64xf32>
    %239 = math.exp %238 : vector<32x64xf32>
    %cst_116 = arith.constant 1.000000e+00 : f32
    %240 = vector.broadcast %cst_116 : f32 to vector<32x64xf32>
    %241 = arith.addf %240, %239 : vector<32x64xf32>
    %242 = arith.divf %240, %241 : vector<32x64xf32>
    %243 = arith.mulf %237, %242 : vector<32x64xf32>
    %244 = vector.extract_strided_slice %243 {offsets = [0, 0], sizes = [32, 32], strides = [1, 1]} : vector<32x64xf32> to vector<32x32xf32>
    %245 = vector.extract_strided_slice %243 {offsets = [0, 32], sizes = [32, 16], strides = [1, 1]} : vector<32x64xf32> to vector<32x16xf32>
    %246 = vector.extract_strided_slice %243 {offsets = [0, 48], sizes = [32, 16], strides = [1, 1]} : vector<32x64xf32> to vector<32x16xf32>
    %247 = arith.mulf %244, %207 : vector<32x32xf32>
    %c1_117 = arith.constant 1 : index
    %c0_118 = arith.constant 0 : index
    %c0_119 = arith.constant 0 : index
    %248 = vector.load %arg13[%c1_117, %c0_118, %c0_119] : memref<2x1x32xf32, #tpu.memory_space<vmem>>, vector<1x1x32xf32>
    %249 = vector.shape_cast %248 : vector<1x1x32xf32> to vector<1x32xf32>
    %250 = vector.broadcast %249 : vector<1x32xf32> to vector<32x32xf32>
    %251 = arith.mulf %250, %207 : vector<32x32xf32>
    %cst_120 = arith.constant dense<0.000000e+00> : vector<32x32xf32>
    %252 = tpu.matmul %44, %251, %cst_120 {dimension_numbers = #tpu.dot_dimension_numbers<[1], [0], [0], [1], [0, 0, 1, 1], [], []>} : vector<32x32xf32>, vector<32x32xf32>, vector<32x32xf32> -> vector<32x32xf32>
    %253 = math.exp %252 : vector<32x32xf32>
    %cst_121 = arith.constant 0.000000e+00 : f32
    %254 = vector.broadcast %cst_121 : f32 to vector<32x32xf32>
    %255 = arith.subf %254, %252 : vector<32x32xf32>
    %256 = math.exp %255 : vector<32x32xf32>
    %cst_122 = arith.constant dense<0.000000e+00> : vector<32x32xf32>
    %257 = tpu.matmul %246, %245, %cst_122 {dimension_numbers = #tpu.dot_dimension_numbers<[1], [1], [0], [0], [0, 0, 1, 0], [], []>} : vector<32x16xf32>, vector<32x16xf32>, vector<32x32xf32> -> vector<32x32xf32>
    %cst_123 = arith.constant 0.000000e+00 : f32
    %258 = vector.broadcast %cst_123 : f32 to vector<32x32xf32>
    %259 = arith.select %46, %257, %258 : vector<32x32xi1>, vector<32x32xf32>
    %260 = arith.mulf %256, %247 : vector<32x32xf32>
    %cst_124 = arith.constant dense<0.000000e+00> : vector<32x32xf32>
    %261 = tpu.matmul %259, %260, %cst_124 {dimension_numbers = #tpu.dot_dimension_numbers<[1], [0], [0], [1], [0, 0, 1, 1], [], []>} : vector<32x32xf32>, vector<32x32xf32>, vector<32x32xf32> -> vector<32x32xf32>
    %262 = arith.mulf %253, %261 : vector<32x32xf32>
    %c1_125 = arith.constant 1 : index
    %c0_126 = arith.constant 0 : index
    %c0_127 = arith.constant 0 : index
    %263 = vector.load %arg14[%c1_125, %c0_126, %c0_127] : memref<2x1x32xf32, #tpu.memory_space<vmem>>, vector<1x1x32xf32>
    %264 = vector.shape_cast %263 : vector<1x1x32xf32> to vector<1x32xf32>
    %265 = vector.broadcast %264 : vector<1x32xf32> to vector<32x32xf32>
    %266 = arith.mulf %244, %265 : vector<32x32xf32>
    %267 = arith.addf %262, %266 : vector<32x32xf32>
    %268 = arith.negf %187 : vector<32x32xf32>
    %269 = math.exp %268 : vector<32x32xf32>
    %cst_128 = arith.constant 1.000000e+00 : f32
    %270 = vector.broadcast %cst_128 : f32 to vector<32x32xf32>
    %271 = arith.addf %270, %269 : vector<32x32xf32>
    %272 = arith.divf %270, %271 : vector<32x32xf32>
    %273 = arith.mulf %187, %272 : vector<32x32xf32>
    %274 = arith.mulf %267, %273 : vector<32x32xf32>
    %275 = arith.mulf %274, %274 : vector<32x32xf32>
    %cst_129 = arith.constant dense<0.000000e+00> : vector<32xf32>
    %276 = vector.multi_reduction <add>, %275, %cst_129 [1] : vector<32x32xf32> to vector<32xf32>
    %277 = vector.shape_cast %276 : vector<32xf32> to vector<32x1xf32>
    %cst_130 = arith.constant 3.200000e+01 : f32
    %278 = vector.broadcast %cst_130 : f32 to vector<32x1xf32>
    %279 = arith.divf %277, %278 : vector<32x1xf32>
    %cst_131 = arith.constant 9.99999974E-6 : f32
    %280 = vector.broadcast %cst_131 : f32 to vector<32x1xf32>
    %281 = arith.addf %279, %280 : vector<32x1xf32>
    %282 = math.rsqrt %281 : vector<32x1xf32>
    %283 = vector.broadcast %282 : vector<32x1xf32> to vector<32x32xf32>
    %284 = arith.mulf %274, %283 : vector<32x32xf32>
    %c1_132 = arith.constant 1 : index
    %c0_133 = arith.constant 0 : index
    %c0_134 = arith.constant 0 : index
    %285 = vector.load %arg15[%c1_132, %c0_133, %c0_134] : memref<2x1x32xf32, #tpu.memory_space<vmem>>, vector<1x1x32xf32>
    %286 = vector.shape_cast %285 : vector<1x1x32xf32> to vector<1x32xf32>
    %287 = vector.broadcast %286 : vector<1x32xf32> to vector<32x32xf32>
    %288 = arith.mulf %284, %287 : vector<32x32xf32>
    %c1_135 = arith.constant 1 : index
    %c0_136 = arith.constant 0 : index
    %c0_137 = arith.constant 0 : index
    %289 = vector.load %arg16[%c1_135, %c0_136, %c0_137] : memref<2x32x16xf32, #tpu.memory_space<vmem>>, vector<1x32x16xf32>
    %290 = vector.shape_cast %289 : vector<1x32x16xf32> to vector<32x16xf32>
    %cst_138 = arith.constant dense<0.000000e+00> : vector<32x16xf32>
    %291 = tpu.matmul %288, %290, %cst_138 {dimension_numbers = #tpu.dot_dimension_numbers<[1], [0], [0], [1], [0, 0, 1, 1], [], []>} : vector<32x32xf32>, vector<32x16xf32>, vector<32x16xf32> -> vector<32x16xf32>
    %292 = arith.addf %291, %169 : vector<32x16xf32>
    %c0_139 = arith.constant 0 : index
    %c0_140 = arith.constant 0 : index
    %293 = vector.load %arg17[%c0_139, %c0_140] : memref<16x4xf32, #tpu.memory_space<vmem>>, vector<16x4xf32>
    %cst_141 = arith.constant dense<0.000000e+00> : vector<32x4xf32>
    %294 = tpu.matmul %292, %293, %cst_141 {dimension_numbers = #tpu.dot_dimension_numbers<[1], [0], [0], [1], [0, 0, 1, 1], [], []>} : vector<32x16xf32>, vector<16x4xf32>, vector<32x4xf32> -> vector<32x4xf32>
    %295 = vector.shape_cast %294 : vector<32x4xf32> to vector<4x8x4xf32>
    %296 = vector.broadcast %14 : vector<4x1x4xf32> to vector<4x8x4xf32>
    %297 = arith.mulf %295, %296 : vector<4x8x4xf32>
    %298 = vector.broadcast %4 : vector<4x1x4xf32> to vector<4x8x4xf32>
    %299 = arith.addf %297, %298 : vector<4x8x4xf32>
    %c0_142 = arith.constant 0 : index
    %c0_143 = arith.constant 0 : index
    %c0_144 = arith.constant 0 : index
    %300 = vector.load %arg18[%c0_142, %c0_143, %c0_144] : memref<4x8x4xf32, #tpu.memory_space<vmem>>, vector<4x8x4xf32>
    tpu.vector_store %arg18[%c0_142, %c0_143, %c0_144], %299 {strides = array<i32>} : memref<4x8x4xf32, #tpu.memory_space<vmem>>, vector<4x8x4xf32>,
    return
  }
  func.func @transform_0(%arg0: i32) -> (i32, i32, i32) {
    %c0_i32 = arith.constant 0 : i32
    %c0_i32_0 = arith.constant 0 : i32
    %c0_i32_1 = arith.constant 0 : i32
    return %arg0, %c0_i32, %c0_i32_0 : i32, i32, i32
  }
  func.func @transform_1(%arg0: i32) -> (i32, i32, i32) {
    %c0_i32 = arith.constant 0 : i32
    %c0_i32_0 = arith.constant 0 : i32
    %c0_i32_1 = arith.constant 0 : i32
    return %arg0, %c0_i32, %c0_i32_0 : i32, i32, i32
  }
  func.func @transform_2(%arg0: i32) -> (i32, i32, i32) {
    %c0_i32 = arith.constant 0 : i32
    %c0_i32_0 = arith.constant 0 : i32
    %c0_i32_1 = arith.constant 0 : i32
    %c0_i32_2 = arith.constant 0 : i32
    return %c0_i32, %c0_i32_0, %c0_i32_1 : i32, i32, i32
  }
  func.func @transform_3(%arg0: i32) -> (i32, i32) {
    %c0_i32 = arith.constant 0 : i32
    %c0_i32_0 = arith.constant 0 : i32
    %c0_i32_1 = arith.constant 0 : i32
    return %c0_i32, %c0_i32_0 : i32, i32
  }
  func.func @transform_4(%arg0: i32) -> (i32, i32) {
    %c0_i32 = arith.constant 0 : i32
    %c0_i32_0 = arith.constant 0 : i32
    %c0_i32_1 = arith.constant 0 : i32
    return %c0_i32, %c0_i32_0 : i32, i32
  }
  func.func @transform_5(%arg0: i32) -> (i32, i32) {
    %c0_i32 = arith.constant 0 : i32
    %c0_i32_0 = arith.constant 0 : i32
    %c0_i32_1 = arith.constant 0 : i32
    return %c0_i32, %c0_i32_0 : i32, i32
  }
  func.func @transform_6(%arg0: i32) -> (i32, i32, i32) {
    %c0_i32 = arith.constant 0 : i32
    %c0_i32_0 = arith.constant 0 : i32
    %c0_i32_1 = arith.constant 0 : i32
    %c0_i32_2 = arith.constant 0 : i32
    return %c0_i32, %c0_i32_0, %c0_i32_1 : i32, i32, i32
  }
  func.func @transform_7(%arg0: i32) -> (i32, i32, i32) {
    %c0_i32 = arith.constant 0 : i32
    %c0_i32_0 = arith.constant 0 : i32
    %c0_i32_1 = arith.constant 0 : i32
    %c0_i32_2 = arith.constant 0 : i32
    return %c0_i32, %c0_i32_0, %c0_i32_1 : i32, i32, i32
  }
  func.func @transform_8(%arg0: i32) -> (i32, i32, i32) {
    %c0_i32 = arith.constant 0 : i32
    %c0_i32_0 = arith.constant 0 : i32
    %c0_i32_1 = arith.constant 0 : i32
    %c0_i32_2 = arith.constant 0 : i32
    return %c0_i32, %c0_i32_0, %c0_i32_1 : i32, i32, i32
  }
  func.func @transform_9(%arg0: i32) -> (i32, i32, i32) {
    %c0_i32 = arith.constant 0 : i32
    %c0_i32_0 = arith.constant 0 : i32
    %c0_i32_1 = arith.constant 0 : i32
    %c0_i32_2 = arith.constant 0 : i32
    return %c0_i32, %c0_i32_0, %c0_i32_1 : i32, i32, i32
  }
  func.func @transform_10(%arg0: i32) -> (i32, i32, i32) {
    %c0_i32 = arith.constant 0 : i32
    %c0_i32_0 = arith.constant 0 : i32
    %c0_i32_1 = arith.constant 0 : i32
    %c0_i32_2 = arith.constant 0 : i32
    return %c0_i32, %c0_i32_0, %c0_i32_1 : i32, i32, i32
  }
  func.func @transform_11(%arg0: i32) -> (i32, i32, i32) {
    %c0_i32 = arith.constant 0 : i32
    %c0_i32_0 = arith.constant 0 : i32
    %c0_i32_1 = arith.constant 0 : i32
    %c0_i32_2 = arith.constant 0 : i32
    return %c0_i32, %c0_i32_0, %c0_i32_1 : i32, i32, i32
  }
  func.func @transform_12(%arg0: i32) -> (i32, i32, i32) {
    %c0_i32 = arith.constant 0 : i32
    %c0_i32_0 = arith.constant 0 : i32
    %c0_i32_1 = arith.constant 0 : i32
    %c0_i32_2 = arith.constant 0 : i32
    return %c0_i32, %c0_i32_0, %c0_i32_1 : i32, i32, i32
  }
  func.func @transform_13(%arg0: i32) -> (i32, i32, i32) {
    %c0_i32 = arith.constant 0 : i32
    %c0_i32_0 = arith.constant 0 : i32
    %c0_i32_1 = arith.constant 0 : i32
    %c0_i32_2 = arith.constant 0 : i32
    return %c0_i32, %c0_i32_0, %c0_i32_1 : i32, i32, i32
  }
  func.func @transform_14(%arg0: i32) -> (i32, i32, i32) {
    %c0_i32 = arith.constant 0 : i32
    %c0_i32_0 = arith.constant 0 : i32
    %c0_i32_1 = arith.constant 0 : i32
    %c0_i32_2 = arith.constant 0 : i32
    return %c0_i32, %c0_i32_0, %c0_i32_1 : i32, i32, i32
  }
  func.func @transform_15(%arg0: i32) -> (i32, i32, i32) {
    %c0_i32 = arith.constant 0 : i32
    %c0_i32_0 = arith.constant 0 : i32
    %c0_i32_1 = arith.constant 0 : i32
    %c0_i32_2 = arith.constant 0 : i32
    return %c0_i32, %c0_i32_0, %c0_i32_1 : i32, i32, i32
  }
  func.func @transform_16(%arg0: i32) -> (i32, i32) {
    %c0_i32 = arith.constant 0 : i32
    %c0_i32_0 = arith.constant 0 : i32
    %c0_i32_1 = arith.constant 0 : i32
    return %c0_i32, %c0_i32_0 : i32, i32
  }
  func.func @transform_17(%arg0: i32) -> (i32, i32, i32) {
    %c0_i32 = arith.constant 0 : i32
    %c0_i32_0 = arith.constant 0 : i32
    %c0_i32_1 = arith.constant 0 : i32
    return %arg0, %c0_i32, %c0_i32_0 : i32, i32, i32
  }
}

</mosaic_0001>

<llo_original>
// kernel: model_forward.1
$region0: #{model_forward.1}
  #allocation0 [shape = 'u32[]', space=smem, size = 0x4, offset = 0x4, fixed_abs, tag = 'smem constant byte address 0x4 - core index']
  #allocation1 [shape = 'u32[144,128]{1,0:T(1,128)}', space=vmem, size = 0x12000, scoped, tag = 'internal scratch']
  %s0 = inlined_call_operand.vmem [shape: f32[8,8,4], index: 0, kind: input, shape index: {}]
  %s1 = inlined_call_operand.vmem [shape: f32[8,8,4], index: 1, kind: input, shape index: {}]
  %s2 = inlined_call_operand.vmem [shape: f32[3,4,16], index: 2, kind: input, shape index: {}]
  %s3 = inlined_call_operand.vmem [shape: f32[4,16], index: 3, kind: input, shape index: {}]
  %s4 = inlined_call_operand.vmem [shape: f32[32,16], index: 4, kind: input, shape index: {}]
  %s5 = inlined_call_operand.vmem [shape: f32[32,32], index: 5, kind: input, shape index: {}]
  %s6 = inlined_call_operand.vmem [shape: f32[3,32,32], index: 6, kind: input, shape index: {}]
  %s7 = inlined_call_operand.vmem [shape: f32[2,1,16], index: 7, kind: input, shape index: {}]
  %s8 = inlined_call_operand.vmem [shape: f32[2,16,128], index: 8, kind: input, shape index: {}]
  %s9 = inlined_call_operand.vmem [shape: f32[2,4,64], index: 9, kind: input, shape index: {}]
  %s10 = inlined_call_operand.vmem [shape: f32[2,1,64], index: 10, kind: input, shape index: {}]
  %s11 = inlined_call_operand.vmem [shape: f32[2,1,32], index: 11, kind: input, shape index: {}]
  %s12 = inlined_call_operand.vmem [shape: f32[2,1,32], index: 12, kind: input, shape index: {}]
  %s13 = inlined_call_operand.vmem [shape: f32[2,1,32], index: 13, kind: input, shape index: {}]
  %s14 = inlined_call_operand.vmem [shape: f32[2,1,32], index: 14, kind: input, shape index: {}]
  %s15 = inlined_call_operand.vmem [shape: f32[2,32,16], index: 15, kind: input, shape index: {}]
  %s16 = inlined_call_operand.vmem [shape: f32[16,4], index: 16, kind: input, shape index: {}]
  %s17 = inlined_call_operand.vmem [shape: f32[8,8,4], index: 17, kind: output, shape index: {}]
  %s18 = sld [smem:[#allocation0]]
  $region101: #{model_forward.1} parent=0
    _
  %s20 = ssub.s32 1, %s18
  %s21 = scalar_select 0, %s20, %s18
  loop: start=0, step=1, limit=4
  $region2: #{model_forward.1} parent=0 // loop_pre_header
    _
  $region3: #{model_forward.1} parent=0 // loop_header
    %s23 = sphi 0, %s27
    %p24 = scmp.ge.s32.totalorder %s23, 4
    %s33 = sphi 0, %s35
    %s36 = sphi 0, %s33
    %s37 = sphi 0, %s36
    %s53 = sphi 0, %s37
    %s59 = sphi 0, %s61
    %s62 = sphi 0, %s59
    %s63 = sphi 0, %s62
    %s79 = sphi 0, %s63
    %s83 = sphi 0, %s83
    %s85 = sphi 0, %s83
    %s86 = sphi 0, %s85
    %s100 = sphi 0, %s86
    %s104 = sphi 0, %s104
    %s106 = sphi 0, %s104
    %s107 = sphi 0, %s106
    %s121 = sphi 0, %s107
    %s125 = sphi 0, %s125
    %s127 = sphi 0, %s125
    %s128 = sphi 0, %s127
    %s142 = sphi 0, %s128
    %s146 = sphi 0, %s146
    %s148 = sphi 0, %s146
    %s149 = sphi 0, %s148
    %s163 = sphi 0, %s149
    %s167 = sphi 0, %s167
    %s169 = sphi 0, %s167
    %s170 = sphi 0, %s169
    %s184 = sphi 0, %s170
    %s188 = sphi 0, %s188
    %s190 = sphi 0, %s188
    %s191 = sphi 0, %s190
    %s205 = sphi 0, %s191
    %s209 = sphi 0, %s209
    %s211 = sphi 0, %s209
    %s212 = sphi 0, %s211
    %s226 = sphi 0, %s212
    %s230 = sphi 0, %s230
    %s232 = sphi 0, %s230
    %s233 = sphi 0, %s232
    %s247 = sphi 0, %s233
    %s251 = sphi 0, %s251
    %s253 = sphi 0, %s251
    %s254 = sphi 0, %s253
    %s268 = sphi 0, %s254
    %s272 = sphi 0, %s272
    %s274 = sphi 0, %s272
    %s275 = sphi 0, %s274
    %s289 = sphi 0, %s275
    %s293 = sphi 0, %s293
    %s295 = sphi 0, %s293
    %s296 = sphi 0, %s295
    %s310 = sphi 0, %s296
    %s314 = sphi 0, %s314
    %s316 = sphi 0, %s314
    %s317 = sphi 0, %s316
    %s331 = sphi 0, %s317
    %s335 = sphi 0, %s335
    %s337 = sphi 0, %s335
    %s338 = sphi 0, %s337
    %s352 = sphi 0, %s338
    %s356 = sphi 0, %s356
    %s358 = sphi 0, %s356
    %s359 = sphi 0, %s358
    %s373 = sphi 0, %s359
    %s377 = sphi 0, %s377
    %s379 = sphi 0, %s377
    %s380 = sphi 0, %s379
    %s394 = sphi 0, %s380
    %s400 = sphi 0, %s402
    %s403 = sphi 0, %s400
    %s404 = sphi 0, %s403
    %s420 = sphi 0, %s404
  $region4: #{model_forward.1} parent=0 // loop_header_branch
    %26 = sbr.rel (%p24) target = $region8
  $region5: #{model_forward.1} parent=0 // loop_body
    %s28 = ssub.s32 %s23, 1
    %s29 = ssub.s32 %s23, 2
    %s30 = sadd.s32 %s23, 1
    %s31 = ssub.s32 %s23, %s30
    %p32 = scmp.eq.s32.totalorder %s31, 0
    %s34 = sadd.s32 %s33, 1
    %s35 = scalar_select %p32, %s33, %s34
    %p38 = pneg %p32
    %p39 = scmp.eq.s32.totalorder %s23, 1
    %p40 = por %p38, %p39
    %p41 = scmp.ne.s32.totalorder %s33, %s36
    %p42 = scmp.eq.s32.totalorder %s23, 0
    %p43 = por %p41, %p42
    %p44 = scmp.ne.s32.totalorder %s33, %s36
    %p45 = scmp.eq.s32.totalorder %s28, 1
    %p46 = por %p44, %p45
    %p47 = scmp.ne.s32.totalorder %s36, %s37
    %p48 = scmp.eq.s32.totalorder %s28, 0
    %p49 = por %p47, %p48
    %p50 = scmp.ne.s32.totalorder %s36, %s37
    %p51 = scmp.eq.s32.totalorder %s29, 1
    %p52 = por %p50, %p51
    %p54 = scmp.ne.s32.totalorder %s37, %s53
    %p55 = scmp.eq.s32.totalorder %s29, 0
    %p56 = por %p54, %p55
    %s57 = ssub.s32 %s23, %s30
    %p58 = scmp.eq.s32.totalorder %s57, 0
    %s60 = sadd.s32 %s59, 1
    %s61 = scalar_select %p58, %s59, %s60
    %p64 = pneg %p58
    %p65 = scmp.eq.s32.totalorder %s23, 1
    %p66 = por %p64, %p65
    %p67 = scmp.ne.s32.totalorder %s59, %s62
    %p68 = scmp.eq.s32.totalorder %s23, 0
    %p69 = por %p67, %p68
    %p70 = scmp.ne.s32.totalorder %s59, %s62
    %p71 = scmp.eq.s32.totalorder %s28, 1
    %p72 = por %p70, %p71
    %p73 = scmp.ne.s32.totalorder %s62, %s63
    %p74 = scmp.eq.s32.totalorder %s28, 0
    %p75 = por %p73, %p74
    %p76 = scmp.ne.s32.totalorder %s62, %s63
    %p77 = scmp.eq.s32.totalorder %s29, 1
    %p78 = por %p76, %p77
    %p80 = scmp.ne.s32.totalorder %s63, %s79
    %p81 = scmp.eq.s32.totalorder %s29, 0
    %p82 = por %p80, %p81
    %s84 = sadd.s32 %s83, 1
    %p87 = scmp.eq.s32.totalorder %s23, 1
    %p88 = scmp.ne.s32.totalorder %s83, %s85
    %p89 = scmp.eq.s32.totalorder %s23, 0
    %p90 = por %p88, %p89
    %p91 = scmp.ne.s32.totalorder %s83, %s85
    %p92 = scmp.eq.s32.totalorder %s28, 1
    %p93 = por %p91, %p92
    %p94 = scmp.ne.s32.totalorder %s85, %s86
    %p95 = scmp.eq.s32.totalorder %s28, 0
    %p96 = por %p94, %p95
    %p97 = scmp.ne.s32.totalorder %s85, %s86
    %p98 = scmp.eq.s32.totalorder %s29, 1
    %p99 = por %p97, %p98
    %p101 = scmp.ne.s32.totalorder %s86, %s100
    %p102 = scmp.eq.s32.totalorder %s29, 0
    %p103 = por %p101, %p102
    %s105 = sadd.s32 %s104, 1
    %p108 = scmp.eq.s32.totalorder %s23, 1
    %p109 = scmp.ne.s32.totalorder %s104, %s106
    %p110 = scmp.eq.s32.totalorder %s23, 0
    %p111 = por %p109, %p110
    %p112 = scmp.ne.s32.totalorder %s104, %s106
    %p113 = scmp.eq.s32.totalorder %s28, 1
    %p114 = por %p112, %p113
    %p115 = scmp.ne.s32.totalorder %s106, %s107
    %p116 = scmp.eq.s32.totalorder %s28, 0
    %p117 = por %p115, %p116
    %p118 = scmp.ne.s32.totalorder %s106, %s107
    %p119 = scmp.eq.s32.totalorder %s29, 1
    %p120 = por %p118, %p119
    %p122 = scmp.ne.s32.totalorder %s107, %s121
    %p123 = scmp.eq.s32.totalorder %s29, 0
    %p124 = por %p122, %p123
    %s126 = sadd.s32 %s125, 1
    %p129 = scmp.eq.s32.totalorder %s23, 1
    %p130 = scmp.ne.s32.totalorder %s125, %s127
    %p131 = scmp.eq.s32.totalorder %s23, 0
    %p132 = por %p130, %p131
    %p133 = scmp.ne.s32.totalorder %s125, %s127
    %p134 = scmp.eq.s32.totalorder %s28, 1
    %p135 = por %p133, %p134
    %p136 = scmp.ne.s32.totalorder %s127, %s128
    %p137 = scmp.eq.s32.totalorder %s28, 0
    %p138 = por %p136, %p137
    %p139 = scmp.ne.s32.totalorder %s127, %s128
    %p140 = scmp.eq.s32.totalorder %s29, 1
    %p141 = por %p139, %p140
    %p143 = scmp.ne.s32.totalorder %s128, %s142
    %p144 = scmp.eq.s32.totalorder %s29, 0
    %p145 = por %p143, %p144
    %s147 = sadd.s32 %s146, 1
    %p150 = scmp.eq.s32.totalorder %s23, 1
    %p151 = scmp.ne.s32.totalorder %s146, %s148
    %p152 = scmp.eq.s32.totalorder %s23, 0
    %p153 = por %p151, %p152
    %p154 = scmp.ne.s32.totalorder %s146, %s148
    %p155 = scmp.eq.s32.totalorder %s28, 1
    %p156 = por %p154, %p155
    %p157 = scmp.ne.s32.totalorder %s148, %s149
    %p158 = scmp.eq.s32.totalorder %s28, 0
    %p159 = por %p157, %p158
    %p160 = scmp.ne.s32.totalorder %s148, %s149
    %p161 = scmp.eq.s32.totalorder %s29, 1
    %p162 = por %p160, %p161
    %p164 = scmp.ne.s32.totalorder %s149, %s163
    %p165 = scmp.eq.s32.totalorder %s29, 0
    %p166 = por %p164, %p165
    %s168 = sadd.s32 %s167, 1
    %p171 = scmp.eq.s32.totalorder %s23, 1
    %p172 = scmp.ne.s32.totalorder %s167, %s169
    %p173 = scmp.eq.s32.totalorder %s23, 0
    %p174 = por %p172, %p173
    %p175 = scmp.ne.s32.totalorder %s167, %s169
    %p176 = scmp.eq.s32.totalorder %s28, 1
    %p177 = por %p175, %p176
    %p178 = scmp.ne.s32.totalorder %s169, %s170
    %p179 = scmp.eq.s32.totalorder %s28, 0
    %p180 = por %p178, %p179
    %p181 = scmp.ne.s32.totalorder %s169, %s170
    %p182 = scmp.eq.s32.totalorder %s29, 1
    %p183 = por %p181, %p182
    %p185 = scmp.ne.s32.totalorder %s170, %s184
    %p186 = scmp.eq.s32.totalorder %s29, 0
    %p187 = por %p185, %p186
    %s189 = sadd.s32 %s188, 1
    %p192 = scmp.eq.s32.totalorder %s23, 1
    %p193 = scmp.ne.s32.totalorder %s188, %s190
    %p194 = scmp.eq.s32.totalorder %s23, 0
    %p195 = por %p193, %p194
    %p196 = scmp.ne.s32.totalorder %s188, %s190
    %p197 = scmp.eq.s32.totalorder %s28, 1
    %p198 = por %p196, %p197
    %p199 = scmp.ne.s32.totalorder %s190, %s191
    %p200 = scmp.eq.s32.totalorder %s28, 0
    %p201 = por %p199, %p200
    %p202 = scmp.ne.s32.totalorder %s190, %s191
    %p203 = scmp.eq.s32.totalorder %s29, 1
    %p204 = por %p202, %p203
    %p206 = scmp.ne.s32.totalorder %s191, %s205
    %p207 = scmp.eq.s32.totalorder %s29, 0
    %p208 = por %p206, %p207
    %s210 = sadd.s32 %s209, 1
    %p213 = scmp.eq.s32.totalorder %s23, 1
    %p214 = scmp.ne.s32.totalorder %s209, %s211
    %p215 = scmp.eq.s32.totalorder %s23, 0
    %p216 = por %p214, %p215
    %p217 = scmp.ne.s32.totalorder %s209, %s211
    %p218 = scmp.eq.s32.totalorder %s28, 1
    %p219 = por %p217, %p218
    %p220 = scmp.ne.s32.totalorder %s211, %s212
    %p221 = scmp.eq.s32.totalorder %s28, 0
    %p222 = por %p220, %p221
    %p223 = scmp.ne.s32.totalorder %s211, %s212
    %p224 = scmp.eq.s32.totalorder %s29, 1
    %p225 = por %p223, %p224
    %p227 = scmp.ne.s32.totalorder %s212, %s226
    %p228 = scmp.eq.s32.totalorder %s29, 0
    %p229 = por %p227, %p228
    %s231 = sadd.s32 %s230, 1
    %p234 = scmp.eq.s32.totalorder %s23, 1
    %p235 = scmp.ne.s32.totalorder %s230, %s232
    %p236 = scmp.eq.s32.totalorder %s23, 0
    %p237 = por %p235, %p236
    %p238 = scmp.ne.s32.totalorder %s230, %s232
    %p239 = scmp.eq.s32.totalorder %s28, 1
    %p240 = por %p238, %p239
    %p241 = scmp.ne.s32.totalorder %s232, %s233
    %p242 = scmp.eq.s32.totalorder %s28, 0
    %p243 = por %p241, %p242
    %p244 = scmp.ne.s32.totalorder %s232, %s233
    %p245 = scmp.eq.s32.totalorder %s29, 1
    %p246 = por %p244, %p245
    %p248 = scmp.ne.s32.totalorder %s233, %s247
    %p249 = scmp.eq.s32.totalorder %s29, 0
    %p250 = por %p248, %p249
    %s252 = sadd.s32 %s251, 1
    %p255 = scmp.eq.s32.totalorder %s23, 1
    %p256 = scmp.ne.s32.totalorder %s251, %s253
    %p257 = scmp.eq.s32.totalorder %s23, 0
    %p258 = por %p256, %p257
    %p259 = scmp.ne.s32.totalorder %s251, %s253
    %p260 = scmp.eq.s32.totalorder %s28, 1
    %p261 = por %p259, %p260
    %p262 = scmp.ne.s32.totalorder %s253, %s254
    %p263 = scmp.eq.s32.totalorder %s28, 0
    %p264 = por %p262, %p263
    %p265 = scmp.ne.s32.totalorder %s253, %s254
    %p266 = scmp.eq.s32.totalorder %s29, 1
    %p267 = por %p265, %p266
    %p269 = scmp.ne.s32.totalorder %s254, %s268
    %p270 = scmp.eq.s32.totalorder %s29, 0
    %p271 = por %p269, %p270
    %s273 = sadd.s32 %s272, 1
    %p276 = scmp.eq.s32.totalorder %s23, 1
    %p277 = scmp.ne.s32.totalorder %s272, %s274
    %p278 = scmp.eq.s32.totalorder %s23, 0
    %p279 = por %p277, %p278
    %p280 = scmp.ne.s32.totalorder %s272, %s274
    %p281 = scmp.eq.s32.totalorder %s28, 1
    %p282 = por %p280, %p281
    %p283 = scmp.ne.s32.totalorder %s274, %s275
    %p284 = scmp.eq.s32.totalorder %s28, 0
    %p285 = por %p283, %p284
    %p286 = scmp.ne.s32.totalorder %s274, %s275
    %p287 = scmp.eq.s32.totalorder %s29, 1
    %p288 = por %p286, %p287
    %p290 = scmp.ne.s32.totalorder %s275, %s289
    %p291 = scmp.eq.s32.totalorder %s29, 0
    %p292 = por %p290, %p291
    %s294 = sadd.s32 %s293, 1
    %p297 = scmp.eq.s32.totalorder %s23, 1
    %p298 = scmp.ne.s32.totalorder %s293, %s295
    %p299 = scmp.eq.s32.totalorder %s23, 0
    %p300 = por %p298, %p299
    %p301 = scmp.ne.s32.totalorder %s293, %s295
    %p302 = scmp.eq.s32.totalorder %s28, 1
    %p303 = por %p301, %p302
    %p304 = scmp.ne.s32.totalorder %s295, %s296
    %p305 = scmp.eq.s32.totalorder %s28, 0
    %p306 = por %p304, %p305
    %p307 = scmp.ne.s32.totalorder %s295, %s296
    %p308 = scmp.eq.s32.totalorder %s29, 1
    %p309 = por %p307, %p308
    %p311 = scmp.ne.s32.totalorder %s296, %s310
    %p312 = scmp.eq.s32.totalorder %s29, 0
    %p313 = por %p311, %p312
    %s315 = sadd.s32 %s314, 1
    %p318 = scmp.eq.s32.totalorder %s23, 1
    %p319 = scmp.ne.s32.totalorder %s314, %s316
    %p320 = scmp.eq.s32.totalorder %s23, 0
    %p321 = por %p319, %p320
    %p322 = scmp.ne.s32.totalorder %s314, %s316
    %p323 = scmp.eq.s32.totalorder %s28, 1
    %p324 = por %p322, %p323
    %p325 = scmp.ne.s32.totalorder %s316, %s317
    %p326 = scmp.eq.s32.totalorder %s28, 0
    %p327 = por %p325, %p326
    %p328 = scmp.ne.s32.totalorder %s316, %s317
    %p329 = scmp.eq.s32.totalorder %s29, 1
    %p330 = por %p328, %p329
    %p332 = scmp.ne.s32.totalorder %s317, %s331
    %p333 = scmp.eq.s32.totalorder %s29, 0
    %p334 = por %p332, %p333
    %s336 = sadd.s32 %s335, 1
    %p339 = scmp.eq.s32.totalorder %s23, 1
    %p340 = scmp.ne.s32.totalorder %s335, %s337
    %p341 = scmp.eq.s32.totalorder %s23, 0
    %p342 = por %p340, %p341
    %p343 = scmp.ne.s32.totalorder %s335, %s337
    %p344 = scmp.eq.s32.totalorder %s28, 1
    %p345 = por %p343, %p344
    %p346 = scmp.ne.s32.totalorder %s337, %s338
    %p347 = scmp.eq.s32.totalorder %s28, 0
    %p348 = por %p346, %p347
    %p349 = scmp.ne.s32.totalorder %s337, %s338
    %p350 = scmp.eq.s32.totalorder %s29, 1
    %p351 = por %p349, %p350
    %p353 = scmp.ne.s32.totalorder %s338, %s352
    %p354 = scmp.eq.s32.totalorder %s29, 0
    %p355 = por %p353, %p354
    %s357 = sadd.s32 %s356, 1
    %p360 = scmp.eq.s32.totalorder %s23, 1
    %p361 = scmp.ne.s32.totalorder %s356, %s358
    %p362 = scmp.eq.s32.totalorder %s23, 0
    %p363 = por %p361, %p362
    %p364 = scmp.ne.s32.totalorder %s356, %s358
    %p365 = scmp.eq.s32.totalorder %s28, 1
    %p366 = por %p364, %p365
    %p367 = scmp.ne.s32.totalorder %s358, %s359
    %p368 = scmp.eq.s32.totalorder %s28, 0
    %p369 = por %p367, %p368
    %p370 = scmp.ne.s32.totalorder %s358, %s359
    %p371 = scmp.eq.s32.totalorder %s29, 1
    %p372 = por %p370, %p371
    %p374 = scmp.ne.s32.totalorder %s359, %s373
    %p375 = scmp.eq.s32.totalorder %s29, 0
    %p376 = por %p374, %p375
    %s378 = sadd.s32 %s377, 1
    %p381 = scmp.eq.s32.totalorder %s23, 1
    %p382 = scmp.ne.s32.totalorder %s377, %s379
    %p383 = scmp.eq.s32.totalorder %s23, 0
    %p384 = por %p382, %p383
    %p385 = scmp.ne.s32.totalorder %s377, %s379
    %p386 = scmp.eq.s32.totalorder %s28, 1
    %p387 = por %p385, %p386
    %p388 = scmp.ne.s32.totalorder %s379, %s380
    %p389 = scmp.eq.s32.totalorder %s28, 0
    %p390 = por %p388, %p389
    %p391 = scmp.ne.s32.totalorder %s379, %s380
    %p392 = scmp.eq.s32.totalorder %s29, 1
    %p393 = por %p391, %p392
    %p395 = scmp.ne.s32.totalorder %s380, %s394
    %p396 = scmp.eq.s32.totalorder %s29, 0
    %p397 = por %p395, %p396
    %s398 = ssub.s32 %s23, %s30
    %p399 = scmp.eq.s32.totalorder %s398, 0
    %s401 = sadd.s32 %s400, 1
    %s402 = scalar_select %p399, %s400, %s401
    %p405 = pneg %p399
    %p406 = scmp.eq.s32.totalorder %s23, 1
    %p407 = por %p405, %p406
    %p408 = scmp.ne.s32.totalorder %s400, %s403
    %p409 = scmp.eq.s32.totalorder %s23, 0
    %p410 = por %p408, %p409
    %p411 = scmp.ne.s32.totalorder %s400, %s403
    %p412 = scmp.eq.s32.totalorder %s28, 1
    %p413 = por %p411, %p412
    %p414 = scmp.ne.s32.totalorder %s403, %s404
    %p415 = scmp.eq.s32.totalorder %s28, 0
    %p416 = por %p414, %p415
    %p417 = scmp.ne.s32.totalorder %s403, %s404
    %p418 = scmp.eq.s32.totalorder %s29, 1
    %p419 = por %p417, %p418
    %p421 = scmp.ne.s32.totalorder %s404, %s420
    %p422 = scmp.eq.s32.totalorder %s29, 0
    %p423 = por %p421, %p422
    %p424 = scmp.le.s32.totalorder 1, %s23
    %p425 = scmp.lt.s32.totalorder %s23, 3
    %p426 = pnand %p424, %p425
    %p427 = pneg %p426
    // Predicated region
    $region9: #{model_forward.1} parent=5 // pred_check
      _
    $region10: #{model_forward.1} parent=5 // pred_check_branch
      %429 = sbr.rel (%p426) target = $region12
    $region11: #{model_forward.1} parent=5 // pred_region
      %s430 = ssub.s32 %s23, 1
      // Predicated region
      $region13: #{model_forward.1} parent=11 // pred_check
        %p431 = pneg %p96
      $region14: #{model_forward.1} parent=11 // pred_check_branch
        %433 = sbr.rel (%p431) target = $region16
      $region15: #{model_forward.1} parent=11 // pred_region
        _
      $region16: #{model_forward.1} parent=11 // pred_fallthru
        _
      // Predicated region
      $region17: #{model_forward.1} parent=11 // pred_check
        %p434 = pneg %p117
      $region18: #{model_forward.1} parent=11 // pred_check_branch
        %436 = sbr.rel (%p434) target = $region20
      $region19: #{model_forward.1} parent=11 // pred_region
        _
      $region20: #{model_forward.1} parent=11 // pred_fallthru
        _
      // Predicated region
      $region21: #{model_forward.1} parent=11 // pred_check
        %p437 = pneg %p138
      $region22: #{model_forward.1} parent=11 // pred_check_branch
        %439 = sbr.rel (%p437) target = $region24
      $region23: #{model_forward.1} parent=11 // pred_region
        _
      $region24: #{model_forward.1} parent=11 // pred_fallthru
        _
      // Predicated region
      $region25: #{model_forward.1} parent=11 // pred_check
        %p440 = pneg %p159
      $region26: #{model_forward.1} parent=11 // pred_check_branch
        %442 = sbr.rel (%p440) target = $region28
      $region27: #{model_forward.1} parent=11 // pred_region
        _
      $region28: #{model_forward.1} parent=11 // pred_fallthru
        _
      // Predicated region
      $region29: #{model_forward.1} parent=11 // pred_check
        %p443 = pneg %p180
      $region30: #{model_forward.1} parent=11 // pred_check_branch
        %445 = sbr.rel (%p443) target = $region32
      $region31: #{model_forward.1} parent=11 // pred_region
        _
      $region32: #{model_forward.1} parent=11 // pred_fallthru
        _
      // Predicated region
      $region33: #{model_forward.1} parent=11 // pred_check
        %p446 = pneg %p201
      $region34: #{model_forward.1} parent=11 // pred_check_branch
        %448 = sbr.rel (%p446) target = $region36
      $region35: #{model_forward.1} parent=11 // pred_region
        _
      $region36: #{model_forward.1} parent=11 // pred_fallthru
        _
      // Predicated region
      $region37: #{model_forward.1} parent=11 // pred_check
        %p449 = pneg %p222
      $region38: #{model_forward.1} parent=11 // pred_check_branch
        %451 = sbr.rel (%p449) target = $region40
      $region39: #{model_forward.1} parent=11 // pred_region
        _
      $region40: #{model_forward.1} parent=11 // pred_fallthru
        _
      // Predicated region
      $region41: #{model_forward.1} parent=11 // pred_check
        %p452 = pneg %p243
      $region42: #{model_forward.1} parent=11 // pred_check_branch
        %454 = sbr.rel (%p452) target = $region44
      $region43: #{model_forward.1} parent=11 // pred_region
        _
      $region44: #{model_forward.1} parent=11 // pred_fallthru
        _
      // Predicated region
      $region45: #{model_forward.1} parent=11 // pred_check
        %p455 = pneg %p264
      $region46: #{model_forward.1} parent=11 // pred_check_branch
        %457 = sbr.rel (%p455) target = $region48
      $region47: #{model_forward.1} parent=11 // pred_region
        _
      $region48: #{model_forward.1} parent=11 // pred_fallthru
        _
      // Predicated region
      $region49: #{model_forward.1} parent=11 // pred_check
        %p458 = pneg %p285
      $region50: #{model_forward.1} parent=11 // pred_check_branch
        %460 = sbr.rel (%p458) target = $region52
      $region51: #{model_forward.1} parent=11 // pred_region
        _
      $region52: #{model_forward.1} parent=11 // pred_fallthru
        _
      // Predicated region
      $region53: #{model_forward.1} parent=11 // pred_check
        %p461 = pneg %p306
      $region54: #{model_forward.1} parent=11 // pred_check_branch
        %463 = sbr.rel (%p461) target = $region56
      $region55: #{model_forward.1} parent=11 // pred_region
        _
      $region56: #{model_forward.1} parent=11 // pred_fallthru
        _
      // Predicated region
      $region57: #{model_forward.1} parent=11 // pred_check
        %p464 = pneg %p327
      $region58: #{model_forward.1} parent=11 // pred_check_branch
        %466 = sbr.rel (%p464) target = $region60
      $region59: #{model_forward.1} parent=11 // pred_region
        _
      $region60: #{model_forward.1} parent=11 // pred_fallthru
        _
      // Predicated region
      $region61: #{model_forward.1} parent=11 // pred_check
        %p467 = pneg %p348
      $region62: #{model_forward.1} parent=11 // pred_check_branch
        %469 = sbr.rel (%p467) target = $region64
      $region63: #{model_forward.1} parent=11 // pred_region
        _
      $region64: #{model_forward.1} parent=11 // pred_fallthru
        _
      // Predicated region
      $region65: #{model_forward.1} parent=11 // pred_check
        %p470 = pneg %p369
      $region66: #{model_forward.1} parent=11 // pred_check_branch
        %472 = sbr.rel (%p470) target = $region68
      $region67: #{model_forward.1} parent=11 // pred_region
        _
      $region68: #{model_forward.1} parent=11 // pred_fallthru
        _
      // Predicated region
      $region69: #{model_forward.1} parent=11 // pred_check
        %p473 = pneg %p390
      $region70: #{model_forward.1} parent=11 // pred_check_branch
        %475 = sbr.rel (%p473) target = $region72
      $region71: #{model_forward.1} parent=11 // pred_region
        _
      $region72: #{model_forward.1} parent=11 // pred_fallthru
        _
    $region12: #{model_forward.1} parent=5 // pred_fallthru
      _
    %p476 = scmp.lt.s32.totalorder %s23, 2
    // Predicated region
    $region73: #{model_forward.1} parent=5 // pred_check
      %p477 = pneg %p476
    $region74: #{model_forward.1} parent=5 // pred_check_branch
      %479 = sbr.rel (%p477) target = $region76
    $region75: #{model_forward.1} parent=5 // pred_region
      // Predicated region
      $region77: #{model_forward.1} parent=75 // pred_check
        %p480 = pneg %p43
      $region78: #{model_forward.1} parent=75 // pred_check_branch
        %482 = sbr.rel (%p480) target = $region80
      $region79: #{model_forward.1} parent=75 // pred_region
        %s483 = smul.u32 4, %s23
        %p484 = scmp.lt.s32.totalorder %s483, 7
        %s485 = scalar_select %p484, %s483, 7
        %s486 = smul.addr %s485, 8
        %s487 = scalar_lea.vmem %s0, %s486
        %s488 = smul.u32 4, %s23
      $region80: #{model_forward.1} parent=75 // pred_fallthru
        _
      // Predicated region
      $region81: #{model_forward.1} parent=75 // pred_check
        %p489 = pneg %p69
      $region82: #{model_forward.1} parent=75 // pred_check_branch
        %491 = sbr.rel (%p489) target = $region84
      $region83: #{model_forward.1} parent=75 // pred_region
        %s492 = smul.u32 4, %s23
        %p493 = scmp.lt.s32.totalorder %s492, 7
        %s494 = scalar_select %p493, %s492, 7
        %s495 = smul.addr %s494, 8
        %s496 = scalar_lea.vmem %s1, %s495
        %s497 = smul.u32 4, %s23
      $region84: #{model_forward.1} parent=75 // pred_fallthru
        _
    $region76: #{model_forward.1} parent=5 // pred_fallthru
      _
    %p498 = scmp.le.s32.totalorder 1, %s23
    %p499 = scmp.lt.s32.totalorder %s23, 3
    %p500 = pnand %p498, %p499
    %p501 = pneg %p500
    // Predicated region
    $region85: #{model_forward.1} parent=5 // pred_check
      _
    $region86: #{model_forward.1} parent=5 // pred_check_branch
      %503 = sbr.rel (%p500) target = $region88
    $region87: #{model_forward.1} parent=5 // pred_region
      %s504 = ssub.s32 %s23, 1
      %s505 = smul.u32 4, %s28
      %p506 = scmp.lt.s32.totalorder %s505, 7
      %s507 = scalar_select %p506, %s505, 7
      %s508 = smul.addr %s507, 8
      %s509 = scalar_lea.vmem %s0, %s508
      %p510 = pneg %p49
      %p511 = pneg %p46
      %s512 = smul.u32 4, %s28
      %p513 = scmp.lt.s32.totalorder %s512, 7
      %s514 = scalar_select %p513, %s512, 7
      %s515 = smul.addr %s514, 8
      %s516 = scalar_lea.vmem %s1, %s515
      %p517 = pneg %p75
      %p518 = pneg %p72
      %p519 = pneg %p96
      %p520 = pneg %p93
      %p521 = pneg %p117
      %p522 = pneg %p114
      %p523 = pneg %p138
      %p524 = pneg %p135
      %p525 = pneg %p159
      %p526 = pneg %p156
      %p527 = pneg %p180
      %p528 = pneg %p177
      %p529 = pneg %p201
      %p530 = pneg %p198
      %p531 = pneg %p222
      %p532 = pneg %p219
      %p533 = pneg %p243
      %p534 = pneg %p240
      %p535 = pneg %p264
      %p536 = pneg %p261
      %p537 = pneg %p285
      %p538 = pneg %p282
      %p539 = pneg %p306
      %p540 = pneg %p303
      %p541 = pneg %p327
      %p542 = pneg %p324
      %p543 = pneg %p348
      %p544 = pneg %p345
      %p545 = pneg %p369
      %p546 = pneg %p366
      %p547 = pneg %p390
      %p548 = pneg %p387
      %p549 = pneg %p416
      %p550 = pneg %p413
      %s551 = smul.u32 4, %s28
      %p552 = scmp.lt.s32.totalorder %s551, 7
      %s553 = scalar_select %p552, %s551, 7
      %s554 = smul.addr %s553, 8
      %s555 = scalar_lea.vmem %s17, %s554
      %s556 = smul.u32 4, %s28
      %p557 = scmp.lt.s32.totalorder %s556, 7
      %s558 = scalar_select %p557, %s556, 7
      %s559 = smul.addr %s558, 8
      %s560 = scalar_lea.vmem %s0, %s559
      %s561 = smul.u32 4, %s28
      %s562 = smul.u32 4, %s28
      %p563 = scmp.lt.s32.totalorder %s562, 7
      %s564 = scalar_select %p563, %s562, 7
      %s565 = smul.addr %s564, 8
      %s566 = scalar_lea.vmem %s1, %s565
      %s567 = smul.u32 4, %s28
      %s568 = smul.u32 4, %s28
      %p569 = scmp.lt.s32.totalorder %s568, 7
      %s570 = scalar_select %p569, %s568, 7
      %s571 = smul.addr %s570, 8
      %s572 = scalar_lea.vmem %s17, %s571
      %s573 = smul.u32 4, %s28
      %v574 = vld [vmem:[%s560] sm:$0xff]
      %v575 = vld [vmem:[%s560 + $0x8] sm:$0xff]
      %v576 = vld [vmem:[%s560 + $0x10] sm:$0xff]
      %v577 = vld [vmem:[%s560 + $0x18] sm:$0xff]
      %vm578 = vcmask 31744
      %v579 = vsel %vm578, %v574, 0.0
      %v580 = vrot.slane %v579, 4
      %v581 = vadd.f32 %v579, %v580
      %v582 = vrot.slane %v581, 2
      %v583 = vadd.f32 %v581, %v582
      %v584 = vrot.slane %v583, 1
      %v585 = vadd.f32 %v583, %v584
      %v586 = vsel %vm578, %v575, 0.0
      %v587 = vrot.slane %v586, 4
      %v588 = vadd.f32 %v586, %v587
      %v589 = vrot.slane %v588, 2
      %v590 = vadd.f32 %v588, %v589
      %v591 = vrot.slane %v590, 1
      %v592 = vadd.f32 %v590, %v591
      %v593 = vsel %vm578, %v576, 0.0
      %v594 = vrot.slane %v593, 4
      %v595 = vadd.f32 %v593, %v594
      %v596 = vrot.slane %v595, 2
      %v597 = vadd.f32 %v595, %v596
      %v598 = vrot.slane %v597, 1
      %v599 = vadd.f32 %v597, %v598
      %v600 = vsel %vm578, %v577, 0.0
      %v601 = vrot.slane %v600, 4
      %v602 = vadd.f32 %v600, %v601
      %v603 = vrot.slane %v602, 2
      %v604 = vadd.f32 %v602, %v603
      %v605 = vrot.slane %v604, 1
      %v606 = vadd.f32 %v604, %v605
      %v607 = vrcp.pop 8.0
      %v608 = vmul.f32 %v585, %v607
      %v609 = vmul.f32 %v592, %v607
      %v610 = vmul.f32 %v599, %v607
      %v611 = vmul.f32 %v606, %v607
      %v612 = vsub.f32 %v574, %v608
      %v613 = vsub.f32 %v575, %v609
      %v614 = vsub.f32 %v576, %v610
      %v615 = vsub.f32 %v577, %v611
      %v616 = vmul.f32 %v612, %v612
      %v617 = vmul.f32 %v613, %v613
      %v618 = vmul.f32 %v614, %v614
      %v619 = vmul.f32 %v615, %v615
      %v620 = vsel %vm578, %v616, 0.0
      %v621 = vrot.slane %v620, 4
      %v622 = vadd.f32 %v620, %v621
      %v623 = vrot.slane %v622, 2
      %v624 = vadd.f32 %v622, %v623
      %v625 = vrot.slane %v624, 1
      %v626 = vadd.f32 %v624, %v625
      %v627 = vsel %vm578, %v617, 0.0
      %v628 = vrot.slane %v627, 4
      %v629 = vadd.f32 %v627, %v628
      %v630 = vrot.slane %v629, 2
      %v631 = vadd.f32 %v629, %v630
      %v632 = vrot.slane %v631, 1
      %v633 = vadd.f32 %v631, %v632
      %v634 = vsel %vm578, %v618, 0.0
      %v635 = vrot.slane %v634, 4
      %v636 = vadd.f32 %v634, %v635
      %v637 = vrot.slane %v636, 2
      %v638 = vadd.f32 %v636, %v637
      %v639 = vrot.slane %v638, 1
      %v640 = vadd.f32 %v638, %v639
      %v641 = vsel %vm578, %v619, 0.0
      %v642 = vrot.slane %v641, 4
      %v643 = vadd.f32 %v641, %v642
      %v644 = vrot.slane %v643, 2
      %v645 = vadd.f32 %v643, %v644
      %v646 = vrot.slane %v645, 1
      %v647 = vadd.f32 %v645, %v646
      %v648 = vmul.f32 %v626, %v607
      %v649 = vmul.f32 %v633, %v607
      %v650 = vmul.f32 %v640, %v607
      %v651 = vmul.f32 %v647, %v607
      %v652 = vadd.f32 %v648, 1e-05
      %v653 = vadd.f32 %v649, 1e-05
      %v654 = vadd.f32 %v650, 1e-05
      %v655 = vadd.f32 %v651, 1e-05
      %v656 = vrsqrt.pop %v652
      %v657 = vmul.f32 %v652, %v656
      %vm658 = vcmp.eq.f32.partialorder %v652, inf
      %v659 = vsel %vm658, %v652, %v657
      %vm660 = vcmp.eq.f32.partialorder %v652, 0.0
      %v661 = vand.u32 %v652, 2147483648
      %v662 = vsel %vm660, %v661, %v659
      %v663 = vrsqrt.pop %v653
      %v664 = vmul.f32 %v653, %v663
      %vm665 = vcmp.eq.f32.partialorder %v653, inf
      %v666 = vsel %vm665, %v653, %v664
      %vm667 = vcmp.eq.f32.partialorder %v653, 0.0
      %v668 = vand.u32 %v653, 2147483648
      %v669 = vsel %vm667, %v668, %v666
      %v670 = vrsqrt.pop %v654
      %v671 = vmul.f32 %v654, %v670
      %vm672 = vcmp.eq.f32.partialorder %v654, inf
      %v673 = vsel %vm672, %v654, %v671
      %vm674 = vcmp.eq.f32.partialorder %v654, 0.0
      %v675 = vand.u32 %v654, 2147483648
      %v676 = vsel %vm674, %v675, %v673
      %v677 = vrsqrt.pop %v655
      %v678 = vmul.f32 %v655, %v677
      %vm679 = vcmp.eq.f32.partialorder %v655, inf
      %v680 = vsel %vm679, %v655, %v678
      %vm681 = vcmp.eq.f32.partialorder %v655, 0.0
      %v682 = vand.u32 %v655, 2147483648
      %v683 = vsel %vm681, %v682, %v680
      %v684 = vrcp.pop %v662
      %v685 = vmul.f32 %v612, %v684
      %v686 = vrcp.pop %v669
      %v687 = vmul.f32 %v613, %v686
      %v688 = vrcp.pop %v676
      %v689 = vmul.f32 %v614, %v688
      %v690 = vrcp.pop %v683
      %v691 = vmul.f32 %v615, %v690
      %v696 = vrot.slane %v685, 7
      %v697 = vrot.slane %v687, 7
      %v698 = vrot.slane %v689, 7
      %v699 = vrot.slane %v691, 7
      %vm704 = vcmask 1040384
      %v705 = vsel %vm704, %v696, %v696
      %v706 = vsel %vm704, %v697, %v697
      %v707 = vsel %vm704, %v698, %v698
      %v708 = vsel %vm704, %v699, %v699
      %v709 = vrot.slane %v685, 1
      %v710 = vrot.slane %v687, 1
      %v711 = vrot.slane %v689, 1
      %v712 = vrot.slane %v691, 1
      %vm717 = vcmask 1046528
      %v718 = vsel %vm717, %v709, %v709
      %v719 = vsel %vm717, %v710, %v710
      %v720 = vsel %vm717, %v711, %v711
      %v721 = vsel %vm717, %v712, %v712
      %v722 = vld [vmem:[%s566] sm:$0xff]
      %v723 = vld [vmem:[%s566 + $0x8] sm:$0xff]
      %v724 = vld [vmem:[%s566 + $0x10] sm:$0xff]
      %v725 = vld [vmem:[%s566 + $0x18] sm:$0xff]
      %v726 = vld [vmem:[%s2] sm:$0xf]
      %s727 = scalar_lea.vmem %s2, 4
      %v728 = vld [vmem:[%s727] sm:$0xf]
      %v729 = vsel %vm578, %v685, 0
      %v731 = vsel %vm578, %v687, 0
      %v733 = vsel %vm578, %v689, 0
      %v735 = vsel %vm578, %v691, 0
      %vm737 = vcmask 1043456
      %v739 = vsel %vm737, %v728, 0
      %741 = vmatprep.subr.mxu0 0.0
      %742 = vmatpush1.msra.mxu0 0.0
      %743 = vmatprep.subr.mxu0 0.0
      %744 = vmatpush1.msra.mxu0 0.0
      %745 = vmatprep.subr.mxu0 0.0
      %746 = vmatpush1.msra.mxu0 0.0
      %747 = vmatprep.subr.mxu0 0.0
      %748 = vmatpush1.msra.mxu0 0.0
      %749 = vmatprep.subr.mxu0 0.0
      %750 = vmatpush1.msra.mxu0 0.0
      %751 = vmatprep.subr.mxu0 0.0
      %752 = vmatpush1.msra.mxu0 0.0
      %753 = vmatprep.subr.mxu0 0.0
      %754 = vmatpush1.msra.mxu0 0.0
      %755 = vmatprep.subr.mxu0 0.0
      %756 = vmatpush1.msra.mxu0 0.0
      %757 = vmatprep.subr.mxu0 0.0
      %758 = vmatpush1.msra.mxu0 0.0
      %759 = vmatprep.subr.mxu0 0.0
      %760 = vmatpush1.msra.mxu0 0.0
      %761 = vmatprep.subr.mxu0 0.0
      %762 = vmatpush1.msra.mxu0 0.0
      %763 = vmatprep.subr.mxu0 0.0
      %764 = vmatpush1.msra.mxu0 0.0
      %765 = vmatprep.subr.mxu0 0.0
      %766 = vmatpush1.msra.mxu0 0.0
      %767 = vmatprep.subr.mxu0 0.0
      %768 = vmatpush1.msra.mxu0 0.0
      %769 = vmatprep.subr.mxu0 0.0
      %770 = vmatpush1.msra.mxu0 0.0
      %771 = vmatprep.subr.mxu0 0.0
      %772 = vmatpush1.msra.mxu0 %v739
      %773 = vmatprep.subr.mxu0 0.0
      %774 = vmatpush2.msra.mxu0 0.0
      %775 = vmatprep.subr.mxu0 0.0
      %776 = vmatpush2.msra.mxu0 0.0
      %777 = vmatprep.subr.mxu0 0.0
      %778 = vmatpush2.msra.mxu0 0.0
      %779 = vmatprep.subr.mxu0 0.0
      %780 = vmatpush2.msra.mxu0 0.0
      %781 = vmatprep.subr.mxu0 0.0
      %782 = vmatpush2.msra.mxu0 0.0
      %783 = vmatprep.subr.mxu0 0.0
      %784 = vmatpush2.msra.mxu0 0.0
      %785 = vmatprep.subr.mxu0 0.0
      %786 = vmatpush2.msra.mxu0 0.0
      %787 = vmatprep.subr.mxu0 0.0
      %788 = vmatpush2.msra.mxu0 0.0
      %789 = vmatprep.subr.mxu0 0.0
      %790 = vmatpush2.msra.mxu0 0.0
      %791 = vmatprep.subr.mxu0 0.0
      %792 = vmatpush2.msra.mxu0 0.0
      %793 = vmatprep.subr.mxu0 0.0
      %794 = vmatpush2.msra.mxu0 0.0
      %795 = vmatprep.subr.mxu0 0.0
      %796 = vmatpush2.msra.mxu0 0.0
      %797 = vmatprep.subr.mxu0 0.0
      %798 = vmatpush2.msra.mxu0 0.0
      %799 = vmatprep.subr.mxu0 0.0
      %800 = vmatpush2.msra.mxu0 0.0
      %801 = vmatprep.subr.mxu0 0.0
      %802 = vmatpush2.msra.mxu0 0.0
      %803 = vmatprep.subr.mxu0 0.0
      %804 = vmatpush2.msra.mxu0 0.0
      %805 = vmatprep.mubr.f32.mxu0 0.0
      %806 = vmatmul.mubr.f32.gmra.mxu0 %v729
      %v807 = vpop.f32.mrf.mxu0
      %v808 = vadd.f32 0.0, %v807
      %v809 = vpop.f32.mrf.mxu0
      %810 = vmatprep.mubr.f32.mxu0 0.0
      %811 = vmatmul.mubr.f32.gmra.mxu0 %v731
      %v812 = vpop.f32.mrf.mxu0
      %v813 = vadd.f32 0.0, %v812
      %v814 = vpop.f32.mrf.mxu0
      %815 = vmatprep.mubr.f32.mxu0 0.0
      %816 = vmatmul.mubr.f32.gmra.mxu0 %v733
      %v817 = vpop.f32.mrf.mxu0
      %v818 = vadd.f32 0.0, %v817
      %v819 = vpop.f32.mrf.mxu0
      %820 = vmatprep.mubr.f32.mxu0 0.0
      %821 = vmatmul.mubr.f32.gmra.mxu0 %v735
      %v822 = vpop.f32.mrf.mxu0
      %v823 = vadd.f32 0.0, %v822
      %v824 = vpop.f32.mrf.mxu0
      %825 = vdwg.mxu0
      %v827 = vsel %vm578, %v705, 0
      %v830 = vsel %vm578, %v706, 0
      %v833 = vsel %vm578, %v707, 0
      %v836 = vsel %vm578, %v708, 0
      %v839 = vsel %vm737, %v726, 0
      %841 = vmatprep.subr.mxu0 0.0
      %842 = vmatpush1.msra.mxu0 0.0
      %843 = vmatprep.subr.mxu0 0.0
      %844 = vmatpush1.msra.mxu0 0.0
      %845 = vmatprep.subr.mxu0 0.0
      %846 = vmatpush1.msra.mxu0 0.0
      %847 = vmatprep.subr.mxu0 0.0
      %848 = vmatpush1.msra.mxu0 0.0
      %849 = vmatprep.subr.mxu0 0.0
      %850 = vmatpush1.msra.mxu0 0.0
      %851 = vmatprep.subr.mxu0 0.0
      %852 = vmatpush1.msra.mxu0 0.0
      %853 = vmatprep.subr.mxu0 0.0
      %854 = vmatpush1.msra.mxu0 0.0
      %855 = vmatprep.subr.mxu0 0.0
      %856 = vmatpush1.msra.mxu0 0.0
      %857 = vmatprep.subr.mxu0 0.0
      %858 = vmatpush1.msra.mxu0 0.0
      %859 = vmatprep.subr.mxu0 0.0
      %860 = vmatpush1.msra.mxu0 0.0
      %861 = vmatprep.subr.mxu0 0.0
      %862 = vmatpush1.msra.mxu0 0.0
      %863 = vmatprep.subr.mxu0 0.0
      %864 = vmatpush1.msra.mxu0 0.0
      %865 = vmatprep.subr.mxu0 0.0
      %866 = vmatpush1.msra.mxu0 0.0
      %867 = vmatprep.subr.mxu0 0.0
      %868 = vmatpush1.msra.mxu0 0.0
      %869 = vmatprep.subr.mxu0 0.0
      %870 = vmatpush1.msra.mxu0 0.0
      %871 = vmatprep.subr.mxu0 0.0
      %872 = vmatpush1.msra.mxu0 %v839
      %873 = vmatprep.subr.mxu0 0.0
      %874 = vmatpush2.msra.mxu0 0.0
      %875 = vmatprep.subr.mxu0 0.0
      %876 = vmatpush2.msra.mxu0 0.0
      %877 = vmatprep.subr.mxu0 0.0
      %878 = vmatpush2.msra.mxu0 0.0
      %879 = vmatprep.subr.mxu0 0.0
      %880 = vmatpush2.msra.mxu0 0.0
      %881 = vmatprep.subr.mxu0 0.0
      %882 = vmatpush2.msra.mxu0 0.0
      %883 = vmatprep.subr.mxu0 0.0
      %884 = vmatpush2.msra.mxu0 0.0
      %885 = vmatprep.subr.mxu0 0.0
      %886 = vmatpush2.msra.mxu0 0.0
      %887 = vmatprep.subr.mxu0 0.0
      %888 = vmatpush2.msra.mxu0 0.0
      %889 = vmatprep.subr.mxu0 0.0
      %890 = vmatpush2.msra.mxu0 0.0
      %891 = vmatprep.subr.mxu0 0.0
      %892 = vmatpush2.msra.mxu0 0.0
      %893 = vmatprep.subr.mxu0 0.0
      %894 = vmatpush2.msra.mxu0 0.0
      %895 = vmatprep.subr.mxu0 0.0
      %896 = vmatpush2.msra.mxu0 0.0
      %897 = vmatprep.subr.mxu0 0.0
      %898 = vmatpush2.msra.mxu0 0.0
      %899 = vmatprep.subr.mxu0 0.0
      %900 = vmatpush2.msra.mxu0 0.0
      %901 = vmatprep.subr.mxu0 0.0
      %902 = vmatpush2.msra.mxu0 0.0
      %903 = vmatprep.subr.mxu0 0.0
      %904 = vmatpush2.msra.mxu0 0.0
      %905 = vmatprep.mubr.f32.mxu0 0.0
      %906 = vmatmul.mubr.f32.gmra.mxu0 %v827
      %v907 = vpop.f32.mrf.mxu0
      %v908 = vadd.f32 %v808, %v907
      %v909 = vpop.f32.mrf.mxu0
      %910 = vmatprep.mubr.f32.mxu0 0.0
      %911 = vmatmul.mubr.f32.gmra.mxu0 %v830
      %v912 = vpop.f32.mrf.mxu0
      %v913 = vadd.f32 %v813, %v912
      %v914 = vpop.f32.mrf.mxu0
      %915 = vmatprep.mubr.f32.mxu0 0.0
      %916 = vmatmul.mubr.f32.gmra.mxu0 %v833
      %v917 = vpop.f32.mrf.mxu0
      %v918 = vadd.f32 %v818, %v917
      %v919 = vpop.f32.mrf.mxu0
      %920 = vmatprep.mubr.f32.mxu0 0.0
      %921 = vmatmul.mubr.f32.gmra.mxu0 %v836
      %v922 = vpop.f32.mrf.mxu0
      %v923 = vadd.f32 %v823, %v922
      %v924 = vpop.f32.mrf.mxu0
      %925 = vdwg.mxu0
      %s926 = scalar_lea.vmem %s2, 8
      %v927 = vld [vmem:[%s926] sm:$0xf]
      %v929 = vsel %vm578, %v718, 0
      %v932 = vsel %vm578, %v719, 0
      %v935 = vsel %vm578, %v720, 0
      %v938 = vsel %vm578, %v721, 0
      %v941 = vsel %vm737, %v927, 0
      %943 = vmatprep.subr.mxu0 0.0
      %944 = vmatpush1.msra.mxu0 0.0
      %945 = vmatprep.subr.mxu0 0.0
      %946 = vmatpush1.msra.mxu0 0.0
      %947 = vmatprep.subr.mxu0 0.0
      %948 = vmatpush1.msra.mxu0 0.0
      %949 = vmatprep.subr.mxu0 0.0
      %950 = vmatpush1.msra.mxu0 0.0
      %951 = vmatprep.subr.mxu0 0.0
      %952 = vmatpush1.msra.mxu0 0.0
      %953 = vmatprep.subr.mxu0 0.0
      %954 = vmatpush1.msra.mxu0 0.0
      %955 = vmatprep.subr.mxu0 0.0
      %956 = vmatpush1.msra.mxu0 0.0
      %957 = vmatprep.subr.mxu0 0.0
      %958 = vmatpush1.msra.mxu0 0.0
      %959 = vmatprep.subr.mxu0 0.0
      %960 = vmatpush1.msra.mxu0 0.0
      %961 = vmatprep.subr.mxu0 0.0
      %962 = vmatpush1.msra.mxu0 0.0
      %963 = vmatprep.subr.mxu0 0.0
      %964 = vmatpush1.msra.mxu0 0.0
      %965 = vmatprep.subr.mxu0 0.0
      %966 = vmatpush1.msra.mxu0 0.0
      %967 = vmatprep.subr.mxu0 0.0
      %968 = vmatpush1.msra.mxu0 0.0
      %969 = vmatprep.subr.mxu0 0.0
      %970 = vmatpush1.msra.mxu0 0.0
      %971 = vmatprep.subr.mxu0 0.0
      %972 = vmatpush1.msra.mxu0 0.0
      %973 = vmatprep.subr.mxu0 0.0
      %974 = vmatpush1.msra.mxu0 %v941
      %975 = vmatprep.subr.mxu0 0.0
      %976 = vmatpush2.msra.mxu0 0.0
      %977 = vmatprep.subr.mxu0 0.0
      %978 = vmatpush2.msra.mxu0 0.0
      %979 = vmatprep.subr.mxu0 0.0
      %980 = vmatpush2.msra.mxu0 0.0
      %981 = vmatprep.subr.mxu0 0.0
      %982 = vmatpush2.msra.mxu0 0.0
      %983 = vmatprep.subr.mxu0 0.0
      %984 = vmatpush2.msra.mxu0 0.0
      %985 = vmatprep.subr.mxu0 0.0
      %986 = vmatpush2.msra.mxu0 0.0
      %987 = vmatprep.subr.mxu0 0.0
      %988 = vmatpush2.msra.mxu0 0.0
      %989 = vmatprep.subr.mxu0 0.0
      %990 = vmatpush2.msra.mxu0 0.0
      %991 = vmatprep.subr.mxu0 0.0
      %992 = vmatpush2.msra.mxu0 0.0
      %993 = vmatprep.subr.mxu0 0.0
      %994 = vmatpush2.msra.mxu0 0.0
      %995 = vmatprep.subr.mxu0 0.0
      %996 = vmatpush2.msra.mxu0 0.0
      %997 = vmatprep.subr.mxu0 0.0
      %998 = vmatpush2.msra.mxu0 0.0
      %999 = vmatprep.subr.mxu0 0.0
      %1000 = vmatpush2.msra.mxu0 0.0
      %1001 = vmatprep.subr.mxu0 0.0
      %1002 = vmatpush2.msra.mxu0 0.0
      %1003 = vmatprep.subr.mxu0 0.0
      %1004 = vmatpush2.msra.mxu0 0.0
      %1005 = vmatprep.subr.mxu0 0.0
      %1006 = vmatpush2.msra.mxu0 0.0
      %1007 = vmatprep.mubr.f32.mxu0 0.0
      %1008 = vmatmul.mubr.f32.gmra.mxu0 %v929
      %v1009 = vpop.f32.mrf.mxu0
      %v1010 = vadd.f32 0.0, %v1009
      %v1011 = vpop.f32.mrf.mxu0
      %1012 = vmatprep.mubr.f32.mxu0 0.0
      %1013 = vmatmul.mubr.f32.gmra.mxu0 %v932
      %v1014 = vpop.f32.mrf.mxu0
      %v1015 = vadd.f32 0.0, %v1014
      %v1016 = vpop.f32.mrf.mxu0
      %1017 = vmatprep.mubr.f32.mxu0 0.0
      %1018 = vmatmul.mubr.f32.gmra.mxu0 %v935
      %v1019 = vpop.f32.mrf.mxu0
      %v1020 = vadd.f32 0.0, %v1019
      %v1021 = vpop.f32.mrf.mxu0
      %1022 = vmatprep.mubr.f32.mxu0 0.0
      %1023 = vmatmul.mubr.f32.gmra.mxu0 %v938
      %v1024 = vpop.f32.mrf.mxu0
      %v1025 = vadd.f32 0.0, %v1024
      %v1026 = vpop.f32.mrf.mxu0
      %1027 = vdwg.mxu0
      %v1028 = vadd.f32 %v908, %v1010
      %v1029 = vadd.f32 %v913, %v1015
      %v1030 = vadd.f32 %v918, %v1020
      %v1031 = vadd.f32 %v923, %v1025
      %v1032 = vld [vmem:[%s3] sm:$0xf]
      %v1034 = vsel %vm578, %v722, 0
      %v1037 = vsel %vm578, %v723, 0
      %v1040 = vsel %vm578, %v724, 0
      %v1043 = vsel %vm578, %v725, 0
      %v1046 = vsel %vm737, %v1032, 0
      %1048 = vmatprep.subr.mxu0 0.0
      %1049 = vmatpush1.msra.mxu0 0.0
      %1050 = vmatprep.subr.mxu0 0.0
      %1051 = vmatpush1.msra.mxu0 0.0
      %1052 = vmatprep.subr.mxu0 0.0
      %1053 = vmatpush1.msra.mxu0 0.0
      %1054 = vmatprep.subr.mxu0 0.0
      %1055 = vmatpush1.msra.mxu0 0.0
      %1056 = vmatprep.subr.mxu0 0.0
      %1057 = vmatpush1.msra.mxu0 0.0
      %1058 = vmatprep.subr.mxu0 0.0
      %1059 = vmatpush1.msra.mxu0 0.0
      %1060 = vmatprep.subr.mxu0 0.0
      %1061 = vmatpush1.msra.mxu0 0.0
      %1062 = vmatprep.subr.mxu0 0.0
      %1063 = vmatpush1.msra.mxu0 0.0
      %1064 = vmatprep.subr.mxu0 0.0
      %1065 = vmatpush1.msra.mxu0 0.0
      %1066 = vmatprep.subr.mxu0 0.0
      %1067 = vmatpush1.msra.mxu0 0.0
      %1068 = vmatprep.subr.mxu0 0.0
      %1069 = vmatpush1.msra.mxu0 0.0
      %1070 = vmatprep.subr.mxu0 0.0
      %1071 = vmatpush1.msra.mxu0 0.0
      %1072 = vmatprep.subr.mxu0 0.0
      %1073 = vmatpush1.msra.mxu0 0.0
      %1074 = vmatprep.subr.mxu0 0.0
      %1075 = vmatpush1.msra.mxu0 0.0
      %1076 = vmatprep.subr.mxu0 0.0
      %1077 = vmatpush1.msra.mxu0 0.0
      %1078 = vmatprep.subr.mxu0 0.0
      %1079 = vmatpush1.msra.mxu0 %v1046
      %1080 = vmatprep.subr.mxu0 0.0
      %1081 = vmatpush2.msra.mxu0 0.0
      %1082 = vmatprep.subr.mxu0 0.0
      %1083 = vmatpush2.msra.mxu0 0.0
      %1084 = vmatprep.subr.mxu0 0.0
      %1085 = vmatpush2.msra.mxu0 0.0
      %1086 = vmatprep.subr.mxu0 0.0
      %1087 = vmatpush2.msra.mxu0 0.0
      %1088 = vmatprep.subr.mxu0 0.0
      %1089 = vmatpush2.msra.mxu0 0.0
      %1090 = vmatprep.subr.mxu0 0.0
      %1091 = vmatpush2.msra.mxu0 0.0
      %1092 = vmatprep.subr.mxu0 0.0
      %1093 = vmatpush2.msra.mxu0 0.0
      %1094 = vmatprep.subr.mxu0 0.0
      %1095 = vmatpush2.msra.mxu0 0.0
      %1096 = vmatprep.subr.mxu0 0.0
      %1097 = vmatpush2.msra.mxu0 0.0
      %1098 = vmatprep.subr.mxu0 0.0
      %1099 = vmatpush2.msra.mxu0 0.0
      %1100 = vmatprep.subr.mxu0 0.0
      %1101 = vmatpush2.msra.mxu0 0.0
      %1102 = vmatprep.subr.mxu0 0.0
      %1103 = vmatpush2.msra.mxu0 0.0
      %1104 = vmatprep.subr.mxu0 0.0
      %1105 = vmatpush2.msra.mxu0 0.0
      %1106 = vmatprep.subr.mxu0 0.0
      %1107 = vmatpush2.msra.mxu0 0.0
      %1108 = vmatprep.subr.mxu0 0.0
      %1109 = vmatpush2.msra.mxu0 0.0
      %1110 = vmatprep.subr.mxu0 0.0
      %1111 = vmatpush2.msra.mxu0 0.0
      %1112 = vmatprep.mubr.f32.mxu0 0.0
      %1113 = vmatmul.mubr.f32.gmra.mxu0 %v1034
      %v1114 = vpop.f32.mrf.mxu0
      %v1115 = vadd.f32 0.0, %v1114
      %v1116 = vpop.f32.mrf.mxu0
      %1117 = vmatprep.mubr.f32.mxu0 0.0
      %1118 = vmatmul.mubr.f32.gmra.mxu0 %v1037
      %v1119 = vpop.f32.mrf.mxu0
      %v1120 = vadd.f32 0.0, %v1119
      %v1121 = vpop.f32.mrf.mxu0
      %1122 = vmatprep.mubr.f32.mxu0 0.0
      %1123 = vmatmul.mubr.f32.gmra.mxu0 %v1040
      %v1124 = vpop.f32.mrf.mxu0
      %v1125 = vadd.f32 0.0, %v1124
      %v1126 = vpop.f32.mrf.mxu0
      %1127 = vmatprep.mubr.f32.mxu0 0.0
      %1128 = vmatmul.mubr.f32.gmra.mxu0 %v1043
      %v1129 = vpop.f32.mrf.mxu0
      %v1130 = vadd.f32 0.0, %v1129
      %v1131 = vpop.f32.mrf.mxu0
      %1132 = vdwg.mxu0
      %v1133 = vadd.f32 %v1028, %v1115
      %v1134 = vadd.f32 %v1029, %v1120
      %v1135 = vadd.f32 %v1030, %v1125
      %v1136 = vadd.f32 %v1031, %v1130
      %v1137 = vld [vmem:[%s4] sm:$0xff]
      %v1138 = vld [vmem:[%s4 + $0x8] sm:$0xff]
      %v1139 = vld [vmem:[%s4 + $0x10] sm:$0xff]
      %v1140 = vld [vmem:[%s4 + $0x18] sm:$0xff]
      %v1141 = vadd.f32 %v1133, %v1137
      %v1142 = vadd.f32 %v1134, %v1138
      %v1143 = vadd.f32 %v1135, %v1139
      %v1144 = vadd.f32 %v1136, %v1140
      %v1145 = vld [vmem:[%s5] sm:$0xff]
      %v1146 = vld [vmem:[%s5 + $0x8] sm:$0xff]
      %v1147 = vld [vmem:[%s5 + $0x10] sm:$0xff]
      %v1148 = vld [vmem:[%s5 + $0x18] sm:$0xff]
      %vm1149 = vcmp.gt.f32.partialorder %v1145, 0.5
      %vm1150 = vcmp.gt.f32.partialorder %v1146, 0.5
      %vm1151 = vcmp.gt.f32.partialorder %v1147, 0.5
      %vm1152 = vcmp.gt.f32.partialorder %v1148, 0.5
      %v1153 = vmul.f32 %v1141, %v1141
      %v1154 = vmul.f32 %v1142, %v1142
      %v1155 = vmul.f32 %v1143, %v1143
      %v1156 = vmul.f32 %v1144, %v1144
      %vm1157 = vcmask 130048
      %v1158 = vsel %vm1157, %v1153, 0.0
      %1159 = vadd.xlane.f32.xlu0 %v1158
      %v1160 = vpop.xlane.xlu0 %1159
      %v1161 = vsel %vm1157, %v1154, 0.0
      %1162 = vadd.xlane.f32.xlu0 %v1161
      %v1163 = vpop.xlane.xlu0 %1162
      %v1164 = vsel %vm1157, %v1155, 0.0
      %1165 = vadd.xlane.f32.xlu0 %v1164
      %v1166 = vpop.xlane.xlu0 %1165
      %v1167 = vsel %vm1157, %v1156, 0.0
      %1168 = vadd.xlane.f32.xlu0 %v1167
      %v1169 = vpop.xlane.xlu0 %1168
      %v1170 = vrcp.pop 16.0
      %v1171 = vmul.f32 %v1160, %v1170
      %v1172 = vmul.f32 %v1163, %v1170
      %v1173 = vmul.f32 %v1166, %v1170
      %v1174 = vmul.f32 %v1169, %v1170
      %v1175 = vadd.f32 %v1171, 1e-05
      %v1176 = vadd.f32 %v1172, 1e-05
      %v1177 = vadd.f32 %v1173, 1e-05
      %v1178 = vadd.f32 %v1174, 1e-05
      %v1179 = vrsqrt.pop %v1175
      %v1180 = vrsqrt.pop %v1176
      %v1181 = vrsqrt.pop %v1177
      %v1182 = vrsqrt.pop %v1178
      %v1183 = vmul.f32 %v1141, %v1179
      %v1184 = vmul.f32 %v1142, %v1180
      %v1185 = vmul.f32 %v1143, %v1181
      %v1186 = vmul.f32 %v1144, %v1182
      %v1187 = vld [vmem:[%s7] sm:$0x1]
      %v1189 = vlaneseq
      %v1190 = vshrl.u32 %v1189, 7
      %v1191 = vsub.s32 0, %v1190
      %v1192 = vrot.slane %v1187, %v1191
      %v1194 = vmul.f32 %v1183, %v1192
      %v1195 = vmul.f32 %v1184, %v1192
      %v1196 = vmul.f32 %v1185, %v1192
      %v1197 = vmul.f32 %v1186, %v1192
      %v1198 = vld [vmem:[%s8] sm:$0xff]
      %v1199 = vld [vmem:[%s8 + $0x8] sm:$0xff]
      %v1201 = vsel %vm1157, %v1194, 0
      %v1204 = vsel %vm1157, %v1195, 0
      %v1207 = vsel %vm1157, %v1196, 0
      %v1210 = vsel %vm1157, %v1197, 0
      %1212 = vmatprep.subr.mxu0 0.0
      %1213 = vmatpush1.msra.mxu0 0.0
      %1214 = vmatprep.subr.mxu0 0.0
      %1215 = vmatpush1.msra.mxu0 0.0
      %1216 = vmatprep.subr.mxu0 0.0
      %1217 = vmatpush1.msra.mxu0 0.0
      %1218 = vmatprep.subr.mxu0 0.0
      %1219 = vmatpush1.msra.mxu0 0.0
      %1220 = vmatprep.subr.mxu0 0.0
      %1221 = vmatpush1.msra.mxu0 0.0
      %1222 = vmatprep.subr.mxu0 0.0
      %1223 = vmatpush1.msra.mxu0 0.0
      %1224 = vmatprep.subr.mxu0 0.0
      %1225 = vmatpush1.msra.mxu0 0.0
      %1226 = vmatprep.subr.mxu0 0.0
      %1227 = vmatpush1.msra.mxu0 0.0
      %1228 = vmatprep.subr.mxu0 0.0
      %1229 = vmatpush1.msra.mxu0 0.0
      %1230 = vmatprep.subr.mxu0 0.0
      %1231 = vmatpush1.msra.mxu0 0.0
      %1232 = vmatprep.subr.mxu0 0.0
      %1233 = vmatpush1.msra.mxu0 0.0
      %1234 = vmatprep.subr.mxu0 0.0
      %1235 = vmatpush1.msra.mxu0 0.0
      %1236 = vmatprep.subr.mxu0 0.0
      %1237 = vmatpush1.msra.mxu0 0.0
      %1238 = vmatprep.subr.mxu0 0.0
      %1239 = vmatpush1.msra.mxu0 0.0
      %1240 = vmatprep.subr.mxu0 0.0
      %1241 = vmatpush1.msra.mxu0 %v1199
      %1242 = vmatprep.subr.mxu0 0.0
      %1243 = vmatpush1.msra.mxu0 %v1198
      %1244 = vmatprep.subr.mxu0 0.0
      %1245 = vmatpush2.msra.mxu0 0.0
      %1246 = vmatprep.subr.mxu0 0.0
      %1247 = vmatpush2.msra.mxu0 0.0
      %1248 = vmatprep.subr.mxu0 0.0
      %1249 = vmatpush2.msra.mxu0 0.0
      %1250 = vmatprep.subr.mxu0 0.0
      %1251 = vmatpush2.msra.mxu0 0.0
      %1252 = vmatprep.subr.mxu0 0.0
      %1253 = vmatpush2.msra.mxu0 0.0
      %1254 = vmatprep.subr.mxu0 0.0
      %1255 = vmatpush2.msra.mxu0 0.0
      %1256 = vmatprep.subr.mxu0 0.0
      %1257 = vmatpush2.msra.mxu0 0.0
      %1258 = vmatprep.subr.mxu0 0.0
      %1259 = vmatpush2.msra.mxu0 0.0
      %1260 = vmatprep.subr.mxu0 0.0
      %1261 = vmatpush2.msra.mxu0 0.0
      %1262 = vmatprep.subr.mxu0 0.0
      %1263 = vmatpush2.msra.mxu0 0.0
      %1264 = vmatprep.subr.mxu0 0.0
      %1265 = vmatpush2.msra.mxu0 0.0
      %1266 = vmatprep.subr.mxu0 0.0
      %1267 = vmatpush2.msra.mxu0 0.0
      %1268 = vmatprep.subr.mxu0 0.0
      %1269 = vmatpush2.msra.mxu0 0.0
      %1270 = vmatprep.subr.mxu0 0.0
      %1271 = vmatpush2.msra.mxu0 0.0
      %1272 = vmatprep.subr.mxu0 0.0
      %1273 = vmatpush2.msra.mxu0 0.0
      %1274 = vmatprep.subr.mxu0 0.0
      %1275 = vmatpush2.msra.mxu0 0.0
      %1276 = vmatprep.mubr.f32.mxu0 0.0
      %1277 = vmatmul.mubr.f32.gmra.mxu0 %v1201
      %v1278 = vpop.f32.mrf.mxu0
      %v1279 = vadd.f32 0.0, %v1278
      %v1280 = vpop.f32.mrf.mxu0
      %1281 = vmatprep.mubr.f32.mxu0 0.0
      %1282 = vmatmul.mubr.f32.gmra.mxu0 %v1204
      %v1283 = vpop.f32.mrf.mxu0
      %v1284 = vadd.f32 0.0, %v1283
      %v1285 = vpop.f32.mrf.mxu0
      %1286 = vmatprep.mubr.f32.mxu0 0.0
      %1287 = vmatmul.mubr.f32.gmra.mxu0 %v1207
      %v1288 = vpop.f32.mrf.mxu0
      %v1289 = vadd.f32 0.0, %v1288
      %v1290 = vpop.f32.mrf.mxu0
      %1291 = vmatprep.mubr.f32.mxu0 0.0
      %1292 = vmatmul.mubr.f32.gmra.mxu0 %v1210
      %v1293 = vpop.f32.mrf.mxu0
      %v1294 = vadd.f32 0.0, %v1293
      %v1295 = vpop.f32.mrf.mxu0
      %1296 = vdwg.mxu0
      %v1297 = vld [vmem:[%s11] sm:$0x1]
      %v1299 = vlaneseq
      %v1300 = vshrl.u32 %v1299, 7
      %v1301 = vsub.s32 0, %v1300
      %v1302 = vrot.slane %v1297, %v1301
      %1303 = vrot.lane.b32.xlu0 %v1302, 96
      %v1304 = vpop.permute.xlu0 %1303
      %v1306 = vadd.f32 %v1279, %v1304
      %v1307 = vadd.f32 %v1284, %v1304
      %v1308 = vadd.f32 %v1289, %v1304
      %v1309 = vadd.f32 %v1294, %v1304
      %v1310 = vmax.f32 %v1306, 0.0
      %v1311 = vmax.f32 %v1307, 0.0
      %v1312 = vmax.f32 %v1308, 0.0
      %v1313 = vmax.f32 %v1309, 0.0
      %vm1314 = vcmp.ne.f32.partialorder %v1306, %v1306
      %vm1315 = vcmp.ne.f32.partialorder %v1307, %v1307
      %vm1316 = vcmp.ne.f32.partialorder %v1308, %v1308
      %vm1317 = vcmp.ne.f32.partialorder %v1309, %v1309
      %v1318 = vadd.f32 %v1306, 0.0
      %v1319 = vadd.f32 %v1307, 0.0
      %v1320 = vadd.f32 %v1308, 0.0
      %v1321 = vadd.f32 %v1309, 0.0
      %v1322 = vand.u32 2147483647, %v1306
      %v1323 = vand.u32 2147483647, %v1307
      %v1324 = vand.u32 2147483647, %v1308
      %v1325 = vand.u32 2147483647, %v1309
      %v1326 = vsub.f32 0.0, %v1322
      %v1327 = vsub.f32 0.0, %v1323
      %v1328 = vsub.f32 0.0, %v1324
      %v1329 = vsub.f32 0.0, %v1325
      %v1330 = vmul.f32 %v1326, 1.442695
      %v1331 = vpow.pop %v1330
      %v1332 = vmul.f32 %v1327, 1.442695
      %v1333 = vpow.pop %v1332
      %v1334 = vmul.f32 %v1328, 1.442695
      %v1335 = vpow.pop %v1334
      %v1336 = vmul.f32 %v1329, 1.442695
      %v1337 = vpow.pop %v1336
      %v1338 = vadd.f32 %v1331, 1.0
      %v1339 = vlog2.pop %v1338
      %v1340 = vmul.f32 %v1339, 0.6931472
      %v1341 = vmul.f32 -0.5, %v1331
      %v1342 = vadd.f32 %v1341, 1.0
      %v1343 = vmul.f32 %v1342, %v1331
      %v1344 = vand.u32 2147483647, %v1331
      %vm1345 = vcmp.lt.f32.partialorder %v1344, 0.0004427343
      %v1346 = vsel %vm1345, %v1343, %v1340
      %v1347 = vadd.f32 %v1333, 1.0
      %v1348 = vlog2.pop %v1347
      %v1349 = vmul.f32 %v1348, 0.6931472
      %v1350 = vmul.f32 -0.5, %v1333
      %v1351 = vadd.f32 %v1350, 1.0
      %v1352 = vmul.f32 %v1351, %v1333
      %v1353 = vand.u32 2147483647, %v1333
      %vm1354 = vcmp.lt.f32.partialorder %v1353, 0.0004427343
      %v1355 = vsel %vm1354, %v1352, %v1349
      %v1356 = vadd.f32 %v1335, 1.0
      %v1357 = vlog2.pop %v1356
      %v1358 = vmul.f32 %v1357, 0.6931472
      %v1359 = vmul.f32 -0.5, %v1335
      %v1360 = vadd.f32 %v1359, 1.0
      %v1361 = vmul.f32 %v1360, %v1335
      %v1362 = vand.u32 2147483647, %v1335
      %vm1363 = vcmp.lt.f32.partialorder %v1362, 0.0004427343
      %v1364 = vsel %vm1363, %v1361, %v1358
      %v1365 = vadd.f32 %v1337, 1.0
      %v1366 = vlog2.pop %v1365
      %v1367 = vmul.f32 %v1366, 0.6931472
      %v1368 = vmul.f32 -0.5, %v1337
      %v1369 = vadd.f32 %v1368, 1.0
      %v1370 = vmul.f32 %v1369, %v1337
      %v1371 = vand.u32 2147483647, %v1337
      %vm1372 = vcmp.lt.f32.partialorder %v1371, 0.0004427343
      %v1373 = vsel %vm1372, %v1370, %v1367
      %v1374 = vadd.f32 %v1310, %v1346
      %v1375 = vadd.f32 %v1311, %v1355
      %v1376 = vadd.f32 %v1312, %v1364
      %v1377 = vadd.f32 %v1313, %v1373
      %v1378 = vsel %vm1314, %v1318, %v1374
      %v1379 = vsel %vm1315, %v1319, %v1375
      %v1380 = vsel %vm1316, %v1320, %v1376
      %v1381 = vsel %vm1317, %v1321, %v1377
      %v1382 = vld [vmem:[%s9] sm:$0xf]
      %v1383 = vlaneseq
      %v1384 = vshrl.u32 %v1383, 7
      %v1385 = vsub.s32 3, %v1384
      %v1386 = vrot.slane %v1382, %v1385
      %1388 = vrot.lane.b32.xlu0 %v1386, 32
      %v1389 = vpop.permute.xlu0 %1388
      %v1391 = vmul.f32 %v1279, %v1389
      %v1392 = vmul.f32 %v1284, %v1389
      %v1393 = vmul.f32 %v1289, %v1389
      %v1394 = vmul.f32 %v1294, %v1389
      %v1395 = vld [vmem:[%s10] sm:$0x1]
      %v1397 = vlaneseq
      %v1398 = vshrl.u32 %v1397, 7
      %v1399 = vsub.s32 0, %v1398
      %v1400 = vrot.slane %v1395, %v1399
      %1401 = vrot.lane.b32.xlu0 %v1400, 32
      %v1402 = vpop.permute.xlu0 %1401
      %v1404 = vadd.f32 %v1391, %v1402
      %v1405 = vadd.f32 %v1392, %v1402
      %v1406 = vadd.f32 %v1393, %v1402
      %v1407 = vadd.f32 %v1394, %v1402
      %v1408 = vld [vmem:[%s6] sm:$0xff]
      %v1409 = vld [vmem:[%s6 + $0x8] sm:$0xff]
      %v1410 = vld [vmem:[%s6 + $0x10] sm:$0xff]
      %v1411 = vld [vmem:[%s6 + $0x18] sm:$0xff]
      %1416 = vrot.lane.b32.xlu0 %v1279, 96
      %v1417 = vpop.permute.xlu0 %1416
      %1418 = vrot.lane.b32.xlu0 %v1284, 96
      %v1419 = vpop.permute.xlu0 %1418
      %1420 = vrot.lane.b32.xlu0 %v1289, 96
      %v1421 = vpop.permute.xlu0 %1420
      %1422 = vrot.lane.b32.xlu0 %v1294, 96
      %v1423 = vpop.permute.xlu0 %1422
      %vm1428 = vcmask 261120
      %v1430 = vsel %vm1428, %v1408, 0
      %v1433 = vsel %vm1428, %v1409, 0
      %v1436 = vsel %vm1428, %v1410, 0
      %v1439 = vsel %vm1428, %v1411, 0
      %1441 = vmatprep.subr.mxu0 0.0
      %1442 = vmatpush1.msra.mxu0 0.0
      %1443 = vmatprep.subr.mxu0 0.0
      %1444 = vmatpush1.msra.mxu0 0.0
      %1445 = vmatprep.subr.mxu0 0.0
      %1446 = vmatpush1.msra.mxu0 0.0
      %1447 = vmatprep.subr.mxu0 0.0
      %1448 = vmatpush1.msra.mxu0 0.0
      %1449 = vmatprep.subr.mxu0 0.0
      %1450 = vmatpush1.msra.mxu0 0.0
      %1451 = vmatprep.subr.mxu0 0.0
      %1452 = vmatpush1.msra.mxu0 0.0
      %1453 = vmatprep.subr.mxu0 0.0
      %1454 = vmatpush1.msra.mxu0 0.0
      %1455 = vmatprep.subr.mxu0 0.0
      %1456 = vmatpush1.msra.mxu0 0.0
      %1457 = vmatprep.subr.mxu0 0.0
      %1458 = vmatpush1.msra.mxu0 0.0
      %1459 = vmatprep.subr.mxu0 0.0
      %1460 = vmatpush1.msra.mxu0 0.0
      %1461 = vmatprep.subr.mxu0 0.0
      %1462 = vmatpush1.msra.mxu0 0.0
      %1463 = vmatprep.subr.mxu0 0.0
      %1464 = vmatpush1.msra.mxu0 0.0
      %1465 = vmatprep.subr.mxu0 0.0
      %1466 = vmatpush1.msra.mxu0 %v1423
      %1467 = vmatprep.subr.mxu0 0.0
      %1468 = vmatpush1.msra.mxu0 %v1421
      %1469 = vmatprep.subr.mxu0 0.0
      %1470 = vmatpush1.msra.mxu0 %v1419
      %1471 = vmatprep.subr.mxu0 0.0
      %1472 = vmatpush1.msra.mxu0 %v1417
      %1473 = vmatprep.subr.mxu0 0.0
      %1474 = vmatpush2.msra.mxu0 0.0
      %1475 = vmatprep.subr.mxu0 0.0
      %1476 = vmatpush2.msra.mxu0 0.0
      %1477 = vmatprep.subr.mxu0 0.0
      %1478 = vmatpush2.msra.mxu0 0.0
      %1479 = vmatprep.subr.mxu0 0.0
      %1480 = vmatpush2.msra.mxu0 0.0
      %1481 = vmatprep.subr.mxu0 0.0
      %1482 = vmatpush2.msra.mxu0 0.0
      %1483 = vmatprep.subr.mxu0 0.0
      %1484 = vmatpush2.msra.mxu0 0.0
      %1485 = vmatprep.subr.mxu0 0.0
      %1486 = vmatpush2.msra.mxu0 0.0
      %1487 = vmatprep.subr.mxu0 0.0
      %1488 = vmatpush2.msra.mxu0 0.0
      %1489 = vmatprep.subr.mxu0 0.0
      %1490 = vmatpush2.msra.mxu0 0.0
      %1491 = vmatprep.subr.mxu0 0.0
      %1492 = vmatpush2.msra.mxu0 0.0
      %1493 = vmatprep.subr.mxu0 0.0
      %1494 = vmatpush2.msra.mxu0 0.0
      %1495 = vmatprep.subr.mxu0 0.0
      %1496 = vmatpush2.msra.mxu0 0.0
      %1497 = vmatprep.subr.mxu0 0.0
      %1498 = vmatpush2.msra.mxu0 0.0
      %1499 = vmatprep.subr.mxu0 0.0
      %1500 = vmatpush2.msra.mxu0 0.0
      %1501 = vmatprep.subr.mxu0 0.0
      %1502 = vmatpush2.msra.mxu0 0.0
      %1503 = vmatprep.subr.mxu0 0.0
      %1504 = vmatpush2.msra.mxu0 0.0
      %1505 = vmatprep.mubr.f32.mxu0 0.0
      %1506 = vmatmul.mubr.f32.gmra.mxu0 %v1430
      %v1507 = vpop.f32.mrf.mxu0
      %v1508 = vadd.f32 0.0, %v1507
      %v1509 = vpop.f32.mrf.mxu0
      %1510 = vmatprep.mubr.f32.mxu0 0.0
      %1511 = vmatmul.mubr.f32.gmra.mxu0 %v1433
      %v1512 = vpop.f32.mrf.mxu0
      %v1513 = vadd.f32 0.0, %v1512
      %v1514 = vpop.f32.mrf.mxu0
      %1515 = vmatprep.mubr.f32.mxu0 0.0
      %1516 = vmatmul.mubr.f32.gmra.mxu0 %v1436
      %v1517 = vpop.f32.mrf.mxu0
      %v1518 = vadd.f32 0.0, %v1517
      %v1519 = vpop.f32.mrf.mxu0
      %1520 = vmatprep.mubr.f32.mxu0 0.0
      %1521 = vmatmul.mubr.f32.gmra.mxu0 %v1439
      %v1522 = vpop.f32.mrf.mxu0
      %v1523 = vadd.f32 0.0, %v1522
      %v1524 = vpop.f32.mrf.mxu0
      %1525 = vdwg.mxu0
      %v1526 = vlaneseq
      %v1527 = vshrl.u32 %v1526, 7
      %v1528 = vsub.s32 2, %v1527
      %v1529 = vrot.slane %v1382, %v1528
      %v1530 = vmul.f32 %v1508, %v1529
      %v1531 = vmul.f32 %v1513, %v1529
      %v1532 = vmul.f32 %v1518, %v1529
      %v1533 = vmul.f32 %v1523, %v1529
      %1538 = vrot.lane.b32.xlu0 %v1530, 32
      %v1539 = vpop.permute.xlu0 %1538
      %1540 = vrot.lane.b32.xlu0 %v1531, 32
      %v1541 = vpop.permute.xlu0 %1540
      %1542 = vrot.lane.b32.xlu0 %v1532, 32
      %v1543 = vpop.permute.xlu0 %1542
      %1544 = vrot.lane.b32.xlu0 %v1533, 32
      %v1545 = vpop.permute.xlu0 %1544
      %v1550 = vadd.f32 %v1404, %v1539
      %v1551 = vadd.f32 %v1405, %v1541
      %v1552 = vadd.f32 %v1406, %v1543
      %v1553 = vadd.f32 %v1407, %v1545
      %s1554 = scalar_lea.vmem %s6, 32
      %v1555 = vld [vmem:[%s1554] sm:$0xff]
      %v1556 = vld [vmem:[%s1554 + $0x8] sm:$0xff]
      %v1557 = vld [vmem:[%s1554 + $0x10] sm:$0xff]
      %v1558 = vld [vmem:[%s1554 + $0x18] sm:$0xff]
      %v1560 = vsel %vm1428, %v1555, 0
      %v1563 = vsel %vm1428, %v1556, 0
      %v1566 = vsel %vm1428, %v1557, 0
      %v1569 = vsel %vm1428, %v1558, 0
      %1571 = vmatprep.subr.mxu0 0.0
      %1572 = vmatpush1.msra.mxu0 0.0
      %1573 = vmatprep.subr.mxu0 0.0
      %1574 = vmatpush1.msra.mxu0 0.0
      %1575 = vmatprep.subr.mxu0 0.0
      %1576 = vmatpush1.msra.mxu0 0.0
      %1577 = vmatprep.subr.mxu0 0.0
      %1578 = vmatpush1.msra.mxu0 0.0
      %1579 = vmatprep.subr.mxu0 0.0
      %1580 = vmatpush1.msra.mxu0 0.0
      %1581 = vmatprep.subr.mxu0 0.0
      %1582 = vmatpush1.msra.mxu0 0.0
      %1583 = vmatprep.subr.mxu0 0.0
      %1584 = vmatpush1.msra.mxu0 0.0
      %1585 = vmatprep.subr.mxu0 0.0
      %1586 = vmatpush1.msra.mxu0 0.0
      %1587 = vmatprep.subr.mxu0 0.0
      %1588 = vmatpush1.msra.mxu0 0.0
      %1589 = vmatprep.subr.mxu0 0.0
      %1590 = vmatpush1.msra.mxu0 0.0
      %1591 = vmatprep.subr.mxu0 0.0
      %1592 = vmatpush1.msra.mxu0 0.0
      %1593 = vmatprep.subr.mxu0 0.0
      %1594 = vmatpush1.msra.mxu0 0.0
      %1595 = vmatprep.subr.mxu0 0.0
      %1596 = vmatpush1.msra.mxu0 %v1423
      %1597 = vmatprep.subr.mxu0 0.0
      %1598 = vmatpush1.msra.mxu0 %v1421
      %1599 = vmatprep.subr.mxu0 0.0
      %1600 = vmatpush1.msra.mxu0 %v1419
      %1601 = vmatprep.subr.mxu0 0.0
      %1602 = vmatpush1.msra.mxu0 %v1417
      %1603 = vmatprep.subr.mxu0 0.0
      %1604 = vmatpush2.msra.mxu0 0.0
      %1605 = vmatprep.subr.mxu0 0.0
      %1606 = vmatpush2.msra.mxu0 0.0
      %1607 = vmatprep.subr.mxu0 0.0
      %1608 = vmatpush2.msra.mxu0 0.0
      %1609 = vmatprep.subr.mxu0 0.0
      %1610 = vmatpush2.msra.mxu0 0.0
      %1611 = vmatprep.subr.mxu0 0.0
      %1612 = vmatpush2.msra.mxu0 0.0
      %1613 = vmatprep.subr.mxu0 0.0
      %1614 = vmatpush2.msra.mxu0 0.0
      %1615 = vmatprep.subr.mxu0 0.0
      %1616 = vmatpush2.msra.mxu0 0.0
      %1617 = vmatprep.subr.mxu0 0.0
      %1618 = vmatpush2.msra.mxu0 0.0
      %1619 = vmatprep.subr.mxu0 0.0
      %1620 = vmatpush2.msra.mxu0 0.0
      %1621 = vmatprep.subr.mxu0 0.0
      %1622 = vmatpush2.msra.mxu0 0.0
      %1623 = vmatprep.subr.mxu0 0.0
      %1624 = vmatpush2.msra.mxu0 0.0
      %1625 = vmatprep.subr.mxu0 0.0
      %1626 = vmatpush2.msra.mxu0 0.0
      %1627 = vmatprep.subr.mxu0 0.0
      %1628 = vmatpush2.msra.mxu0 0.0
      %1629 = vmatprep.subr.mxu0 0.0
      %1630 = vmatpush2.msra.mxu0 0.0
      %1631 = vmatprep.subr.mxu0 0.0
      %1632 = vmatpush2.msra.mxu0 0.0
      %1633 = vmatprep.subr.mxu0 0.0
      %1634 = vmatpush2.msra.mxu0 0.0
      %1635 = vmatprep.mubr.f32.mxu0 0.0
      %1636 = vmatmul.mubr.f32.gmra.mxu0 %v1560
      %v1637 = vpop.f32.mrf.mxu0
      %v1638 = vadd.f32 0.0, %v1637
      %v1639 = vpop.f32.mrf.mxu0
      %1640 = vmatprep.mubr.f32.mxu0 0.0
      %1641 = vmatmul.mubr.f32.gmra.mxu0 %v1563
      %v1642 = vpop.f32.mrf.mxu0
      %v1643 = vadd.f32 0.0, %v1642
      %v1644 = vpop.f32.mrf.mxu0
      %1645 = vmatprep.mubr.f32.mxu0 0.0
      %1646 = vmatmul.mubr.f32.gmra.mxu0 %v1566
      %v1647 = vpop.f32.mrf.mxu0
      %v1648 = vadd.f32 0.0, %v1647
      %v1649 = vpop.f32.mrf.mxu0
      %1650 = vmatprep.mubr.f32.mxu0 0.0
      %1651 = vmatmul.mubr.f32.gmra.mxu0 %v1569
      %v1652 = vpop.f32.mrf.mxu0
      %v1653 = vadd.f32 0.0, %v1652
      %v1654 = vpop.f32.mrf.mxu0
      %1655 = vdwg.mxu0
      %v1656 = vlaneseq
      %v1657 = vshrl.u32 %v1656, 7
      %v1658 = vsub.s32 1, %v1657
      %v1659 = vrot.slane %v1382, %v1658
      %v1660 = vmul.f32 %v1638, %v1659
      %v1661 = vmul.f32 %v1643, %v1659
      %v1662 = vmul.f32 %v1648, %v1659
      %v1663 = vmul.f32 %v1653, %v1659
      %1668 = vrot.lane.b32.xlu0 %v1660, 32
      %v1669 = vpop.permute.xlu0 %1668
      %1670 = vrot.lane.b32.xlu0 %v1661, 32
      %v1671 = vpop.permute.xlu0 %1670
      %1672 = vrot.lane.b32.xlu0 %v1662, 32
      %v1673 = vpop.permute.xlu0 %1672
      %1674 = vrot.lane.b32.xlu0 %v1663, 32
      %v1675 = vpop.permute.xlu0 %1674
      %v1680 = vadd.f32 %v1550, %v1669
      %v1681 = vadd.f32 %v1551, %v1671
      %v1682 = vadd.f32 %v1552, %v1673
      %v1683 = vadd.f32 %v1553, %v1675
      %s1684 = scalar_lea.vmem %s6, 64
      %v1685 = vld [vmem:[%s1684] sm:$0xff]
      %v1686 = vld [vmem:[%s1684 + $0x8] sm:$0xff]
      %v1687 = vld [vmem:[%s1684 + $0x10] sm:$0xff]
      %v1688 = vld [vmem:[%s1684 + $0x18] sm:$0xff]
      %v1690 = vsel %vm1428, %v1685, 0
      %v1693 = vsel %vm1428, %v1686, 0
      %v1696 = vsel %vm1428, %v1687, 0
      %v1699 = vsel %vm1428, %v1688, 0
      %1701 = vmatprep.subr.mxu0 0.0
      %1702 = vmatpush1.msra.mxu0 0.0
      %1703 = vmatprep.subr.mxu0 0.0
      %1704 = vmatpush1.msra.mxu0 0.0
      %1705 = vmatprep.subr.mxu0 0.0
      %1706 = vmatpush1.msra.mxu0 0.0
      %1707 = vmatprep.subr.mxu0 0.0
      %1708 = vmatpush1.msra.mxu0 0.0
      %1709 = vmatprep.subr.mxu0 0.0
      %1710 = vmatpush1.msra.mxu0 0.0
      %1711 = vmatprep.subr.mxu0 0.0
      %1712 = vmatpush1.msra.mxu0 0.0
      %1713 = vmatprep.subr.mxu0 0.0
      %1714 = vmatpush1.msra.mxu0 0.0
      %1715 = vmatprep.subr.mxu0 0.0
      %1716 = vmatpush1.msra.mxu0 0.0
      %1717 = vmatprep.subr.mxu0 0.0
      %1718 = vmatpush1.msra.mxu0 0.0
      %1719 = vmatprep.subr.mxu0 0.0
      %1720 = vmatpush1.msra.mxu0 0.0
      %1721 = vmatprep.subr.mxu0 0.0
      %1722 = vmatpush1.msra.mxu0 0.0
      %1723 = vmatprep.subr.mxu0 0.0
      %1724 = vmatpush1.msra.mxu0 0.0
      %1725 = vmatprep.subr.mxu0 0.0
      %1726 = vmatpush1.msra.mxu0 %v1423
      %1727 = vmatprep.subr.mxu0 0.0
      %1728 = vmatpush1.msra.mxu0 %v1421
      %1729 = vmatprep.subr.mxu0 0.0
      %1730 = vmatpush1.msra.mxu0 %v1419
      %1731 = vmatprep.subr.mxu0 0.0
      %1732 = vmatpush1.msra.mxu0 %v1417
      %1733 = vmatprep.subr.mxu0 0.0
      %1734 = vmatpush2.msra.mxu0 0.0
      %1735 = vmatprep.subr.mxu0 0.0
      %1736 = vmatpush2.msra.mxu0 0.0
      %1737 = vmatprep.subr.mxu0 0.0
      %1738 = vmatpush2.msra.mxu0 0.0
      %1739 = vmatprep.subr.mxu0 0.0
      %1740 = vmatpush2.msra.mxu0 0.0
      %1741 = vmatprep.subr.mxu0 0.0
      %1742 = vmatpush2.msra.mxu0 0.0
      %1743 = vmatprep.subr.mxu0 0.0
      %1744 = vmatpush2.msra.mxu0 0.0
      %1745 = vmatprep.subr.mxu0 0.0
      %1746 = vmatpush2.msra.mxu0 0.0
      %1747 = vmatprep.subr.mxu0 0.0
      %1748 = vmatpush2.msra.mxu0 0.0
      %1749 = vmatprep.subr.mxu0 0.0
      %1750 = vmatpush2.msra.mxu0 0.0
      %1751 = vmatprep.subr.mxu0 0.0
      %1752 = vmatpush2.msra.mxu0 0.0
      %1753 = vmatprep.subr.mxu0 0.0
      %1754 = vmatpush2.msra.mxu0 0.0
      %1755 = vmatprep.subr.mxu0 0.0
      %1756 = vmatpush2.msra.mxu0 0.0
      %1757 = vmatprep.subr.mxu0 0.0
      %1758 = vmatpush2.msra.mxu0 0.0
      %1759 = vmatprep.subr.mxu0 0.0
      %1760 = vmatpush2.msra.mxu0 0.0
      %1761 = vmatprep.subr.mxu0 0.0
      %1762 = vmatpush2.msra.mxu0 0.0
      %1763 = vmatprep.subr.mxu0 0.0
      %1764 = vmatpush2.msra.mxu0 0.0
      %1765 = vmatprep.mubr.f32.mxu0 0.0
      %1766 = vmatmul.mubr.f32.gmra.mxu0 %v1690
      %v1767 = vpop.f32.mrf.mxu0
      %v1768 = vadd.f32 0.0, %v1767
      %v1769 = vpop.f32.mrf.mxu0
      %1770 = vmatprep.mubr.f32.mxu0 0.0
      %1771 = vmatmul.mubr.f32.gmra.mxu0 %v1693
      %v1772 = vpop.f32.mrf.mxu0
      %v1773 = vadd.f32 0.0, %v1772
      %v1774 = vpop.f32.mrf.mxu0
      %1775 = vmatprep.mubr.f32.mxu0 0.0
      %1776 = vmatmul.mubr.f32.gmra.mxu0 %v1696
      %v1777 = vpop.f32.mrf.mxu0
      %v1778 = vadd.f32 0.0, %v1777
      %v1779 = vpop.f32.mrf.mxu0
      %1780 = vmatprep.mubr.f32.mxu0 0.0
      %1781 = vmatmul.mubr.f32.gmra.mxu0 %v1699
      %v1782 = vpop.f32.mrf.mxu0
      %v1783 = vadd.f32 0.0, %v1782
      %v1784 = vpop.f32.mrf.mxu0
      %1785 = vdwg.mxu0
      %v1786 = vlaneseq
      %v1787 = vshrl.u32 %v1786, 7
      %v1788 = vsub.s32 0, %v1787
      %v1789 = vrot.slane %v1382, %v1788
      %v1790 = vmul.f32 %v1768, %v1789
      %v1791 = vmul.f32 %v1773, %v1789
      %v1792 = vmul.f32 %v1778, %v1789
      %v1793 = vmul.f32 %v1783, %v1789
      %1798 = vrot.lane.b32.xlu0 %v1790, 32
      %v1799 = vpop.permute.xlu0 %1798
      %1800 = vrot.lane.b32.xlu0 %v1791, 32
      %v1801 = vpop.permute.xlu0 %1800
      %1802 = vrot.lane.b32.xlu0 %v1792, 32
      %v1803 = vpop.permute.xlu0 %1802
      %1804 = vrot.lane.b32.xlu0 %v1793, 32
      %v1805 = vpop.permute.xlu0 %1804
      %v1810 = vadd.f32 %v1680, %v1799
      %v1811 = vadd.f32 %v1681, %v1801
      %v1812 = vadd.f32 %v1682, %v1803
      %v1813 = vadd.f32 %v1683, %v1805
      %v1814 = vxor.u32 %v1810, 2147483648
      %v1815 = vxor.u32 %v1811, 2147483648
      %v1816 = vxor.u32 %v1812, 2147483648
      %v1817 = vxor.u32 %v1813, 2147483648
      %v1818 = vmul.f32 %v1814, 1.442695
      %v1819 = vpow.pop %v1818
      %v1820 = vmul.f32 %v1815, 1.442695
      %v1821 = vpow.pop %v1820
      %v1822 = vmul.f32 %v1816, 1.442695
      %v1823 = vpow.pop %v1822
      %v1824 = vmul.f32 %v1817, 1.442695
      %v1825 = vpow.pop %v1824
      %v1826 = vadd.f32 %v1819, 1.0
      %v1827 = vadd.f32 %v1821, 1.0
      %v1828 = vadd.f32 %v1823, 1.0
      %v1829 = vadd.f32 %v1825, 1.0
      %v1830 = vrcp.pop %v1826
      %v1831 = vmul.f32 1.0, %v1830
      %v1832 = vrcp.pop %v1827
      %v1833 = vmul.f32 1.0, %v1832
      %v1834 = vrcp.pop %v1828
      %v1835 = vmul.f32 1.0, %v1834
      %v1836 = vrcp.pop %v1829
      %v1837 = vmul.f32 1.0, %v1836
      %v1838 = vmul.f32 %v1810, %v1831
      %v1839 = vmul.f32 %v1811, %v1833
      %v1840 = vmul.f32 %v1812, %v1835
      %v1841 = vmul.f32 %v1813, %v1837
      %1846 = vrot.lane.b32.xlu0 %v1378, 64
      %v1847 = vpop.permute.xlu0 %1846
      %1848 = vrot.lane.b32.xlu0 %v1379, 64
      %v1849 = vpop.permute.xlu0 %1848
      %1850 = vrot.lane.b32.xlu0 %v1380, 64
      %v1851 = vpop.permute.xlu0 %1850
      %1852 = vrot.lane.b32.xlu0 %v1381, 64
      %v1853 = vpop.permute.xlu0 %1852
      %v1858 = vmul.f32 %v1838, %v1847
      %v1859 = vmul.f32 %v1839, %v1849
      %v1860 = vmul.f32 %v1840, %v1851
      %v1861 = vmul.f32 %v1841, %v1853
      %v1862 = vld [vmem:[%s12] sm:$0x1]
      %v1864 = vlaneseq
      %v1865 = vshrl.u32 %v1864, 7
      %v1866 = vsub.s32 0, %v1865
      %v1867 = vrot.slane %v1862, %v1866
      %1869 = vrot.lane.b32.xlu0 %v1378, 32
      %v1870 = vpop.permute.xlu0 %1869
      %1871 = vrot.lane.b32.xlu0 %v1379, 32
      %v1872 = vpop.permute.xlu0 %1871
      %1873 = vrot.lane.b32.xlu0 %v1380, 32
      %v1874 = vpop.permute.xlu0 %1873
      %1875 = vrot.lane.b32.xlu0 %v1381, 32
      %v1876 = vpop.permute.xlu0 %1875
      %v1881 = vmul.f32 %v1867, %v1870
      %v1882 = vmul.f32 %v1867, %v1872
      %v1883 = vmul.f32 %v1867, %v1874
      %v1884 = vmul.f32 %v1867, %v1876
      %v1886 = vsel %vm1428, %v1145, 0
      %v1889 = vsel %vm1428, %v1146, 0
      %v1892 = vsel %vm1428, %v1147, 0
      %v1895 = vsel %vm1428, %v1148, 0
      %1897 = vmatprep.subr.mxu0 0.0
      %1898 = vmatpush1.msra.mxu0 0.0
      %1899 = vmatprep.subr.mxu0 0.0
      %1900 = vmatpush1.msra.mxu0 0.0
      %1901 = vmatprep.subr.mxu0 0.0
      %1902 = vmatpush1.msra.mxu0 0.0
      %1903 = vmatprep.subr.mxu0 0.0
      %1904 = vmatpush1.msra.mxu0 0.0
      %1905 = vmatprep.subr.mxu0 0.0
      %1906 = vmatpush1.msra.mxu0 0.0
      %1907 = vmatprep.subr.mxu0 0.0
      %1908 = vmatpush1.msra.mxu0 0.0
      %1909 = vmatprep.subr.mxu0 0.0
      %1910 = vmatpush1.msra.mxu0 0.0
      %1911 = vmatprep.subr.mxu0 0.0
      %1912 = vmatpush1.msra.mxu0 0.0
      %1913 = vmatprep.subr.mxu0 0.0
      %1914 = vmatpush1.msra.mxu0 0.0
      %1915 = vmatprep.subr.mxu0 0.0
      %1916 = vmatpush1.msra.mxu0 0.0
      %1917 = vmatprep.subr.mxu0 0.0
      %1918 = vmatpush1.msra.mxu0 0.0
      %1919 = vmatprep.subr.mxu0 0.0
      %1920 = vmatpush1.msra.mxu0 0.0
      %1921 = vmatprep.subr.mxu0 0.0
      %1922 = vmatpush1.msra.mxu0 %v1884
      %1923 = vmatprep.subr.mxu0 0.0
      %1924 = vmatpush1.msra.mxu0 %v1883
      %1925 = vmatprep.subr.mxu0 0.0
      %1926 = vmatpush1.msra.mxu0 %v1882
      %1927 = vmatprep.subr.mxu0 0.0
      %1928 = vmatpush1.msra.mxu0 %v1881
      %1929 = vmatprep.subr.mxu0 0.0
      %1930 = vmatpush2.msra.mxu0 0.0
      %1931 = vmatprep.subr.mxu0 0.0
      %1932 = vmatpush2.msra.mxu0 0.0
      %1933 = vmatprep.subr.mxu0 0.0
      %1934 = vmatpush2.msra.mxu0 0.0
      %1935 = vmatprep.subr.mxu0 0.0
      %1936 = vmatpush2.msra.mxu0 0.0
      %1937 = vmatprep.subr.mxu0 0.0
      %1938 = vmatpush2.msra.mxu0 0.0
      %1939 = vmatprep.subr.mxu0 0.0
      %1940 = vmatpush2.msra.mxu0 0.0
      %1941 = vmatprep.subr.mxu0 0.0
      %1942 = vmatpush2.msra.mxu0 0.0
      %1943 = vmatprep.subr.mxu0 0.0
      %1944 = vmatpush2.msra.mxu0 0.0
      %1945 = vmatprep.subr.mxu0 0.0
      %1946 = vmatpush2.msra.mxu0 0.0
      %1947 = vmatprep.subr.mxu0 0.0
      %1948 = vmatpush2.msra.mxu0 0.0
      %1949 = vmatprep.subr.mxu0 0.0
      %1950 = vmatpush2.msra.mxu0 0.0
      %1951 = vmatprep.subr.mxu0 0.0
      %1952 = vmatpush2.msra.mxu0 0.0
      %1953 = vmatprep.subr.mxu0 0.0
      %1954 = vmatpush2.msra.mxu0 0.0
      %1955 = vmatprep.subr.mxu0 0.0
      %1956 = vmatpush2.msra.mxu0 0.0
      %1957 = vmatprep.subr.mxu0 0.0
      %1958 = vmatpush2.msra.mxu0 0.0
      %1959 = vmatprep.subr.mxu0 0.0
      %1960 = vmatpush2.msra.mxu0 0.0
      %1961 = vmatprep.mubr.f32.mxu0 0.0
      %1962 = vmatmul.mubr.f32.gmra.mxu0 %v1886
      %v1963 = vpop.f32.mrf.mxu0
      %v1964 = vadd.f32 0.0, %v1963
      %v1965 = vpop.f32.mrf.mxu0
      %1966 = vmatprep.mubr.f32.mxu0 0.0
      %1967 = vmatmul.mubr.f32.gmra.mxu0 %v1889
      %v1968 = vpop.f32.mrf.mxu0
      %v1969 = vadd.f32 0.0, %v1968
      %v1970 = vpop.f32.mrf.mxu0
      %1971 = vmatprep.mubr.f32.mxu0 0.0
      %1972 = vmatmul.mubr.f32.gmra.mxu0 %v1892
      %v1973 = vpop.f32.mrf.mxu0
      %v1974 = vadd.f32 0.0, %v1973
      %v1975 = vpop.f32.mrf.mxu0
      %1976 = vmatprep.mubr.f32.mxu0 0.0
      %1977 = vmatmul.mubr.f32.gmra.mxu0 %v1895
      %v1978 = vpop.f32.mrf.mxu0
      %v1979 = vadd.f32 0.0, %v1978
      %v1980 = vpop.f32.mrf.mxu0
      %1981 = vdwg.mxu0
      %v1982 = vmul.f32 %v1964, 1.442695
      %v1983 = vpow.pop %v1982
      %v1984 = vmul.f32 %v1969, 1.442695
      %v1985 = vpow.pop %v1984
      %v1986 = vmul.f32 %v1974, 1.442695
      %v1987 = vpow.pop %v1986
      %v1988 = vmul.f32 %v1979, 1.442695
      %v1989 = vpow.pop %v1988
      %v1990 = vsub.f32 0.0, %v1964
      %v1991 = vsub.f32 0.0, %v1969
      %v1992 = vsub.f32 0.0, %v1974
      %v1993 = vsub.f32 0.0, %v1979
      %v1994 = vmul.f32 %v1990, 1.442695
      %v1995 = vpow.pop %v1994
      %v1996 = vmul.f32 %v1991, 1.442695
      %v1997 = vpow.pop %v1996
      %v1998 = vmul.f32 %v1992, 1.442695
      %v1999 = vpow.pop %v1998
      %v2000 = vmul.f32 %v1993, 1.442695
      %v2001 = vpow.pop %v2000
      %2006 = vrot.lane.b32.xlu0 %v1838, 48
      %v2007 = vpop.permute.xlu0 %2006
      %2008 = vrot.lane.b32.xlu0 %v1839, 48
      %v2009 = vpop.permute.xlu0 %2008
      %2010 = vrot.lane.b32.xlu0 %v1840, 48
      %v2011 = vpop.permute.xlu0 %2010
      %2012 = vrot.lane.b32.xlu0 %v1841, 48
      %v2013 = vpop.permute.xlu0 %2012
      %2014 = vrot.lane.b32.xlu0 %v1838, 64
      %v2015 = vpop.permute.xlu0 %2014
      %2016 = vrot.lane.b32.xlu0 %v1839, 64
      %v2017 = vpop.permute.xlu0 %2016
      %2018 = vrot.lane.b32.xlu0 %v1840, 64
      %v2019 = vpop.permute.xlu0 %2018
      %2020 = vrot.lane.b32.xlu0 %v1841, 64
      %v2021 = vpop.permute.xlu0 %2020
      %v2022 = vsel %vm1157, %v2007, 0
      %v2024 = vsel %vm1157, %v2009, 0
      %v2026 = vsel %vm1157, %v2011, 0
      %v2028 = vsel %vm1157, %v2013, 0
      %v2030 = vsel %vm1157, %v2015, 0
      %v2032 = vsel %vm1157, %v2017, 0
      %v2034 = vsel %vm1157, %v2019, 0
      %v2036 = vsel %vm1157, %v2021, 0
      %2038 = vmatprep.subr.mxu0 0.0
      %2039 = vmatpush1.xpose.msra.mxu0 0.0
      %2040 = vmatprep.subr.mxu0 0.0
      %2041 = vmatpush1.xpose.msra.mxu0 0.0
      %2042 = vmatprep.subr.mxu0 0.0
      %2043 = vmatpush1.xpose.msra.mxu0 0.0
      %2044 = vmatprep.subr.mxu0 0.0
      %2045 = vmatpush1.xpose.msra.mxu0 0.0
      %2046 = vmatprep.subr.mxu0 0.0
      %2047 = vmatpush1.xpose.msra.mxu0 0.0
      %2048 = vmatprep.subr.mxu0 0.0
      %2049 = vmatpush1.xpose.msra.mxu0 0.0
      %2050 = vmatprep.subr.mxu0 0.0
      %2051 = vmatpush1.xpose.msra.mxu0 0.0
      %2052 = vmatprep.subr.mxu0 0.0
      %2053 = vmatpush1.xpose.msra.mxu0 0.0
      %2054 = vmatprep.subr.mxu0 0.0
      %2055 = vmatpush1.xpose.msra.mxu0 0.0
      %2056 = vmatprep.subr.mxu0 0.0
      %2057 = vmatpush1.xpose.msra.mxu0 0.0
      %2058 = vmatprep.subr.mxu0 0.0
      %2059 = vmatpush1.xpose.msra.mxu0 0.0
      %2060 = vmatprep.subr.mxu0 0.0
      %2061 = vmatpush1.xpose.msra.mxu0 0.0
      %2062 = vmatprep.subr.mxu0 0.0
      %2063 = vmatpush1.xpose.msra.mxu0 %v2036
      %2064 = vmatprep.subr.mxu0 0.0
      %2065 = vmatpush1.xpose.msra.mxu0 %v2034
      %2066 = vmatprep.subr.mxu0 0.0
      %2067 = vmatpush1.xpose.msra.mxu0 %v2032
      %2068 = vmatprep.subr.mxu0 0.0
      %2069 = vmatpush1.xpose.msra.mxu0 %v2030
      %2070 = vmatprep.subr.mxu0 0.0
      %2071 = vmatpush2.xpose.msra.mxu0 0.0
      %2072 = vmatprep.subr.mxu0 0.0
      %2073 = vmatpush2.xpose.msra.mxu0 0.0
      %2074 = vmatprep.subr.mxu0 0.0
      %2075 = vmatpush2.xpose.msra.mxu0 0.0
      %2076 = vmatprep.subr.mxu0 0.0
      %2077 = vmatpush2.xpose.msra.mxu0 0.0
      %2078 = vmatprep.subr.mxu0 0.0
      %2079 = vmatpush2.xpose.msra.mxu0 0.0
      %2080 = vmatprep.subr.mxu0 0.0
      %2081 = vmatpush2.xpose.msra.mxu0 0.0
      %2082 = vmatprep.subr.mxu0 0.0
      %2083 = vmatpush2.xpose.msra.mxu0 0.0
      %2084 = vmatprep.subr.mxu0 0.0
      %2085 = vmatpush2.xpose.msra.mxu0 0.0
      %2086 = vmatprep.subr.mxu0 0.0
      %2087 = vmatpush2.xpose.msra.mxu0 0.0
      %2088 = vmatprep.subr.mxu0 0.0
      %2089 = vmatpush2.xpose.msra.mxu0 0.0
      %2090 = vmatprep.subr.mxu0 0.0
      %2091 = vmatpush2.xpose.msra.mxu0 0.0
      %2092 = vmatprep.subr.mxu0 0.0
      %2093 = vmatpush2.xpose.msra.mxu0 0.0
      %2094 = vmatprep.subr.mxu0 0.0
      %2095 = vmatpush2.xpose.msra.mxu0 0.0
      %2096 = vmatprep.subr.mxu0 0.0
      %2097 = vmatpush2.xpose.msra.mxu0 0.0
      %2098 = vmatprep.subr.mxu0 0.0
      %2099 = vmatpush2.xpose.msra.mxu0 0.0
      %2100 = vmatprep.subr.mxu0 0.0
      %2101 = vmatpush2.xpose.msra.mxu0 0.0
      %2102 = vmatprep.mubr.f32.mxu0 0.0
      %2103 = vmatmul.mubr.f32.gmra.mxu0 %v2022
      %v2104 = vpop.f32.mrf.mxu0
      %v2105 = vadd.f32 0.0, %v2104
      %v2106 = vpop.f32.mrf.mxu0
      %2107 = vmatprep.mubr.f32.mxu0 0.0
      %2108 = vmatmul.mubr.f32.gmra.mxu0 %v2024
      %v2109 = vpop.f32.mrf.mxu0
      %v2110 = vadd.f32 0.0, %v2109
      %v2111 = vpop.f32.mrf.mxu0
      %2112 = vmatprep.mubr.f32.mxu0 0.0
      %2113 = vmatmul.mubr.f32.gmra.mxu0 %v2026
      %v2114 = vpop.f32.mrf.mxu0
      %v2115 = vadd.f32 0.0, %v2114
      %v2116 = vpop.f32.mrf.mxu0
      %2117 = vmatprep.mubr.f32.mxu0 0.0
      %2118 = vmatmul.mubr.f32.gmra.mxu0 %v2028
      %v2119 = vpop.f32.mrf.mxu0
      %v2120 = vadd.f32 0.0, %v2119
      %v2121 = vpop.f32.mrf.mxu0
      %2122 = vdwg.mxu0
      %v2123 = vsel %vm1149, %v2105, 0.0
      %v2124 = vsel %vm1150, %v2110, 0.0
      %v2125 = vsel %vm1151, %v2115, 0.0
      %v2126 = vsel %vm1152, %v2120, 0.0
      %2131 = vrot.lane.b32.xlu0 %v1858, 96
      %v2132 = vpop.permute.xlu0 %2131
      %2133 = vrot.lane.b32.xlu0 %v1859, 96
      %v2134 = vpop.permute.xlu0 %2133
      %2135 = vrot.lane.b32.xlu0 %v1860, 96
      %v2136 = vpop.permute.xlu0 %2135
      %2137 = vrot.lane.b32.xlu0 %v1861, 96
      %v2138 = vpop.permute.xlu0 %2137
      %v2143 = vmul.f32 %v1995, %v2132
      %v2144 = vmul.f32 %v1997, %v2134
      %v2145 = vmul.f32 %v1999, %v2136
      %v2146 = vmul.f32 %v2001, %v2138
      %v2148 = vsel %vm1428, %v2123, 0
      %v2151 = vsel %vm1428, %v2124, 0
      %v2154 = vsel %vm1428, %v2125, 0
      %v2157 = vsel %vm1428, %v2126, 0
      %2159 = vmatprep.subr.mxu0 0.0
      %2160 = vmatpush1.msra.mxu0 0.0
      %2161 = vmatprep.subr.mxu0 0.0
      %2162 = vmatpush1.msra.mxu0 0.0
      %2163 = vmatprep.subr.mxu0 0.0
      %2164 = vmatpush1.msra.mxu0 0.0
      %2165 = vmatprep.subr.mxu0 0.0
      %2166 = vmatpush1.msra.mxu0 0.0
      %2167 = vmatprep.subr.mxu0 0.0
      %2168 = vmatpush1.msra.mxu0 0.0
      %2169 = vmatprep.subr.mxu0 0.0
      %2170 = vmatpush1.msra.mxu0 0.0
      %2171 = vmatprep.subr.mxu0 0.0
      %2172 = vmatpush1.msra.mxu0 0.0
      %2173 = vmatprep.subr.mxu0 0.0
      %2174 = vmatpush1.msra.mxu0 0.0
      %2175 = vmatprep.subr.mxu0 0.0
      %2176 = vmatpush1.msra.mxu0 0.0
      %2177 = vmatprep.subr.mxu0 0.0
      %2178 = vmatpush1.msra.mxu0 0.0
      %2179 = vmatprep.subr.mxu0 0.0
      %2180 = vmatpush1.msra.mxu0 0.0
      %2181 = vmatprep.subr.mxu0 0.0
      %2182 = vmatpush1.msra.mxu0 0.0
      %2183 = vmatprep.subr.mxu0 0.0
      %2184 = vmatpush1.msra.mxu0 %v2146
      %2185 = vmatprep.subr.mxu0 0.0
      %2186 = vmatpush1.msra.mxu0 %v2145
      %2187 = vmatprep.subr.mxu0 0.0
      %2188 = vmatpush1.msra.mxu0 %v2144
      %2189 = vmatprep.subr.mxu0 0.0
      %2190 = vmatpush1.msra.mxu0 %v2143
      %2191 = vmatprep.subr.mxu0 0.0
      %2192 = vmatpush2.msra.mxu0 0.0
      %2193 = vmatprep.subr.mxu0 0.0
      %2194 = vmatpush2.msra.mxu0 0.0
      %2195 = vmatprep.subr.mxu0 0.0
      %2196 = vmatpush2.msra.mxu0 0.0
      %2197 = vmatprep.subr.mxu0 0.0
      %2198 = vmatpush2.msra.mxu0 0.0
      %2199 = vmatprep.subr.mxu0 0.0
      %2200 = vmatpush2.msra.mxu0 0.0
      %2201 = vmatprep.subr.mxu0 0.0
      %2202 = vmatpush2.msra.mxu0 0.0
      %2203 = vmatprep.subr.mxu0 0.0
      %2204 = vmatpush2.msra.mxu0 0.0
      %2205 = vmatprep.subr.mxu0 0.0
      %2206 = vmatpush2.msra.mxu0 0.0
      %2207 = vmatprep.subr.mxu0 0.0
      %2208 = vmatpush2.msra.mxu0 0.0
      %2209 = vmatprep.subr.mxu0 0.0
      %2210 = vmatpush2.msra.mxu0 0.0
      %2211 = vmatprep.subr.mxu0 0.0
      %2212 = vmatpush2.msra.mxu0 0.0
      %2213 = vmatprep.subr.mxu0 0.0
      %2214 = vmatpush2.msra.mxu0 0.0
      %2215 = vmatprep.subr.mxu0 0.0
      %2216 = vmatpush2.msra.mxu0 0.0
      %2217 = vmatprep.subr.mxu0 0.0
      %2218 = vmatpush2.msra.mxu0 0.0
      %2219 = vmatprep.subr.mxu0 0.0
      %2220 = vmatpush2.msra.mxu0 0.0
      %2221 = vmatprep.subr.mxu0 0.0
      %2222 = vmatpush2.msra.mxu0 0.0
      %2223 = vmatprep.mubr.f32.mxu0 0.0
      %2224 = vmatmul.mubr.f32.gmra.mxu0 %v2148
      %v2225 = vpop.f32.mrf.mxu0
      %v2226 = vadd.f32 0.0, %v2225
      %v2227 = vpop.f32.mrf.mxu0
      %2228 = vmatprep.mubr.f32.mxu0 0.0
      %2229 = vmatmul.mubr.f32.gmra.mxu0 %v2151
      %v2230 = vpop.f32.mrf.mxu0
      %v2231 = vadd.f32 0.0, %v2230
      %v2232 = vpop.f32.mrf.mxu0
      %2233 = vmatprep.mubr.f32.mxu0 0.0
      %2234 = vmatmul.mubr.f32.gmra.mxu0 %v2154
      %v2235 = vpop.f32.mrf.mxu0
      %v2236 = vadd.f32 0.0, %v2235
      %v2237 = vpop.f32.mrf.mxu0
      %2238 = vmatprep.mubr.f32.mxu0 0.0
      %2239 = vmatmul.mubr.f32.gmra.mxu0 %v2157
      %v2240 = vpop.f32.mrf.mxu0
      %v2241 = vadd.f32 0.0, %v2240
      %v2242 = vpop.f32.mrf.mxu0
      %2243 = vdwg.mxu0
      %v2244 = vmul.f32 %v1983, %v2226
      %v2245 = vmul.f32 %v1985, %v2231
      %v2246 = vmul.f32 %v1987, %v2236
      %v2247 = vmul.f32 %v1989, %v2241
      %v2248 = vld [vmem:[%s13] sm:$0x1]
      %v2250 = vlaneseq
      %v2251 = vshrl.u32 %v2250, 7
      %v2252 = vsub.s32 0, %v2251
      %v2253 = vrot.slane %v2248, %v2252
      %2254 = vrot.lane.b32.xlu0 %v2253, 32
      %v2255 = vpop.permute.xlu0 %2254
      %v2257 = vmul.f32 %v1838, %v2255
      %v2258 = vmul.f32 %v1839, %v2255
      %v2259 = vmul.f32 %v1840, %v2255
      %v2260 = vmul.f32 %v1841, %v2255
      %2265 = vrot.lane.b32.xlu0 %v2257, 96
      %v2266 = vpop.permute.xlu0 %2265
      %2267 = vrot.lane.b32.xlu0 %v2258, 96
      %v2268 = vpop.permute.xlu0 %2267
      %2269 = vrot.lane.b32.xlu0 %v2259, 96
      %v2270 = vpop.permute.xlu0 %2269
      %2271 = vrot.lane.b32.xlu0 %v2260, 96
      %v2272 = vpop.permute.xlu0 %2271
      %v2277 = vadd.f32 %v2244, %v2266
      %v2278 = vadd.f32 %v2245, %v2268
      %v2279 = vadd.f32 %v2246, %v2270
      %v2280 = vadd.f32 %v2247, %v2272
      %v2281 = vxor.u32 %v1279, 2147483648
      %v2282 = vxor.u32 %v1284, 2147483648
      %v2283 = vxor.u32 %v1289, 2147483648
      %v2284 = vxor.u32 %v1294, 2147483648
      %v2285 = vmul.f32 %v2281, 1.442695
      %v2286 = vpow.pop %v2285
      %v2287 = vmul.f32 %v2282, 1.442695
      %v2288 = vpow.pop %v2287
      %v2289 = vmul.f32 %v2283, 1.442695
      %v2290 = vpow.pop %v2289
      %v2291 = vmul.f32 %v2284, 1.442695
      %v2292 = vpow.pop %v2291
      %v2293 = vadd.f32 %v2286, 1.0
      %v2294 = vadd.f32 %v2288, 1.0
      %v2295 = vadd.f32 %v2290, 1.0
      %v2296 = vadd.f32 %v2292, 1.0
      %v2297 = vrcp.pop %v2293
      %v2298 = vmul.f32 1.0, %v2297
      %v2299 = vrcp.pop %v2294
      %v2300 = vmul.f32 1.0, %v2299
      %v2301 = vrcp.pop %v2295
      %v2302 = vmul.f32 1.0, %v2301
      %v2303 = vrcp.pop %v2296
      %v2304 = vmul.f32 1.0, %v2303
      %v2305 = vmul.f32 %v1279, %v2298
      %v2306 = vmul.f32 %v1284, %v2300
      %v2307 = vmul.f32 %v1289, %v2302
      %v2308 = vmul.f32 %v1294, %v2304
      %v2309 = vmul.f32 %v2277, %v2305
      %v2310 = vmul.f32 %v2278, %v2306
      %v2311 = vmul.f32 %v2279, %v2307
      %v2312 = vmul.f32 %v2280, %v2308
      %v2313 = vmul.f32 %v2309, %v2309
      %v2314 = vmul.f32 %v2310, %v2310
      %v2315 = vmul.f32 %v2311, %v2311
      %v2316 = vmul.f32 %v2312, %v2312
      %v2317 = vsel %vm1428, %v2313, 0.0
      %2318 = vadd.xlane.f32.xlu0 %v2317
      %v2319 = vpop.xlane.xlu0 %2318
      %v2320 = vsel %vm1428, %v2314, 0.0
      %2321 = vadd.xlane.f32.xlu0 %v2320
      %v2322 = vpop.xlane.xlu0 %2321
      %v2323 = vsel %vm1428, %v2315, 0.0
      %2324 = vadd.xlane.f32.xlu0 %v2323
      %v2325 = vpop.xlane.xlu0 %2324
      %v2326 = vsel %vm1428, %v2316, 0.0
      %2327 = vadd.xlane.f32.xlu0 %v2326
      %v2328 = vpop.xlane.xlu0 %2327
      %v2329 = vrcp.pop 32.0
      %v2330 = vmul.f32 %v2319, %v2329
      %v2331 = vmul.f32 %v2322, %v2329
      %v2332 = vmul.f32 %v2325, %v2329
      %v2333 = vmul.f32 %v2328, %v2329
      %v2334 = vadd.f32 %v2330, 1e-05
      %v2335 = vadd.f32 %v2331, 1e-05
      %v2336 = vadd.f32 %v2332, 1e-05
      %v2337 = vadd.f32 %v2333, 1e-05
      %v2338 = vrsqrt.pop %v2334
      %v2339 = vrsqrt.pop %v2335
      %v2340 = vrsqrt.pop %v2336
      %v2341 = vrsqrt.pop %v2337
      %v2342 = vmul.f32 %v2309, %v2338
      %v2343 = vmul.f32 %v2310, %v2339
      %v2344 = vmul.f32 %v2311, %v2340
      %v2345 = vmul.f32 %v2312, %v2341
      %v2346 = vld [vmem:[%s14] sm:$0x1]
      %v2348 = vlaneseq
      %v2349 = vshrl.u32 %v2348, 7
      %v2350 = vsub.s32 0, %v2349
      %v2351 = vrot.slane %v2346, %v2350
      %v2353 = vmul.f32 %v2342, %v2351
      %v2354 = vmul.f32 %v2343, %v2351
      %v2355 = vmul.f32 %v2344, %v2351
      %v2356 = vmul.f32 %v2345, %v2351
      %v2357 = vld [vmem:[%s15] sm:$0xff]
      %v2358 = vld [vmem:[%s15 + $0x8] sm:$0xff]
      %v2359 = vld [vmem:[%s15 + $0x10] sm:$0xff]
      %v2360 = vld [vmem:[%s15 + $0x18] sm:$0xff]
      %v2362 = vsel %vm1428, %v2353, 0
      %v2365 = vsel %vm1428, %v2354, 0
      %v2368 = vsel %vm1428, %v2355, 0
      %v2371 = vsel %vm1428, %v2356, 0
      %2373 = vmatprep.subr.mxu0 0.0
      %2374 = vmatpush1.msra.mxu0 0.0
      %2375 = vmatprep.subr.mxu0 0.0
      %2376 = vmatpush1.msra.mxu0 0.0
      %2377 = vmatprep.subr.mxu0 0.0
      %2378 = vmatpush1.msra.mxu0 0.0
      %2379 = vmatprep.subr.mxu0 0.0
      %2380 = vmatpush1.msra.mxu0 0.0
      %2381 = vmatprep.subr.mxu0 0.0
      %2382 = vmatpush1.msra.mxu0 0.0
      %2383 = vmatprep.subr.mxu0 0.0
      %2384 = vmatpush1.msra.mxu0 0.0
      %2385 = vmatprep.subr.mxu0 0.0
      %2386 = vmatpush1.msra.mxu0 0.0
      %2387 = vmatprep.subr.mxu0 0.0
      %2388 = vmatpush1.msra.mxu0 0.0
      %2389 = vmatprep.subr.mxu0 0.0
      %2390 = vmatpush1.msra.mxu0 0.0
      %2391 = vmatprep.subr.mxu0 0.0
      %2392 = vmatpush1.msra.mxu0 0.0
      %2393 = vmatprep.subr.mxu0 0.0
      %2394 = vmatpush1.msra.mxu0 0.0
      %2395 = vmatprep.subr.mxu0 0.0
      %2396 = vmatpush1.msra.mxu0 0.0
      %2397 = vmatprep.subr.mxu0 0.0
      %2398 = vmatpush1.msra.mxu0 %v2360
      %2399 = vmatprep.subr.mxu0 0.0
      %2400 = vmatpush1.msra.mxu0 %v2359
      %2401 = vmatprep.subr.mxu0 0.0
      %2402 = vmatpush1.msra.mxu0 %v2358
      %2403 = vmatprep.subr.mxu0 0.0
      %2404 = vmatpush1.msra.mxu0 %v2357
      %2405 = vmatprep.subr.mxu0 0.0
      %2406 = vmatpush2.msra.mxu0 0.0
      %2407 = vmatprep.subr.mxu0 0.0
      %2408 = vmatpush2.msra.mxu0 0.0
      %2409 = vmatprep.subr.mxu0 0.0
      %2410 = vmatpush2.msra.mxu0 0.0
      %2411 = vmatprep.subr.mxu0 0.0
      %2412 = vmatpush2.msra.mxu0 0.0
      %2413 = vmatprep.subr.mxu0 0.0
      %2414 = vmatpush2.msra.mxu0 0.0
      %2415 = vmatprep.subr.mxu0 0.0
      %2416 = vmatpush2.msra.mxu0 0.0
      %2417 = vmatprep.subr.mxu0 0.0
      %2418 = vmatpush2.msra.mxu0 0.0
      %2419 = vmatprep.subr.mxu0 0.0
      %2420 = vmatpush2.msra.mxu0 0.0
      %2421 = vmatprep.subr.mxu0 0.0
      %2422 = vmatpush2.msra.mxu0 0.0
      %2423 = vmatprep.subr.mxu0 0.0
      %2424 = vmatpush2.msra.mxu0 0.0
      %2425 = vmatprep.subr.mxu0 0.0
      %2426 = vmatpush2.msra.mxu0 0.0
      %2427 = vmatprep.subr.mxu0 0.0
      %2428 = vmatpush2.msra.mxu0 0.0
      %2429 = vmatprep.subr.mxu0 0.0
      %2430 = vmatpush2.msra.mxu0 0.0
      %2431 = vmatprep.subr.mxu0 0.0
      %2432 = vmatpush2.msra.mxu0 0.0
      %2433 = vmatprep.subr.mxu0 0.0
      %2434 = vmatpush2.msra.mxu0 0.0
      %2435 = vmatprep.subr.mxu0 0.0
      %2436 = vmatpush2.msra.mxu0 0.0
      %2437 = vmatprep.mubr.f32.mxu0 0.0
      %2438 = vmatmul.mubr.f32.gmra.mxu0 %v2362
      %v2439 = vpop.f32.mrf.mxu0
      %v2440 = vadd.f32 %v1141, %v2439
      %v2441 = vpop.f32.mrf.mxu0
      %2442 = vmatprep.mubr.f32.mxu0 0.0
      %2443 = vmatmul.mubr.f32.gmra.mxu0 %v2365
      %v2444 = vpop.f32.mrf.mxu0
      %v2445 = vadd.f32 %v1142, %v2444
      %v2446 = vpop.f32.mrf.mxu0
      %2447 = vmatprep.mubr.f32.mxu0 0.0
      %2448 = vmatmul.mubr.f32.gmra.mxu0 %v2368
      %v2449 = vpop.f32.mrf.mxu0
      %v2450 = vadd.f32 %v1143, %v2449
      %v2451 = vpop.f32.mrf.mxu0
      %2452 = vmatprep.mubr.f32.mxu0 0.0
      %2453 = vmatmul.mubr.f32.gmra.mxu0 %v2371
      %v2454 = vpop.f32.mrf.mxu0
      %v2455 = vadd.f32 %v1144, %v2454
      %v2456 = vpop.f32.mrf.mxu0
      %2457 = vdwg.mxu0
      %v2458 = vmul.f32 %v2440, %v2440
      %v2459 = vmul.f32 %v2445, %v2445
      %v2460 = vmul.f32 %v2450, %v2450
      %v2461 = vmul.f32 %v2455, %v2455
      %v2462 = vsel %vm1157, %v2458, 0.0
      %2463 = vadd.xlane.f32.xlu0 %v2462
      %v2464 = vpop.xlane.xlu0 %2463
      %v2465 = vsel %vm1157, %v2459, 0.0
      %2466 = vadd.xlane.f32.xlu0 %v2465
      %v2467 = vpop.xlane.xlu0 %2466
      %v2468 = vsel %vm1157, %v2460, 0.0
      %2469 = vadd.xlane.f32.xlu0 %v2468
      %v2470 = vpop.xlane.xlu0 %2469
      %v2471 = vsel %vm1157, %v2461, 0.0
      %2472 = vadd.xlane.f32.xlu0 %v2471
      %v2473 = vpop.xlane.xlu0 %2472
      %v2474 = vmul.f32 %v2464, %v1170
      %v2475 = vmul.f32 %v2467, %v1170
      %v2476 = vmul.f32 %v2470, %v1170
      %v2477 = vmul.f32 %v2473, %v1170
      %v2478 = vadd.f32 %v2474, 1e-05
      %v2479 = vadd.f32 %v2475, 1e-05
      %v2480 = vadd.f32 %v2476, 1e-05
      %v2481 = vadd.f32 %v2477, 1e-05
      %v2482 = vrsqrt.pop %v2478
      %v2483 = vrsqrt.pop %v2479
      %v2484 = vrsqrt.pop %v2480
      %v2485 = vrsqrt.pop %v2481
      %v2486 = vmul.f32 %v2440, %v2482
      %v2487 = vmul.f32 %v2445, %v2483
      %v2488 = vmul.f32 %v2450, %v2484
      %v2489 = vmul.f32 %v2455, %v2485
      %s2490 = scalar_lea.vmem %s7, 1
      %v2491 = vld [vmem:[%s2490] sm:$0x1]
      %v2493 = vlaneseq
      %v2494 = vshrl.u32 %v2493, 7
      %v2495 = vsub.s32 0, %v2494
      %v2496 = vrot.slane %v2491, %v2495
      %v2498 = vmul.f32 %v2486, %v2496
      %v2499 = vmul.f32 %v2487, %v2496
      %v2500 = vmul.f32 %v2488, %v2496
      %v2501 = vmul.f32 %v2489, %v2496
      %s2502 = scalar_lea.vmem %s8, 16
      %v2503 = vld [vmem:[%s2502] sm:$0xff]
      %v2504 = vld [vmem:[%s2502 + $0x8] sm:$0xff]
      %v2506 = vsel %vm1157, %v2498, 0
      %v2509 = vsel %vm1157, %v2499, 0
      %v2512 = vsel %vm1157, %v2500, 0
      %v2515 = vsel %vm1157, %v2501, 0
      %2517 = vmatprep.subr.mxu0 0.0
      %2518 = vmatpush1.msra.mxu0 0.0
      %2519 = vmatprep.subr.mxu0 0.0
      %2520 = vmatpush1.msra.mxu0 0.0
      %2521 = vmatprep.subr.mxu0 0.0
      %2522 = vmatpush1.msra.mxu0 0.0
      %2523 = vmatprep.subr.mxu0 0.0
      %2524 = vmatpush1.msra.mxu0 0.0
      %2525 = vmatprep.subr.mxu0 0.0
      %2526 = vmatpush1.msra.mxu0 0.0
      %2527 = vmatprep.subr.mxu0 0.0
      %2528 = vmatpush1.msra.mxu0 0.0
      %2529 = vmatprep.subr.mxu0 0.0
      %2530 = vmatpush1.msra.mxu0 0.0
      %2531 = vmatprep.subr.mxu0 0.0
      %2532 = vmatpush1.msra.mxu0 0.0
      %2533 = vmatprep.subr.mxu0 0.0
      %2534 = vmatpush1.msra.mxu0 0.0
      %2535 = vmatprep.subr.mxu0 0.0
      %2536 = vmatpush1.msra.mxu0 0.0
      %2537 = vmatprep.subr.mxu0 0.0
      %2538 = vmatpush1.msra.mxu0 0.0
      %2539 = vmatprep.subr.mxu0 0.0
      %2540 = vmatpush1.msra.mxu0 0.0
      %2541 = vmatprep.subr.mxu0 0.0
      %2542 = vmatpush1.msra.mxu0 0.0
      %2543 = vmatprep.subr.mxu0 0.0
      %2544 = vmatpush1.msra.mxu0 0.0
      %2545 = vmatprep.subr.mxu0 0.0
      %2546 = vmatpush1.msra.mxu0 %v2504
      %2547 = vmatprep.subr.mxu0 0.0
      %2548 = vmatpush1.msra.mxu0 %v2503
      %2549 = vmatprep.subr.mxu0 0.0
      %2550 = vmatpush2.msra.mxu0 0.0
      %2551 = vmatprep.subr.mxu0 0.0
      %2552 = vmatpush2.msra.mxu0 0.0
      %2553 = vmatprep.subr.mxu0 0.0
      %2554 = vmatpush2.msra.mxu0 0.0
      %2555 = vmatprep.subr.mxu0 0.0
      %2556 = vmatpush2.msra.mxu0 0.0
      %2557 = vmatprep.subr.mxu0 0.0
      %2558 = vmatpush2.msra.mxu0 0.0
      %2559 = vmatprep.subr.mxu0 0.0
      %2560 = vmatpush2.msra.mxu0 0.0
      %2561 = vmatprep.subr.mxu0 0.0
      %2562 = vmatpush2.msra.mxu0 0.0
      %2563 = vmatprep.subr.mxu0 0.0
      %2564 = vmatpush2.msra.mxu0 0.0
      %2565 = vmatprep.subr.mxu0 0.0
      %2566 = vmatpush2.msra.mxu0 0.0
      %2567 = vmatprep.subr.mxu0 0.0
      %2568 = vmatpush2.msra.mxu0 0.0
      %2569 = vmatprep.subr.mxu0 0.0
      %2570 = vmatpush2.msra.mxu0 0.0
      %2571 = vmatprep.subr.mxu0 0.0
      %2572 = vmatpush2.msra.mxu0 0.0
      %2573 = vmatprep.subr.mxu0 0.0
      %2574 = vmatpush2.msra.mxu0 0.0
      %2575 = vmatprep.subr.mxu0 0.0
      %2576 = vmatpush2.msra.mxu0 0.0
      %2577 = vmatprep.subr.mxu0 0.0
      %2578 = vmatpush2.msra.mxu0 0.0
      %2579 = vmatprep.subr.mxu0 0.0
      %2580 = vmatpush2.msra.mxu0 0.0
      %2581 = vmatprep.mubr.f32.mxu0 0.0
      %2582 = vmatmul.mubr.f32.gmra.mxu0 %v2506
      %v2583 = vpop.f32.mrf.mxu0
      %v2584 = vadd.f32 0.0, %v2583
      %v2585 = vpop.f32.mrf.mxu0
      %2586 = vmatprep.mubr.f32.mxu0 0.0
      %2587 = vmatmul.mubr.f32.gmra.mxu0 %v2509
      %v2588 = vpop.f32.mrf.mxu0
      %v2589 = vadd.f32 0.0, %v2588
      %v2590 = vpop.f32.mrf.mxu0
      %2591 = vmatprep.mubr.f32.mxu0 0.0
      %2592 = vmatmul.mubr.f32.gmra.mxu0 %v2512
      %v2593 = vpop.f32.mrf.mxu0
      %v2594 = vadd.f32 0.0, %v2593
      %v2595 = vpop.f32.mrf.mxu0
      %2596 = vmatprep.mubr.f32.mxu0 0.0
      %2597 = vmatmul.mubr.f32.gmra.mxu0 %v2515
      %v2598 = vpop.f32.mrf.mxu0
      %v2599 = vadd.f32 0.0, %v2598
      %v2600 = vpop.f32.mrf.mxu0
      %2601 = vdwg.mxu0
      %s2602 = scalar_lea.vmem %s11, 1
      %v2603 = vld [vmem:[%s2602] sm:$0x1]
      %v2605 = vlaneseq
      %v2606 = vshrl.u32 %v2605, 7
      %v2607 = vsub.s32 0, %v2606
      %v2608 = vrot.slane %v2603, %v2607
      %2609 = vrot.lane.b32.xlu0 %v2608, 96
      %v2610 = vpop.permute.xlu0 %2609
      %v2612 = vadd.f32 %v2584, %v2610
      %v2613 = vadd.f32 %v2589, %v2610
      %v2614 = vadd.f32 %v2594, %v2610
      %v2615 = vadd.f32 %v2599, %v2610
      %v2616 = vmax.f32 %v2612, 0.0
      %v2617 = vmax.f32 %v2613, 0.0
      %v2618 = vmax.f32 %v2614, 0.0
      %v2619 = vmax.f32 %v2615, 0.0
      %vm2620 = vcmp.ne.f32.partialorder %v2612, %v2612
      %vm2621 = vcmp.ne.f32.partialorder %v2613, %v2613
      %vm2622 = vcmp.ne.f32.partialorder %v2614, %v2614
      %vm2623 = vcmp.ne.f32.partialorder %v2615, %v2615
      %v2624 = vadd.f32 %v2612, 0.0
      %v2625 = vadd.f32 %v2613, 0.0
      %v2626 = vadd.f32 %v2614, 0.0
      %v2627 = vadd.f32 %v2615, 0.0
      %v2628 = vand.u32 2147483647, %v2612
      %v2629 = vand.u32 2147483647, %v2613
      %v2630 = vand.u32 2147483647, %v2614
      %v2631 = vand.u32 2147483647, %v2615
      %v2632 = vsub.f32 0.0, %v2628
      %v2633 = vsub.f32 0.0, %v2629
      %v2634 = vsub.f32 0.0, %v2630
      %v2635 = vsub.f32 0.0, %v2631
      %v2636 = vmul.f32 %v2632, 1.442695
      %v2637 = vpow.pop %v2636
      %v2638 = vmul.f32 %v2633, 1.442695
      %v2639 = vpow.pop %v2638
      %v2640 = vmul.f32 %v2634, 1.442695
      %v2641 = vpow.pop %v2640
      %v2642 = vmul.f32 %v2635, 1.442695
      %v2643 = vpow.pop %v2642
      %v2644 = vadd.f32 %v2637, 1.0
      %v2645 = vlog2.pop %v2644
      %v2646 = vmul.f32 %v2645, 0.6931472
      %v2647 = vmul.f32 -0.5, %v2637
      %v2648 = vadd.f32 %v2647, 1.0
      %v2649 = vmul.f32 %v2648, %v2637
      %v2650 = vand.u32 2147483647, %v2637
      %vm2651 = vcmp.lt.f32.partialorder %v2650, 0.0004427343
      %v2652 = vsel %vm2651, %v2649, %v2646
      %v2653 = vadd.f32 %v2639, 1.0
      %v2654 = vlog2.pop %v2653
      %v2655 = vmul.f32 %v2654, 0.6931472
      %v2656 = vmul.f32 -0.5, %v2639
      %v2657 = vadd.f32 %v2656, 1.0
      %v2658 = vmul.f32 %v2657, %v2639
      %v2659 = vand.u32 2147483647, %v2639
      %vm2660 = vcmp.lt.f32.partialorder %v2659, 0.0004427343
      %v2661 = vsel %vm2660, %v2658, %v2655
      %v2662 = vadd.f32 %v2641, 1.0
      %v2663 = vlog2.pop %v2662
      %v2664 = vmul.f32 %v2663, 0.6931472
      %v2665 = vmul.f32 -0.5, %v2641
      %v2666 = vadd.f32 %v2665, 1.0
      %v2667 = vmul.f32 %v2666, %v2641
      %v2668 = vand.u32 2147483647, %v2641
      %vm2669 = vcmp.lt.f32.partialorder %v2668, 0.0004427343
      %v2670 = vsel %vm2669, %v2667, %v2664
      %v2671 = vadd.f32 %v2643, 1.0
      %v2672 = vlog2.pop %v2671
      %v2673 = vmul.f32 %v2672, 0.6931472
      %v2674 = vmul.f32 -0.5, %v2643
      %v2675 = vadd.f32 %v2674, 1.0
      %v2676 = vmul.f32 %v2675, %v2643
      %v2677 = vand.u32 2147483647, %v2643
      %vm2678 = vcmp.lt.f32.partialorder %v2677, 0.0004427343
      %v2679 = vsel %vm2678, %v2676, %v2673
      %v2680 = vadd.f32 %v2616, %v2652
      %v2681 = vadd.f32 %v2617, %v2661
      %v2682 = vadd.f32 %v2618, %v2670
      %v2683 = vadd.f32 %v2619, %v2679
      %v2684 = vsel %vm2620, %v2624, %v2680
      %v2685 = vsel %vm2621, %v2625, %v2681
      %v2686 = vsel %vm2622, %v2626, %v2682
      %v2687 = vsel %vm2623, %v2627, %v2683
      %s2688 = scalar_lea.vmem %s9, 4
      %v2689 = vld [vmem:[%s2688] sm:$0xf]
      %v2690 = vlaneseq
      %v2691 = vshrl.u32 %v2690, 7
      %v2692 = vsub.s32 3, %v2691
      %v2693 = vrot.slane %v2689, %v2692
      %2695 = vrot.lane.b32.xlu0 %v2693, 32
      %v2696 = vpop.permute.xlu0 %2695
      %v2698 = vmul.f32 %v2584, %v2696
      %v2699 = vmul.f32 %v2589, %v2696
      %v2700 = vmul.f32 %v2594, %v2696
      %v2701 = vmul.f32 %v2599, %v2696
      %s2702 = scalar_lea.vmem %s10, 1
      %v2703 = vld [vmem:[%s2702] sm:$0x1]
      %v2705 = vlaneseq
      %v2706 = vshrl.u32 %v2705, 7
      %v2707 = vsub.s32 0, %v2706
      %v2708 = vrot.slane %v2703, %v2707
      %2709 = vrot.lane.b32.xlu0 %v2708, 32
      %v2710 = vpop.permute.xlu0 %2709
      %v2712 = vadd.f32 %v2698, %v2710
      %v2713 = vadd.f32 %v2699, %v2710
      %v2714 = vadd.f32 %v2700, %v2710
      %v2715 = vadd.f32 %v2701, %v2710
      %2720 = vrot.lane.b32.xlu0 %v2584, 96
      %v2721 = vpop.permute.xlu0 %2720
      %2722 = vrot.lane.b32.xlu0 %v2589, 96
      %v2723 = vpop.permute.xlu0 %2722
      %2724 = vrot.lane.b32.xlu0 %v2594, 96
      %v2725 = vpop.permute.xlu0 %2724
      %2726 = vrot.lane.b32.xlu0 %v2599, 96
      %v2727 = vpop.permute.xlu0 %2726
      %2732 = vmatprep.subr.mxu0 0.0
      %2733 = vmatpush1.msra.mxu0 0.0
      %2734 = vmatprep.subr.mxu0 0.0
      %2735 = vmatpush1.msra.mxu0 0.0
      %2736 = vmatprep.subr.mxu0 0.0
      %2737 = vmatpush1.msra.mxu0 0.0
      %2738 = vmatprep.subr.mxu0 0.0
      %2739 = vmatpush1.msra.mxu0 0.0
      %2740 = vmatprep.subr.mxu0 0.0
      %2741 = vmatpush1.msra.mxu0 0.0
      %2742 = vmatprep.subr.mxu0 0.0
      %2743 = vmatpush1.msra.mxu0 0.0
      %2744 = vmatprep.subr.mxu0 0.0
      %2745 = vmatpush1.msra.mxu0 0.0
      %2746 = vmatprep.subr.mxu0 0.0
      %2747 = vmatpush1.msra.mxu0 0.0
      %2748 = vmatprep.subr.mxu0 0.0
      %2749 = vmatpush1.msra.mxu0 0.0
      %2750 = vmatprep.subr.mxu0 0.0
      %2751 = vmatpush1.msra.mxu0 0.0
      %2752 = vmatprep.subr.mxu0 0.0
      %2753 = vmatpush1.msra.mxu0 0.0
      %2754 = vmatprep.subr.mxu0 0.0
      %2755 = vmatpush1.msra.mxu0 0.0
      %2756 = vmatprep.subr.mxu0 0.0
      %2757 = vmatpush1.msra.mxu0 %v2727
      %2758 = vmatprep.subr.mxu0 0.0
      %2759 = vmatpush1.msra.mxu0 %v2725
      %2760 = vmatprep.subr.mxu0 0.0
      %2761 = vmatpush1.msra.mxu0 %v2723
      %2762 = vmatprep.subr.mxu0 0.0
      %2763 = vmatpush1.msra.mxu0 %v2721
      %2764 = vmatprep.subr.mxu0 0.0
      %2765 = vmatpush2.msra.mxu0 0.0
      %2766 = vmatprep.subr.mxu0 0.0
      %2767 = vmatpush2.msra.mxu0 0.0
      %2768 = vmatprep.subr.mxu0 0.0
      %2769 = vmatpush2.msra.mxu0 0.0
      %2770 = vmatprep.subr.mxu0 0.0
      %2771 = vmatpush2.msra.mxu0 0.0
      %2772 = vmatprep.subr.mxu0 0.0
      %2773 = vmatpush2.msra.mxu0 0.0
      %2774 = vmatprep.subr.mxu0 0.0
      %2775 = vmatpush2.msra.mxu0 0.0
      %2776 = vmatprep.subr.mxu0 0.0
      %2777 = vmatpush2.msra.mxu0 0.0
      %2778 = vmatprep.subr.mxu0 0.0
      %2779 = vmatpush2.msra.mxu0 0.0
      %2780 = vmatprep.subr.mxu0 0.0
      %2781 = vmatpush2.msra.mxu0 0.0
      %2782 = vmatprep.subr.mxu0 0.0
      %2783 = vmatpush2.msra.mxu0 0.0
      %2784 = vmatprep.subr.mxu0 0.0
      %2785 = vmatpush2.msra.mxu0 0.0
      %2786 = vmatprep.subr.mxu0 0.0
      %2787 = vmatpush2.msra.mxu0 0.0
      %2788 = vmatprep.subr.mxu0 0.0
      %2789 = vmatpush2.msra.mxu0 0.0
      %2790 = vmatprep.subr.mxu0 0.0
      %2791 = vmatpush2.msra.mxu0 0.0
      %2792 = vmatprep.subr.mxu0 0.0
      %2793 = vmatpush2.msra.mxu0 0.0
      %2794 = vmatprep.subr.mxu0 0.0
      %2795 = vmatpush2.msra.mxu0 0.0
      %2796 = vmatprep.mubr.f32.mxu0 0.0
      %2797 = vmatmul.mubr.f32.gmra.mxu0 %v1430
      %v2798 = vpop.f32.mrf.mxu0
      %v2799 = vadd.f32 0.0, %v2798
      %v2800 = vpop.f32.mrf.mxu0
      %2801 = vmatprep.mubr.f32.mxu0 0.0
      %2802 = vmatmul.mubr.f32.gmra.mxu0 %v1433
      %v2803 = vpop.f32.mrf.mxu0
      %v2804 = vadd.f32 0.0, %v2803
      %v2805 = vpop.f32.mrf.mxu0
      %2806 = vmatprep.mubr.f32.mxu0 0.0
      %2807 = vmatmul.mubr.f32.gmra.mxu0 %v1436
      %v2808 = vpop.f32.mrf.mxu0
      %v2809 = vadd.f32 0.0, %v2808
      %v2810 = vpop.f32.mrf.mxu0
      %2811 = vmatprep.mubr.f32.mxu0 0.0
      %2812 = vmatmul.mubr.f32.gmra.mxu0 %v1439
      %v2813 = vpop.f32.mrf.mxu0
      %v2814 = vadd.f32 0.0, %v2813
      %v2815 = vpop.f32.mrf.mxu0
      %2816 = vdwg.mxu0
      %v2817 = vlaneseq
      %v2818 = vshrl.u32 %v2817, 7
      %v2819 = vsub.s32 2, %v2818
      %v2820 = vrot.slane %v2689, %v2819
      %v2821 = vmul.f32 %v2799, %v2820
      %v2822 = vmul.f32 %v2804, %v2820
      %v2823 = vmul.f32 %v2809, %v2820
      %v2824 = vmul.f32 %v2814, %v2820
      %2829 = vrot.lane.b32.xlu0 %v2821, 32
      %v2830 = vpop.permute.xlu0 %2829
      %2831 = vrot.lane.b32.xlu0 %v2822, 32
      %v2832 = vpop.permute.xlu0 %2831
      %2833 = vrot.lane.b32.xlu0 %v2823, 32
      %v2834 = vpop.permute.xlu0 %2833
      %2835 = vrot.lane.b32.xlu0 %v2824, 32
      %v2836 = vpop.permute.xlu0 %2835
      %v2841 = vadd.f32 %v2712, %v2830
      %v2842 = vadd.f32 %v2713, %v2832
      %v2843 = vadd.f32 %v2714, %v2834
      %v2844 = vadd.f32 %v2715, %v2836
      %2845 = vmatprep.subr.mxu0 0.0
      %2846 = vmatpush1.msra.mxu0 0.0
      %2847 = vmatprep.subr.mxu0 0.0
      %2848 = vmatpush1.msra.mxu0 0.0
      %2849 = vmatprep.subr.mxu0 0.0
      %2850 = vmatpush1.msra.mxu0 0.0
      %2851 = vmatprep.subr.mxu0 0.0
      %2852 = vmatpush1.msra.mxu0 0.0
      %2853 = vmatprep.subr.mxu0 0.0
      %2854 = vmatpush1.msra.mxu0 0.0
      %2855 = vmatprep.subr.mxu0 0.0
      %2856 = vmatpush1.msra.mxu0 0.0
      %2857 = vmatprep.subr.mxu0 0.0
      %2858 = vmatpush1.msra.mxu0 0.0
      %2859 = vmatprep.subr.mxu0 0.0
      %2860 = vmatpush1.msra.mxu0 0.0
      %2861 = vmatprep.subr.mxu0 0.0
      %2862 = vmatpush1.msra.mxu0 0.0
      %2863 = vmatprep.subr.mxu0 0.0
      %2864 = vmatpush1.msra.mxu0 0.0
      %2865 = vmatprep.subr.mxu0 0.0
      %2866 = vmatpush1.msra.mxu0 0.0
      %2867 = vmatprep.subr.mxu0 0.0
      %2868 = vmatpush1.msra.mxu0 0.0
      %2869 = vmatprep.subr.mxu0 0.0
      %2870 = vmatpush1.msra.mxu0 %v2727
      %2871 = vmatprep.subr.mxu0 0.0
      %2872 = vmatpush1.msra.mxu0 %v2725
      %2873 = vmatprep.subr.mxu0 0.0
      %2874 = vmatpush1.msra.mxu0 %v2723
      %2875 = vmatprep.subr.mxu0 0.0
      %2876 = vmatpush1.msra.mxu0 %v2721
      %2877 = vmatprep.subr.mxu0 0.0
      %2878 = vmatpush2.msra.mxu0 0.0
      %2879 = vmatprep.subr.mxu0 0.0
      %2880 = vmatpush2.msra.mxu0 0.0
      %2881 = vmatprep.subr.mxu0 0.0
      %2882 = vmatpush2.msra.mxu0 0.0
      %2883 = vmatprep.subr.mxu0 0.0
      %2884 = vmatpush2.msra.mxu0 0.0
      %2885 = vmatprep.subr.mxu0 0.0
      %2886 = vmatpush2.msra.mxu0 0.0
      %2887 = vmatprep.subr.mxu0 0.0
      %2888 = vmatpush2.msra.mxu0 0.0
      %2889 = vmatprep.subr.mxu0 0.0
      %2890 = vmatpush2.msra.mxu0 0.0
      %2891 = vmatprep.subr.mxu0 0.0
      %2892 = vmatpush2.msra.mxu0 0.0
      %2893 = vmatprep.subr.mxu0 0.0
      %2894 = vmatpush2.msra.mxu0 0.0
      %2895 = vmatprep.subr.mxu0 0.0
      %2896 = vmatpush2.msra.mxu0 0.0
      %2897 = vmatprep.subr.mxu0 0.0
      %2898 = vmatpush2.msra.mxu0 0.0
      %2899 = vmatprep.subr.mxu0 0.0
      %2900 = vmatpush2.msra.mxu0 0.0
      %2901 = vmatprep.subr.mxu0 0.0
      %2902 = vmatpush2.msra.mxu0 0.0
      %2903 = vmatprep.subr.mxu0 0.0
      %2904 = vmatpush2.msra.mxu0 0.0
      %2905 = vmatprep.subr.mxu0 0.0
      %2906 = vmatpush2.msra.mxu0 0.0
      %2907 = vmatprep.subr.mxu0 0.0
      %2908 = vmatpush2.msra.mxu0 0.0
      %2909 = vmatprep.mubr.f32.mxu0 0.0
      %2910 = vmatmul.mubr.f32.gmra.mxu0 %v1560
      %v2911 = vpop.f32.mrf.mxu0
      %v2912 = vadd.f32 0.0, %v2911
      %v2913 = vpop.f32.mrf.mxu0
      %2914 = vmatprep.mubr.f32.mxu0 0.0
      %2915 = vmatmul.mubr.f32.gmra.mxu0 %v1563
      %v2916 = vpop.f32.mrf.mxu0
      %v2917 = vadd.f32 0.0, %v2916
      %v2918 = vpop.f32.mrf.mxu0
      %2919 = vmatprep.mubr.f32.mxu0 0.0
      %2920 = vmatmul.mubr.f32.gmra.mxu0 %v1566
      %v2921 = vpop.f32.mrf.mxu0
      %v2922 = vadd.f32 0.0, %v2921
      %v2923 = vpop.f32.mrf.mxu0
      %2924 = vmatprep.mubr.f32.mxu0 0.0
      %2925 = vmatmul.mubr.f32.gmra.mxu0 %v1569
      %v2926 = vpop.f32.mrf.mxu0
      %v2927 = vadd.f32 0.0, %v2926
      %v2928 = vpop.f32.mrf.mxu0
      %2929 = vdwg.mxu0
      %v2930 = vlaneseq
      %v2931 = vshrl.u32 %v2930, 7
      %v2932 = vsub.s32 1, %v2931
      %v2933 = vrot.slane %v2689, %v2932
      %v2934 = vmul.f32 %v2912, %v2933
      %v2935 = vmul.f32 %v2917, %v2933
      %v2936 = vmul.f32 %v2922, %v2933
      %v2937 = vmul.f32 %v2927, %v2933
      %2942 = vrot.lane.b32.xlu0 %v2934, 32
      %v2943 = vpop.permute.xlu0 %2942
      %2944 = vrot.lane.b32.xlu0 %v2935, 32
      %v2945 = vpop.permute.xlu0 %2944
      %2946 = vrot.lane.b32.xlu0 %v2936, 32
      %v2947 = vpop.permute.xlu0 %2946
      %2948 = vrot.lane.b32.xlu0 %v2937, 32
      %v2949 = vpop.permute.xlu0 %2948
      %v2954 = vadd.f32 %v2841, %v2943
      %v2955 = vadd.f32 %v2842, %v2945
      %v2956 = vadd.f32 %v2843, %v2947
      %v2957 = vadd.f32 %v2844, %v2949
      %2958 = vmatprep.subr.mxu0 0.0
      %2959 = vmatpush1.msra.mxu0 0.0
      %2960 = vmatprep.subr.mxu0 0.0
      %2961 = vmatpush1.msra.mxu0 0.0
      %2962 = vmatprep.subr.mxu0 0.0
      %2963 = vmatpush1.msra.mxu0 0.0
      %2964 = vmatprep.subr.mxu0 0.0
      %2965 = vmatpush1.msra.mxu0 0.0
      %2966 = vmatprep.subr.mxu0 0.0
      %2967 = vmatpush1.msra.mxu0 0.0
      %2968 = vmatprep.subr.mxu0 0.0
      %2969 = vmatpush1.msra.mxu0 0.0
      %2970 = vmatprep.subr.mxu0 0.0
      %2971 = vmatpush1.msra.mxu0 0.0
      %2972 = vmatprep.subr.mxu0 0.0
      %2973 = vmatpush1.msra.mxu0 0.0
      %2974 = vmatprep.subr.mxu0 0.0
      %2975 = vmatpush1.msra.mxu0 0.0
      %2976 = vmatprep.subr.mxu0 0.0
      %2977 = vmatpush1.msra.mxu0 0.0
      %2978 = vmatprep.subr.mxu0 0.0
      %2979 = vmatpush1.msra.mxu0 0.0
      %2980 = vmatprep.subr.mxu0 0.0
      %2981 = vmatpush1.msra.mxu0 0.0
      %2982 = vmatprep.subr.mxu0 0.0
      %2983 = vmatpush1.msra.mxu0 %v2727
      %2984 = vmatprep.subr.mxu0 0.0
      %2985 = vmatpush1.msra.mxu0 %v2725
      %2986 = vmatprep.subr.mxu0 0.0
      %2987 = vmatpush1.msra.mxu0 %v2723
      %2988 = vmatprep.subr.mxu0 0.0
      %2989 = vmatpush1.msra.mxu0 %v2721
      %2990 = vmatprep.subr.mxu0 0.0
      %2991 = vmatpush2.msra.mxu0 0.0
      %2992 = vmatprep.subr.mxu0 0.0
      %2993 = vmatpush2.msra.mxu0 0.0
      %2994 = vmatprep.subr.mxu0 0.0
      %2995 = vmatpush2.msra.mxu0 0.0
      %2996 = vmatprep.subr.mxu0 0.0
      %2997 = vmatpush2.msra.mxu0 0.0
      %2998 = vmatprep.subr.mxu0 0.0
      %2999 = vmatpush2.msra.mxu0 0.0
      %3000 = vmatprep.subr.mxu0 0.0
      %3001 = vmatpush2.msra.mxu0 0.0
      %3002 = vmatprep.subr.mxu0 0.0
      %3003 = vmatpush2.msra.mxu0 0.0
      %3004 = vmatprep.subr.mxu0 0.0
      %3005 = vmatpush2.msra.mxu0 0.0
      %3006 = vmatprep.subr.mxu0 0.0
      %3007 = vmatpush2.msra.mxu0 0.0
      %3008 = vmatprep.subr.mxu0 0.0
      %3009 = vmatpush2.msra.mxu0 0.0
      %3010 = vmatprep.subr.mxu0 0.0
      %3011 = vmatpush2.msra.mxu0 0.0
      %3012 = vmatprep.subr.mxu0 0.0
      %3013 = vmatpush2.msra.mxu0 0.0
      %3014 = vmatprep.subr.mxu0 0.0
      %3015 = vmatpush2.msra.mxu0 0.0
      %3016 = vmatprep.subr.mxu0 0.0
      %3017 = vmatpush2.msra.mxu0 0.0
      %3018 = vmatprep.subr.mxu0 0.0
      %3019 = vmatpush2.msra.mxu0 0.0
      %3020 = vmatprep.subr.mxu0 0.0
      %3021 = vmatpush2.msra.mxu0 0.0
      %3022 = vmatprep.mubr.f32.mxu0 0.0
      %3023 = vmatmul.mubr.f32.gmra.mxu0 %v1690
      %v3024 = vpop.f32.mrf.mxu0
      %v3025 = vadd.f32 0.0, %v3024
      %v3026 = vpop.f32.mrf.mxu0
      %3027 = vmatprep.mubr.f32.mxu0 0.0
      %3028 = vmatmul.mubr.f32.gmra.mxu0 %v1693
      %v3029 = vpop.f32.mrf.mxu0
      %v3030 = vadd.f32 0.0, %v3029
      %v3031 = vpop.f32.mrf.mxu0
      %3032 = vmatprep.mubr.f32.mxu0 0.0
      %3033 = vmatmul.mubr.f32.gmra.mxu0 %v1696
      %v3034 = vpop.f32.mrf.mxu0
      %v3035 = vadd.f32 0.0, %v3034
      %v3036 = vpop.f32.mrf.mxu0
      %3037 = vmatprep.mubr.f32.mxu0 0.0
      %3038 = vmatmul.mubr.f32.gmra.mxu0 %v1699
      %v3039 = vpop.f32.mrf.mxu0
      %v3040 = vadd.f32 0.0, %v3039
      %v3041 = vpop.f32.mrf.mxu0
      %3042 = vdwg.mxu0
      %v3043 = vlaneseq
      %v3044 = vshrl.u32 %v3043, 7
      %v3045 = vsub.s32 0, %v3044
      %v3046 = vrot.slane %v2689, %v3045
      %v3047 = vmul.f32 %v3025, %v3046
      %v3048 = vmul.f32 %v3030, %v3046
      %v3049 = vmul.f32 %v3035, %v3046
      %v3050 = vmul.f32 %v3040, %v3046
      %3055 = vrot.lane.b32.xlu0 %v3047, 32
      %v3056 = vpop.permute.xlu0 %3055
      %3057 = vrot.lane.b32.xlu0 %v3048, 32
      %v3058 = vpop.permute.xlu0 %3057
      %3059 = vrot.lane.b32.xlu0 %v3049, 32
      %v3060 = vpop.permute.xlu0 %3059
      %3061 = vrot.lane.b32.xlu0 %v3050, 32
      %v3062 = vpop.permute.xlu0 %3061
      %v3067 = vadd.f32 %v2954, %v3056
      %v3068 = vadd.f32 %v2955, %v3058
      %v3069 = vadd.f32 %v2956, %v3060
      %v3070 = vadd.f32 %v2957, %v3062
      %v3071 = vxor.u32 %v3067, 2147483648
      %v3072 = vxor.u32 %v3068, 2147483648
      %v3073 = vxor.u32 %v3069, 2147483648
      %v3074 = vxor.u32 %v3070, 2147483648
      %v3075 = vmul.f32 %v3071, 1.442695
      %v3076 = vpow.pop %v3075
      %v3077 = vmul.f32 %v3072, 1.442695
      %v3078 = vpow.pop %v3077
      %v3079 = vmul.f32 %v3073, 1.442695
      %v3080 = vpow.pop %v3079
      %v3081 = vmul.f32 %v3074, 1.442695
      %v3082 = vpow.pop %v3081
      %v3083 = vadd.f32 %v3076, 1.0
      %v3084 = vadd.f32 %v3078, 1.0
      %v3085 = vadd.f32 %v3080, 1.0
      %v3086 = vadd.f32 %v3082, 1.0
      %v3087 = vrcp.pop %v3083
      %v3088 = vmul.f32 1.0, %v3087
      %v3089 = vrcp.pop %v3084
      %v3090 = vmul.f32 1.0, %v3089
      %v3091 = vrcp.pop %v3085
      %v3092 = vmul.f32 1.0, %v3091
      %v3093 = vrcp.pop %v3086
      %v3094 = vmul.f32 1.0, %v3093
      %v3095 = vmul.f32 %v3067, %v3088
      %v3096 = vmul.f32 %v3068, %v3090
      %v3097 = vmul.f32 %v3069, %v3092
      %v3098 = vmul.f32 %v3070, %v3094
      %3103 = vrot.lane.b32.xlu0 %v2684, 64
      %v3104 = vpop.permute.xlu0 %3103
      %3105 = vrot.lane.b32.xlu0 %v2685, 64
      %v3106 = vpop.permute.xlu0 %3105
      %3107 = vrot.lane.b32.xlu0 %v2686, 64
      %v3108 = vpop.permute.xlu0 %3107
      %3109 = vrot.lane.b32.xlu0 %v2687, 64
      %v3110 = vpop.permute.xlu0 %3109
      %v3115 = vmul.f32 %v3095, %v3104
      %v3116 = vmul.f32 %v3096, %v3106
      %v3117 = vmul.f32 %v3097, %v3108
      %v3118 = vmul.f32 %v3098, %v3110
      %s3119 = scalar_lea.vmem %s12, 1
      %v3120 = vld [vmem:[%s3119] sm:$0x1]
      %v3122 = vlaneseq
      %v3123 = vshrl.u32 %v3122, 7
      %v3124 = vsub.s32 0, %v3123
      %v3125 = vrot.slane %v3120, %v3124
      %3127 = vrot.lane.b32.xlu0 %v2684, 32
      %v3128 = vpop.permute.xlu0 %3127
      %3129 = vrot.lane.b32.xlu0 %v2685, 32
      %v3130 = vpop.permute.xlu0 %3129
      %3131 = vrot.lane.b32.xlu0 %v2686, 32
      %v3132 = vpop.permute.xlu0 %3131
      %3133 = vrot.lane.b32.xlu0 %v2687, 32
      %v3134 = vpop.permute.xlu0 %3133
      %v3139 = vmul.f32 %v3125, %v3128
      %v3140 = vmul.f32 %v3125, %v3130
      %v3141 = vmul.f32 %v3125, %v3132
      %v3142 = vmul.f32 %v3125, %v3134
      %3143 = vmatprep.subr.mxu0 0.0
      %3144 = vmatpush1.msra.mxu0 0.0
      %3145 = vmatprep.subr.mxu0 0.0
      %3146 = vmatpush1.msra.mxu0 0.0
      %3147 = vmatprep.subr.mxu0 0.0
      %3148 = vmatpush1.msra.mxu0 0.0
      %3149 = vmatprep.subr.mxu0 0.0
      %3150 = vmatpush1.msra.mxu0 0.0
      %3151 = vmatprep.subr.mxu0 0.0
      %3152 = vmatpush1.msra.mxu0 0.0
      %3153 = vmatprep.subr.mxu0 0.0
      %3154 = vmatpush1.msra.mxu0 0.0
      %3155 = vmatprep.subr.mxu0 0.0
      %3156 = vmatpush1.msra.mxu0 0.0
      %3157 = vmatprep.subr.mxu0 0.0
      %3158 = vmatpush1.msra.mxu0 0.0
      %3159 = vmatprep.subr.mxu0 0.0
      %3160 = vmatpush1.msra.mxu0 0.0
      %3161 = vmatprep.subr.mxu0 0.0
      %3162 = vmatpush1.msra.mxu0 0.0
      %3163 = vmatprep.subr.mxu0 0.0
      %3164 = vmatpush1.msra.mxu0 0.0
      %3165 = vmatprep.subr.mxu0 0.0
      %3166 = vmatpush1.msra.mxu0 0.0
      %3167 = vmatprep.subr.mxu0 0.0
      %3168 = vmatpush1.msra.mxu0 %v3142
      %3169 = vmatprep.subr.mxu0 0.0
      %3170 = vmatpush1.msra.mxu0 %v3141
      %3171 = vmatprep.subr.mxu0 0.0
      %3172 = vmatpush1.msra.mxu0 %v3140
      %3173 = vmatprep.subr.mxu0 0.0
      %3174 = vmatpush1.msra.mxu0 %v3139
      %3175 = vmatprep.subr.mxu0 0.0
      %3176 = vmatpush2.msra.mxu0 0.0
      %3177 = vmatprep.subr.mxu0 0.0
      %3178 = vmatpush2.msra.mxu0 0.0
      %3179 = vmatprep.subr.mxu0 0.0
      %3180 = vmatpush2.msra.mxu0 0.0
      %3181 = vmatprep.subr.mxu0 0.0
      %3182 = vmatpush2.msra.mxu0 0.0
      %3183 = vmatprep.subr.mxu0 0.0
      %3184 = vmatpush2.msra.mxu0 0.0
      %3185 = vmatprep.subr.mxu0 0.0
      %3186 = vmatpush2.msra.mxu0 0.0
      %3187 = vmatprep.subr.mxu0 0.0
      %3188 = vmatpush2.msra.mxu0 0.0
      %3189 = vmatprep.subr.mxu0 0.0
      %3190 = vmatpush2.msra.mxu0 0.0
      %3191 = vmatprep.subr.mxu0 0.0
      %3192 = vmatpush2.msra.mxu0 0.0
      %3193 = vmatprep.subr.mxu0 0.0
      %3194 = vmatpush2.msra.mxu0 0.0
      %3195 = vmatprep.subr.mxu0 0.0
      %3196 = vmatpush2.msra.mxu0 0.0
      %3197 = vmatprep.subr.mxu0 0.0
      %3198 = vmatpush2.msra.mxu0 0.0
      %3199 = vmatprep.subr.mxu0 0.0
      %3200 = vmatpush2.msra.mxu0 0.0
      %3201 = vmatprep.subr.mxu0 0.0
      %3202 = vmatpush2.msra.mxu0 0.0
      %3203 = vmatprep.subr.mxu0 0.0
      %3204 = vmatpush2.msra.mxu0 0.0
      %3205 = vmatprep.subr.mxu0 0.0
      %3206 = vmatpush2.msra.mxu0 0.0
      %3207 = vmatprep.mubr.f32.mxu0 0.0
      %3208 = vmatmul.mubr.f32.gmra.mxu0 %v1886
      %v3209 = vpop.f32.mrf.mxu0
      %v3210 = vadd.f32 0.0, %v3209
      %v3211 = vpop.f32.mrf.mxu0
      %3212 = vmatprep.mubr.f32.mxu0 0.0
      %3213 = vmatmul.mubr.f32.gmra.mxu0 %v1889
      %v3214 = vpop.f32.mrf.mxu0
      %v3215 = vadd.f32 0.0, %v3214
      %v3216 = vpop.f32.mrf.mxu0
      %3217 = vmatprep.mubr.f32.mxu0 0.0
      %3218 = vmatmul.mubr.f32.gmra.mxu0 %v1892
      %v3219 = vpop.f32.mrf.mxu0
      %v3220 = vadd.f32 0.0, %v3219
      %v3221 = vpop.f32.mrf.mxu0
      %3222 = vmatprep.mubr.f32.mxu0 0.0
      %3223 = vmatmul.mubr.f32.gmra.mxu0 %v1895
      %v3224 = vpop.f32.mrf.mxu0
      %v3225 = vadd.f32 0.0, %v3224
      %v3226 = vpop.f32.mrf.mxu0
      %3227 = vdwg.mxu0
      %v3228 = vmul.f32 %v3210, 1.442695
      %v3229 = vpow.pop %v3228
      %v3230 = vmul.f32 %v3215, 1.442695
      %v3231 = vpow.pop %v3230
      %v3232 = vmul.f32 %v3220, 1.442695
      %v3233 = vpow.pop %v3232
      %v3234 = vmul.f32 %v3225, 1.442695
      %v3235 = vpow.pop %v3234
      %v3236 = vsub.f32 0.0, %v3210
      %v3237 = vsub.f32 0.0, %v3215
      %v3238 = vsub.f32 0.0, %v3220
      %v3239 = vsub.f32 0.0, %v3225
      %v3240 = vmul.f32 %v3236, 1.442695
      %v3241 = vpow.pop %v3240
      %v3242 = vmul.f32 %v3237, 1.442695
      %v3243 = vpow.pop %v3242
      %v3244 = vmul.f32 %v3238, 1.442695
      %v3245 = vpow.pop %v3244
      %v3246 = vmul.f32 %v3239, 1.442695
      %v3247 = vpow.pop %v3246
      %3252 = vrot.lane.b32.xlu0 %v3095, 48
      %v3253 = vpop.permute.xlu0 %3252
      %3254 = vrot.lane.b32.xlu0 %v3096, 48
      %v3255 = vpop.permute.xlu0 %3254
      %3256 = vrot.lane.b32.xlu0 %v3097, 48
      %v3257 = vpop.permute.xlu0 %3256
      %3258 = vrot.lane.b32.xlu0 %v3098, 48
      %v3259 = vpop.permute.xlu0 %3258
      %3260 = vrot.lane.b32.xlu0 %v3095, 64
      %v3261 = vpop.permute.xlu0 %3260
      %3262 = vrot.lane.b32.xlu0 %v3096, 64
      %v3263 = vpop.permute.xlu0 %3262
      %3264 = vrot.lane.b32.xlu0 %v3097, 64
      %v3265 = vpop.permute.xlu0 %3264
      %3266 = vrot.lane.b32.xlu0 %v3098, 64
      %v3267 = vpop.permute.xlu0 %3266
      %v3268 = vsel %vm1157, %v3253, 0
      %v3270 = vsel %vm1157, %v3255, 0
      %v3272 = vsel %vm1157, %v3257, 0
      %v3274 = vsel %vm1157, %v3259, 0
      %v3276 = vsel %vm1157, %v3261, 0
      %v3278 = vsel %vm1157, %v3263, 0
      %v3280 = vsel %vm1157, %v3265, 0
      %v3282 = vsel %vm1157, %v3267, 0
      %3284 = vmatprep.subr.mxu0 0.0
      %3285 = vmatpush1.xpose.msra.mxu0 0.0
      %3286 = vmatprep.subr.mxu0 0.0
      %3287 = vmatpush1.xpose.msra.mxu0 0.0
      %3288 = vmatprep.subr.mxu0 0.0
      %3289 = vmatpush1.xpose.msra.mxu0 0.0
      %3290 = vmatprep.subr.mxu0 0.0
      %3291 = vmatpush1.xpose.msra.mxu0 0.0
      %3292 = vmatprep.subr.mxu0 0.0
      %3293 = vmatpush1.xpose.msra.mxu0 0.0
      %3294 = vmatprep.subr.mxu0 0.0
      %3295 = vmatpush1.xpose.msra.mxu0 0.0
      %3296 = vmatprep.subr.mxu0 0.0
      %3297 = vmatpush1.xpose.msra.mxu0 0.0
      %3298 = vmatprep.subr.mxu0 0.0
      %3299 = vmatpush1.xpose.msra.mxu0 0.0
      %3300 = vmatprep.subr.mxu0 0.0
      %3301 = vmatpush1.xpose.msra.mxu0 0.0
      %3302 = vmatprep.subr.mxu0 0.0
      %3303 = vmatpush1.xpose.msra.mxu0 0.0
      %3304 = vmatprep.subr.mxu0 0.0
      %3305 = vmatpush1.xpose.msra.mxu0 0.0
      %3306 = vmatprep.subr.mxu0 0.0
      %3307 = vmatpush1.xpose.msra.mxu0 0.0
      %3308 = vmatprep.subr.mxu0 0.0
      %3309 = vmatpush1.xpose.msra.mxu0 %v3282
      %3310 = vmatprep.subr.mxu0 0.0
      %3311 = vmatpush1.xpose.msra.mxu0 %v3280
      %3312 = vmatprep.subr.mxu0 0.0
      %3313 = vmatpush1.xpose.msra.mxu0 %v3278
      %3314 = vmatprep.subr.mxu0 0.0
      %3315 = vmatpush1.xpose.msra.mxu0 %v3276
      %3316 = vmatprep.subr.mxu0 0.0
      %3317 = vmatpush2.xpose.msra.mxu0 0.0
      %3318 = vmatprep.subr.mxu0 0.0
      %3319 = vmatpush2.xpose.msra.mxu0 0.0
      %3320 = vmatprep.subr.mxu0 0.0
      %3321 = vmatpush2.xpose.msra.mxu0 0.0
      %3322 = vmatprep.subr.mxu0 0.0
      %3323 = vmatpush2.xpose.msra.mxu0 0.0
      %3324 = vmatprep.subr.mxu0 0.0
      %3325 = vmatpush2.xpose.msra.mxu0 0.0
      %3326 = vmatprep.subr.mxu0 0.0
      %3327 = vmatpush2.xpose.msra.mxu0 0.0
      %3328 = vmatprep.subr.mxu0 0.0
      %3329 = vmatpush2.xpose.msra.mxu0 0.0
      %3330 = vmatprep.subr.mxu0 0.0
      %3331 = vmatpush2.xpose.msra.mxu0 0.0
      %3332 = vmatprep.subr.mxu0 0.0
      %3333 = vmatpush2.xpose.msra.mxu0 0.0
      %3334 = vmatprep.subr.mxu0 0.0
      %3335 = vmatpush2.xpose.msra.mxu0 0.0
      %3336 = vmatprep.subr.mxu0 0.0
      %3337 = vmatpush2.xpose.msra.mxu0 0.0
      %3338 = vmatprep.subr.mxu0 0.0
      %3339 = vmatpush2.xpose.msra.mxu0 0.0
      %3340 = vmatprep.subr.mxu0 0.0
      %3341 = vmatpush2.xpose.msra.mxu0 0.0
      %3342 = vmatprep.subr.mxu0 0.0
      %3343 = vmatpush2.xpose.msra.mxu0 0.0
      %3344 = vmatprep.subr.mxu0 0.0
      %3345 = vmatpush2.xpose.msra.mxu0 0.0
      %3346 = vmatprep.subr.mxu0 0.0
      %3347 = vmatpush2.xpose.msra.mxu0 0.0
      %3348 = vmatprep.mubr.f32.mxu0 0.0
      %3349 = vmatmul.mubr.f32.gmra.mxu0 %v3268
      %v3350 = vpop.f32.mrf.mxu0
      %v3351 = vadd.f32 0.0, %v3350
      %v3352 = vpop.f32.mrf.mxu0
      %3353 = vmatprep.mubr.f32.mxu0 0.0
      %3354 = vmatmul.mubr.f32.gmra.mxu0 %v3270
      %v3355 = vpop.f32.mrf.mxu0
      %v3356 = vadd.f32 0.0, %v3355
      %v3357 = vpop.f32.mrf.mxu0
      %3358 = vmatprep.mubr.f32.mxu0 0.0
      %3359 = vmatmul.mubr.f32.gmra.mxu0 %v3272
      %v3360 = vpop.f32.mrf.mxu0
      %v3361 = vadd.f32 0.0, %v3360
      %v3362 = vpop.f32.mrf.mxu0
      %3363 = vmatprep.mubr.f32.mxu0 0.0
      %3364 = vmatmul.mubr.f32.gmra.mxu0 %v3274
      %v3365 = vpop.f32.mrf.mxu0
      %v3366 = vadd.f32 0.0, %v3365
      %v3367 = vpop.f32.mrf.mxu0
      %3368 = vdwg.mxu0
      %v3369 = vsel %vm1149, %v3351, 0.0
      %v3370 = vsel %vm1150, %v3356, 0.0
      %v3371 = vsel %vm1151, %v3361, 0.0
      %v3372 = vsel %vm1152, %v3366, 0.0
      %3377 = vrot.lane.b32.xlu0 %v3115, 96
      %v3378 = vpop.permute.xlu0 %3377
      %3379 = vrot.lane.b32.xlu0 %v3116, 96
      %v3380 = vpop.permute.xlu0 %3379
      %3381 = vrot.lane.b32.xlu0 %v3117, 96
      %v3382 = vpop.permute.xlu0 %3381
      %3383 = vrot.lane.b32.xlu0 %v3118, 96
      %v3384 = vpop.permute.xlu0 %3383
      %v3389 = vmul.f32 %v3241, %v3378
      %v3390 = vmul.f32 %v3243, %v3380
      %v3391 = vmul.f32 %v3245, %v3382
      %v3392 = vmul.f32 %v3247, %v3384
      %v3394 = vsel %vm1428, %v3369, 0
      %v3397 = vsel %vm1428, %v3370, 0
      %v3400 = vsel %vm1428, %v3371, 0
      %v3403 = vsel %vm1428, %v3372, 0
      %3405 = vmatprep.subr.mxu0 0.0
      %3406 = vmatpush1.msra.mxu0 0.0
      %3407 = vmatprep.subr.mxu0 0.0
      %3408 = vmatpush1.msra.mxu0 0.0
      %3409 = vmatprep.subr.mxu0 0.0
      %3410 = vmatpush1.msra.mxu0 0.0
      %3411 = vmatprep.subr.mxu0 0.0
      %3412 = vmatpush1.msra.mxu0 0.0
      %3413 = vmatprep.subr.mxu0 0.0
      %3414 = vmatpush1.msra.mxu0 0.0
      %3415 = vmatprep.subr.mxu0 0.0
      %3416 = vmatpush1.msra.mxu0 0.0
      %3417 = vmatprep.subr.mxu0 0.0
      %3418 = vmatpush1.msra.mxu0 0.0
      %3419 = vmatprep.subr.mxu0 0.0
      %3420 = vmatpush1.msra.mxu0 0.0
      %3421 = vmatprep.subr.mxu0 0.0
      %3422 = vmatpush1.msra.mxu0 0.0
      %3423 = vmatprep.subr.mxu0 0.0
      %3424 = vmatpush1.msra.mxu0 0.0
      %3425 = vmatprep.subr.mxu0 0.0
      %3426 = vmatpush1.msra.mxu0 0.0
      %3427 = vmatprep.subr.mxu0 0.0
      %3428 = vmatpush1.msra.mxu0 0.0
      %3429 = vmatprep.subr.mxu0 0.0
      %3430 = vmatpush1.msra.mxu0 %v3392
      %3431 = vmatprep.subr.mxu0 0.0
      %3432 = vmatpush1.msra.mxu0 %v3391
      %3433 = vmatprep.subr.mxu0 0.0
      %3434 = vmatpush1.msra.mxu0 %v3390
      %3435 = vmatprep.subr.mxu0 0.0
      %3436 = vmatpush1.msra.mxu0 %v3389
      %3437 = vmatprep.subr.mxu0 0.0
      %3438 = vmatpush2.msra.mxu0 0.0
      %3439 = vmatprep.subr.mxu0 0.0
      %3440 = vmatpush2.msra.mxu0 0.0
      %3441 = vmatprep.subr.mxu0 0.0
      %3442 = vmatpush2.msra.mxu0 0.0
      %3443 = vmatprep.subr.mxu0 0.0
      %3444 = vmatpush2.msra.mxu0 0.0
      %3445 = vmatprep.subr.mxu0 0.0
      %3446 = vmatpush2.msra.mxu0 0.0
      %3447 = vmatprep.subr.mxu0 0.0
      %3448 = vmatpush2.msra.mxu0 0.0
      %3449 = vmatprep.subr.mxu0 0.0
      %3450 = vmatpush2.msra.mxu0 0.0
      %3451 = vmatprep.subr.mxu0 0.0
      %3452 = vmatpush2.msra.mxu0 0.0
      %3453 = vmatprep.subr.mxu0 0.0
      %3454 = vmatpush2.msra.mxu0 0.0
      %3455 = vmatprep.subr.mxu0 0.0
      %3456 = vmatpush2.msra.mxu0 0.0
      %3457 = vmatprep.subr.mxu0 0.0
      %3458 = vmatpush2.msra.mxu0 0.0
      %3459 = vmatprep.subr.mxu0 0.0
      %3460 = vmatpush2.msra.mxu0 0.0
      %3461 = vmatprep.subr.mxu0 0.0
      %3462 = vmatpush2.msra.mxu0 0.0
      %3463 = vmatprep.subr.mxu0 0.0
      %3464 = vmatpush2.msra.mxu0 0.0
      %3465 = vmatprep.subr.mxu0 0.0
      %3466 = vmatpush2.msra.mxu0 0.0
      %3467 = vmatprep.subr.mxu0 0.0
      %3468 = vmatpush2.msra.mxu0 0.0
      %3469 = vmatprep.mubr.f32.mxu0 0.0
      %3470 = vmatmul.mubr.f32.gmra.mxu0 %v3394
      %v3471 = vpop.f32.mrf.mxu0
      %v3472 = vadd.f32 0.0, %v3471
      %v3473 = vpop.f32.mrf.mxu0
      %3474 = vmatprep.mubr.f32.mxu0 0.0
      %3475 = vmatmul.mubr.f32.gmra.mxu0 %v3397
      %v3476 = vpop.f32.mrf.mxu0
      %v3477 = vadd.f32 0.0, %v3476
      %v3478 = vpop.f32.mrf.mxu0
      %3479 = vmatprep.mubr.f32.mxu0 0.0
      %3480 = vmatmul.mubr.f32.gmra.mxu0 %v3400
      %v3481 = vpop.f32.mrf.mxu0
      %v3482 = vadd.f32 0.0, %v3481
      %v3483 = vpop.f32.mrf.mxu0
      %3484 = vmatprep.mubr.f32.mxu0 0.0
      %3485 = vmatmul.mubr.f32.gmra.mxu0 %v3403
      %v3486 = vpop.f32.mrf.mxu0
      %v3487 = vadd.f32 0.0, %v3486
      %v3488 = vpop.f32.mrf.mxu0
      %3489 = vdwg.mxu0
      %v3490 = vmul.f32 %v3229, %v3472
      %v3491 = vmul.f32 %v3231, %v3477
      %v3492 = vmul.f32 %v3233, %v3482
      %v3493 = vmul.f32 %v3235, %v3487
      %s3494 = scalar_lea.vmem %s13, 1
      %v3495 = vld [vmem:[%s3494] sm:$0x1]
      %v3497 = vlaneseq
      %v3498 = vshrl.u32 %v3497, 7
      %v3499 = vsub.s32 0, %v3498
      %v3500 = vrot.slane %v3495, %v3499
      %3501 = vrot.lane.b32.xlu0 %v3500, 32
      %v3502 = vpop.permute.xlu0 %3501
      %v3504 = vmul.f32 %v3095, %v3502
      %v3505 = vmul.f32 %v3096, %v3502
      %v3506 = vmul.f32 %v3097, %v3502
      %v3507 = vmul.f32 %v3098, %v3502
      %3512 = vrot.lane.b32.xlu0 %v3504, 96
      %v3513 = vpop.permute.xlu0 %3512
      %3514 = vrot.lane.b32.xlu0 %v3505, 96
      %v3515 = vpop.permute.xlu0 %3514
      %3516 = vrot.lane.b32.xlu0 %v3506, 96
      %v3517 = vpop.permute.xlu0 %3516
      %3518 = vrot.lane.b32.xlu0 %v3507, 96
      %v3519 = vpop.permute.xlu0 %3518
      %v3524 = vadd.f32 %v3490, %v3513
      %v3525 = vadd.f32 %v3491, %v3515
      %v3526 = vadd.f32 %v3492, %v3517
      %v3527 = vadd.f32 %v3493, %v3519
      %v3528 = vxor.u32 %v2584, 2147483648
      %v3529 = vxor.u32 %v2589, 2147483648
      %v3530 = vxor.u32 %v2594, 2147483648
      %v3531 = vxor.u32 %v2599, 2147483648
      %v3532 = vmul.f32 %v3528, 1.442695
      %v3533 = vpow.pop %v3532
      %v3534 = vmul.f32 %v3529, 1.442695
      %v3535 = vpow.pop %v3534
      %v3536 = vmul.f32 %v3530, 1.442695
      %v3537 = vpow.pop %v3536
      %v3538 = vmul.f32 %v3531, 1.442695
      %v3539 = vpow.pop %v3538
      %v3540 = vadd.f32 %v3533, 1.0
      %v3541 = vadd.f32 %v3535, 1.0
      %v3542 = vadd.f32 %v3537, 1.0
      %v3543 = vadd.f32 %v3539, 1.0
      %v3544 = vrcp.pop %v3540
      %v3545 = vmul.f32 1.0, %v3544
      %v3546 = vrcp.pop %v3541
      %v3547 = vmul.f32 1.0, %v3546
      %v3548 = vrcp.pop %v3542
      %v3549 = vmul.f32 1.0, %v3548
      %v3550 = vrcp.pop %v3543
      %v3551 = vmul.f32 1.0, %v3550
      %v3552 = vmul.f32 %v2584, %v3545
      %v3553 = vmul.f32 %v2589, %v3547
      %v3554 = vmul.f32 %v2594, %v3549
      %v3555 = vmul.f32 %v2599, %v3551
      %v3556 = vmul.f32 %v3524, %v3552
      %v3557 = vmul.f32 %v3525, %v3553
      %v3558 = vmul.f32 %v3526, %v3554
      %v3559 = vmul.f32 %v3527, %v3555
      %v3560 = vmul.f32 %v3556, %v3556
      %v3561 = vmul.f32 %v3557, %v3557
      %v3562 = vmul.f32 %v3558, %v3558
      %v3563 = vmul.f32 %v3559, %v3559
      %v3564 = vsel %vm1428, %v3560, 0.0
      %3565 = vadd.xlane.f32.xlu0 %v3564
      %v3566 = vpop.xlane.xlu0 %3565
      %v3567 = vsel %vm1428, %v3561, 0.0
      %3568 = vadd.xlane.f32.xlu0 %v3567
      %v3569 = vpop.xlane.xlu0 %3568
      %v3570 = vsel %vm1428, %v3562, 0.0
      %3571 = vadd.xlane.f32.xlu0 %v3570
      %v3572 = vpop.xlane.xlu0 %3571
      %v3573 = vsel %vm1428, %v3563, 0.0
      %3574 = vadd.xlane.f32.xlu0 %v3573
      %v3575 = vpop.xlane.xlu0 %3574
      %v3576 = vmul.f32 %v3566, %v2329
      %v3577 = vmul.f32 %v3569, %v2329
      %v3578 = vmul.f32 %v3572, %v2329
      %v3579 = vmul.f32 %v3575, %v2329
      %v3580 = vadd.f32 %v3576, 1e-05
      %v3581 = vadd.f32 %v3577, 1e-05
      %v3582 = vadd.f32 %v3578, 1e-05
      %v3583 = vadd.f32 %v3579, 1e-05
      %v3584 = vrsqrt.pop %v3580
      %v3585 = vrsqrt.pop %v3581
      %v3586 = vrsqrt.pop %v3582
      %v3587 = vrsqrt.pop %v3583
      %v3588 = vmul.f32 %v3556, %v3584
      %v3589 = vmul.f32 %v3557, %v3585
      %v3590 = vmul.f32 %v3558, %v3586
      %v3591 = vmul.f32 %v3559, %v3587
      %s3592 = scalar_lea.vmem %s14, 1
      %v3593 = vld [vmem:[%s3592] sm:$0x1]
      %v3595 = vlaneseq
      %v3596 = vshrl.u32 %v3595, 7
      %v3597 = vsub.s32 0, %v3596
      %v3598 = vrot.slane %v3593, %v3597
      %v3600 = vmul.f32 %v3588, %v3598
      %v3601 = vmul.f32 %v3589, %v3598
      %v3602 = vmul.f32 %v3590, %v3598
      %v3603 = vmul.f32 %v3591, %v3598
      %s3604 = scalar_lea.vmem %s15, 32
      %v3605 = vld [vmem:[%s3604] sm:$0xff]
      %v3606 = vld [vmem:[%s3604 + $0x8] sm:$0xff]
      %v3607 = vld [vmem:[%s3604 + $0x10] sm:$0xff]
      %v3608 = vld [vmem:[%s3604 + $0x18] sm:$0xff]
      %v3610 = vsel %vm1428, %v3600, 0
      %v3613 = vsel %vm1428, %v3601, 0
      %v3616 = vsel %vm1428, %v3602, 0
      %v3619 = vsel %vm1428, %v3603, 0
      %3621 = vmatprep.subr.mxu0 0.0
      %3622 = vmatpush1.msra.mxu0 0.0
      %3623 = vmatprep.subr.mxu0 0.0
      %3624 = vmatpush1.msra.mxu0 0.0
      %3625 = vmatprep.subr.mxu0 0.0
      %3626 = vmatpush1.msra.mxu0 0.0
      %3627 = vmatprep.subr.mxu0 0.0
      %3628 = vmatpush1.msra.mxu0 0.0
      %3629 = vmatprep.subr.mxu0 0.0
      %3630 = vmatpush1.msra.mxu0 0.0
      %3631 = vmatprep.subr.mxu0 0.0
      %3632 = vmatpush1.msra.mxu0 0.0
      %3633 = vmatprep.subr.mxu0 0.0
      %3634 = vmatpush1.msra.mxu0 0.0
      %3635 = vmatprep.subr.mxu0 0.0
      %3636 = vmatpush1.msra.mxu0 0.0
      %3637 = vmatprep.subr.mxu0 0.0
      %3638 = vmatpush1.msra.mxu0 0.0
      %3639 = vmatprep.subr.mxu0 0.0
      %3640 = vmatpush1.msra.mxu0 0.0
      %3641 = vmatprep.subr.mxu0 0.0
      %3642 = vmatpush1.msra.mxu0 0.0
      %3643 = vmatprep.subr.mxu0 0.0
      %3644 = vmatpush1.msra.mxu0 0.0
      %3645 = vmatprep.subr.mxu0 0.0
      %3646 = vmatpush1.msra.mxu0 %v3608
      %3647 = vmatprep.subr.mxu0 0.0
      %3648 = vmatpush1.msra.mxu0 %v3607
      %3649 = vmatprep.subr.mxu0 0.0
      %3650 = vmatpush1.msra.mxu0 %v3606
      %3651 = vmatprep.subr.mxu0 0.0
      %3652 = vmatpush1.msra.mxu0 %v3605
      %3653 = vmatprep.subr.mxu0 0.0
      %3654 = vmatpush2.msra.mxu0 0.0
      %3655 = vmatprep.subr.mxu0 0.0
      %3656 = vmatpush2.msra.mxu0 0.0
      %3657 = vmatprep.subr.mxu0 0.0
      %3658 = vmatpush2.msra.mxu0 0.0
      %3659 = vmatprep.subr.mxu0 0.0
      %3660 = vmatpush2.msra.mxu0 0.0
      %3661 = vmatprep.subr.mxu0 0.0
      %3662 = vmatpush2.msra.mxu0 0.0
      %3663 = vmatprep.subr.mxu0 0.0
      %3664 = vmatpush2.msra.mxu0 0.0
      %3665 = vmatprep.subr.mxu0 0.0
      %3666 = vmatpush2.msra.mxu0 0.0
      %3667 = vmatprep.subr.mxu0 0.0
      %3668 = vmatpush2.msra.mxu0 0.0
      %3669 = vmatprep.subr.mxu0 0.0
      %3670 = vmatpush2.msra.mxu0 0.0
      %3671 = vmatprep.subr.mxu0 0.0
      %3672 = vmatpush2.msra.mxu0 0.0
      %3673 = vmatprep.subr.mxu0 0.0
      %3674 = vmatpush2.msra.mxu0 0.0
      %3675 = vmatprep.subr.mxu0 0.0
      %3676 = vmatpush2.msra.mxu0 0.0
      %3677 = vmatprep.subr.mxu0 0.0
      %3678 = vmatpush2.msra.mxu0 0.0
      %3679 = vmatprep.subr.mxu0 0.0
      %3680 = vmatpush2.msra.mxu0 0.0
      %3681 = vmatprep.subr.mxu0 0.0
      %3682 = vmatpush2.msra.mxu0 0.0
      %3683 = vmatprep.subr.mxu0 0.0
      %3684 = vmatpush2.msra.mxu0 0.0
      %3685 = vmatprep.mubr.f32.mxu0 0.0
      %3686 = vmatmul.mubr.f32.gmra.mxu0 %v3610
      %v3687 = vpop.f32.mrf.mxu0
      %v3688 = vadd.f32 %v2440, %v3687
      %v3689 = vpop.f32.mrf.mxu0
      %3690 = vmatprep.mubr.f32.mxu0 0.0
      %3691 = vmatmul.mubr.f32.gmra.mxu0 %v3613
      %v3692 = vpop.f32.mrf.mxu0
      %v3693 = vadd.f32 %v2445, %v3692
      %v3694 = vpop.f32.mrf.mxu0
      %3695 = vmatprep.mubr.f32.mxu0 0.0
      %3696 = vmatmul.mubr.f32.gmra.mxu0 %v3616
      %v3697 = vpop.f32.mrf.mxu0
      %v3698 = vadd.f32 %v2450, %v3697
      %v3699 = vpop.f32.mrf.mxu0
      %3700 = vmatprep.mubr.f32.mxu0 0.0
      %3701 = vmatmul.mubr.f32.gmra.mxu0 %v3619
      %v3702 = vpop.f32.mrf.mxu0
      %v3703 = vadd.f32 %v2455, %v3702
      %v3704 = vpop.f32.mrf.mxu0
      %3705 = vdwg.mxu0
      %v3706 = vld [vmem:[%s16] sm:$0xff]
      %v3707 = vld [vmem:[%s16 + $0x8] sm:$0xff]
      %v3709 = vsel %vm1157, %v3688, 0
      %v3712 = vsel %vm1157, %v3693, 0
      %v3715 = vsel %vm1157, %v3698, 0
      %v3718 = vsel %vm1157, %v3703, 0
      %3720 = vmatprep.subr.mxu0 0.0
      %3721 = vmatpush1.msra.mxu0 0.0
      %3722 = vmatprep.subr.mxu0 0.0
      %3723 = vmatpush1.msra.mxu0 0.0
      %3724 = vmatprep.subr.mxu0 0.0
      %3725 = vmatpush1.msra.mxu0 0.0
      %3726 = vmatprep.subr.mxu0 0.0
      %3727 = vmatpush1.msra.mxu0 0.0
      %3728 = vmatprep.subr.mxu0 0.0
      %3729 = vmatpush1.msra.mxu0 0.0
      %3730 = vmatprep.subr.mxu0 0.0
      %3731 = vmatpush1.msra.mxu0 0.0
      %3732 = vmatprep.subr.mxu0 0.0
      %3733 = vmatpush1.msra.mxu0 0.0
      %3734 = vmatprep.subr.mxu0 0.0
      %3735 = vmatpush1.msra.mxu0 0.0
      %3736 = vmatprep.subr.mxu0 0.0
      %3737 = vmatpush1.msra.mxu0 0.0
      %3738 = vmatprep.subr.mxu0 0.0
      %3739 = vmatpush1.msra.mxu0 0.0
      %3740 = vmatprep.subr.mxu0 0.0
      %3741 = vmatpush1.msra.mxu0 0.0
      %3742 = vmatprep.subr.mxu0 0.0
      %3743 = vmatpush1.msra.mxu0 0.0
      %3744 = vmatprep.subr.mxu0 0.0
      %3745 = vmatpush1.msra.mxu0 0.0
      %3746 = vmatprep.subr.mxu0 0.0
      %3747 = vmatpush1.msra.mxu0 0.0
      %3748 = vmatprep.subr.mxu0 0.0
      %3749 = vmatpush1.msra.mxu0 %v3707
      %3750 = vmatprep.subr.mxu0 0.0
      %3751 = vmatpush1.msra.mxu0 %v3706
      %3752 = vmatprep.subr.mxu0 0.0
      %3753 = vmatpush2.msra.mxu0 0.0
      %3754 = vmatprep.subr.mxu0 0.0
      %3755 = vmatpush2.msra.mxu0 0.0
      %3756 = vmatprep.subr.mxu0 0.0
      %3757 = vmatpush2.msra.mxu0 0.0
      %3758 = vmatprep.subr.mxu0 0.0
      %3759 = vmatpush2.msra.mxu0 0.0
      %3760 = vmatprep.subr.mxu0 0.0
      %3761 = vmatpush2.msra.mxu0 0.0
      %3762 = vmatprep.subr.mxu0 0.0
      %3763 = vmatpush2.msra.mxu0 0.0
      %3764 = vmatprep.subr.mxu0 0.0
      %3765 = vmatpush2.msra.mxu0 0.0
      %3766 = vmatprep.subr.mxu0 0.0
      %3767 = vmatpush2.msra.mxu0 0.0
      %3768 = vmatprep.subr.mxu0 0.0
      %3769 = vmatpush2.msra.mxu0 0.0
      %3770 = vmatprep.subr.mxu0 0.0
      %3771 = vmatpush2.msra.mxu0 0.0
      %3772 = vmatprep.subr.mxu0 0.0
      %3773 = vmatpush2.msra.mxu0 0.0
      %3774 = vmatprep.subr.mxu0 0.0
      %3775 = vmatpush2.msra.mxu0 0.0
      %3776 = vmatprep.subr.mxu0 0.0
      %3777 = vmatpush2.msra.mxu0 0.0
      %3778 = vmatprep.subr.mxu0 0.0
      %3779 = vmatpush2.msra.mxu0 0.0
      %3780 = vmatprep.subr.mxu0 0.0
      %3781 = vmatpush2.msra.mxu0 0.0
      %3782 = vmatprep.subr.mxu0 0.0
      %3783 = vmatpush2.msra.mxu0 0.0
      %3784 = vmatprep.mubr.f32.mxu0 0.0
      %3785 = vmatmul.mubr.f32.gmra.mxu0 %v3709
      %v3786 = vpop.f32.mrf.mxu0
      %v3787 = vadd.f32 0.0, %v3786
      %v3788 = vpop.f32.mrf.mxu0
      %3789 = vmatprep.mubr.f32.mxu0 0.0
      %3790 = vmatmul.mubr.f32.gmra.mxu0 %v3712
      %v3791 = vpop.f32.mrf.mxu0
      %v3792 = vadd.f32 0.0, %v3791
      %v3793 = vpop.f32.mrf.mxu0
      %3794 = vmatprep.mubr.f32.mxu0 0.0
      %3795 = vmatmul.mubr.f32.gmra.mxu0 %v3715
      %v3796 = vpop.f32.mrf.mxu0
      %v3797 = vadd.f32 0.0, %v3796
      %v3798 = vpop.f32.mrf.mxu0
      %3799 = vmatprep.mubr.f32.mxu0 0.0
      %3800 = vmatmul.mubr.f32.gmra.mxu0 %v3718
      %v3801 = vpop.f32.mrf.mxu0
      %v3802 = vadd.f32 0.0, %v3801
      %v3803 = vpop.f32.mrf.mxu0
      %3804 = vdwg.mxu0
      %v3805 = vmul.f32 %v3787, %v662
      %v3806 = vmul.f32 %v3792, %v669
      %v3807 = vmul.f32 %v3797, %v676
      %v3808 = vmul.f32 %v3802, %v683
      %v3809 = vadd.f32 %v3805, %v608
      %v3810 = vadd.f32 %v3806, %v609
      %v3811 = vadd.f32 %v3807, %v610
      %v3812 = vadd.f32 %v3808, %v611
      %3813 = vst.msk [vmem:[%s572] sm:$0xff] %vm578, %v3809
      %3814 = vst.msk [vmem:[%s572 + $0x8] sm:$0xff] %vm578, %v3810
      %3815 = vst.msk [vmem:[%s572 + $0x10] sm:$0xff] %vm578, %v3811
      %3816 = vst.msk [vmem:[%s572 + $0x18] sm:$0xff] %vm578, %v3812
      %s3817 = smul.u32 4, %s28
      %p3818 = scmp.lt.s32.totalorder %s3817, 7
      %s3819 = scalar_select %p3818, %s3817, 7
      %s3820 = smul.addr %s3819, 8
      %s3821 = scalar_lea.vmem %s17, %s3820
      // Predicated region
      $region89: #{model_forward.1} parent=87 // pred_check
        %p3822 = pneg %p413
      $region90: #{model_forward.1} parent=87 // pred_check_branch
        %3824 = sbr.rel (%p3822) target = $region92
      $region91: #{model_forward.1} parent=87 // pred_region
        %s3825 = smul.u32 4, %s28
      $region92: #{model_forward.1} parent=87 // pred_fallthru
        _
    $region88: #{model_forward.1} parent=5 // pred_fallthru
      _
    %p3826 = scmp.le.s32.totalorder 2, %s23
    // Predicated region
    $region93: #{model_forward.1} parent=5 // pred_check
      %p3827 = pneg %p3826
    $region94: #{model_forward.1} parent=5 // pred_check_branch
      %3829 = sbr.rel (%p3827) target = $region96
    $region95: #{model_forward.1} parent=5 // pred_region
      %s3830 = ssub.s32 %s23, 2
      // Predicated region
      $region97: #{model_forward.1} parent=95 // pred_check
        %p3831 = pneg %p419
      $region98: #{model_forward.1} parent=95 // pred_check_branch
        %3833 = sbr.rel (%p3831) target = $region100
      $region99: #{model_forward.1} parent=95 // pred_region
        %s3834 = smul.u32 4, %s29
        %p3835 = scmp.lt.s32.totalorder %s3834, 7
        %s3836 = scalar_select %p3835, %s3834, 7
        %s3837 = smul.addr %s3836, 8
        %s3838 = scalar_lea.vmem %s17, %s3837
      $region100: #{model_forward.1} parent=95 // pred_fallthru
        _
    $region96: #{model_forward.1} parent=5 // pred_fallthru
      _
  $region6: #{model_forward.1} parent=0 // loop_footer
    %s27 = sadd.s32 1, %s23
  $region7: #{model_forward.1} parent=0 // loop_footer_branch
    %22 = sbr.rel target = $region3
  $region8: #{model_forward.1} parent=0 // loop_exit
    _

</llo_original>
